<compile_context>
chip_gen: v5e
topology: v5e:2x2
jax: 0.10.0
libtpu: 0.0.40
codegen_flags: <defaults>
</compile_context>

<pallas_src>
import math
import functools

import jax
import jax.numpy as jnp
from jax.experimental import pallas as pl
from jax.experimental.pallas import tpu as pltpu


# ----------------------------- tiling helpers -------------------------------

def _pick_tile(dim, target, align):
    """Largest tile <= target that is a multiple of `align` and divides `dim`.
    Falls back to the full dimension (always a legal block shape)."""
    if dim <= target:
        return dim
    t = (target // align) * align
    while t >= align:
        if dim % t == 0:
            return t
        t -= align
    return dim


# ----------------------------- Pallas kernels -------------------------------

def _matmul_kernel(x_ref, w_ref, b_ref, o_ref, acc_ref, *, activation):
    # grid = (M//tm, N//tn, K//tk); accumulate over k, finalize with bias (+ReLU)
    @pl.when(pl.program_id(2) == 0)
    def _():
        acc_ref[...] = jnp.zeros_like(acc_ref)

    acc_ref[...] += jnp.dot(
        x_ref[...].astype(jnp.bfloat16),
        w_ref[...].astype(jnp.bfloat16),
        preferred_element_type=jnp.float32)

    @pl.when(pl.program_id(2) == pl.num_programs(2) - 1)
    def _():
        y = acc_ref[...] + b_ref[...]
        if activation == "relu":
            y = jnp.maximum(y, 0.0)
        o_ref[...] = y.astype(o_ref.dtype)


def _matmul_res_ln_kernel(x_ref, w_ref, b_ref, r_ref, g_ref, bb_ref, o_ref, acc_ref):
    # grid = (M//tm, K//tk); N kept whole so LayerNorm (eps=1e-5) fuses in the epilogue.
    @pl.when(pl.program_id(1) == 0)
    def _():
        acc_ref[...] = jnp.zeros_like(acc_ref)

    acc_ref[...] += jnp.dot(
        x_ref[...].astype(jnp.bfloat16),
        w_ref[...].astype(jnp.bfloat16),
        preferred_element_type=jnp.float32)

    @pl.when(pl.program_id(1) == pl.num_programs(1) - 1)
    def _():
        y = acc_ref[...] + b_ref[...] + r_ref[...]
        mu = jnp.mean(y, axis=-1, keepdims=True)
        var = jnp.mean((y - mu) ** 2, axis=-1, keepdims=True)
        o_ref[...] = ((y - mu) * jax.lax.rsqrt(var + 1e-5) * g_ref[...]
                      + bb_ref[...]).astype(o_ref.dtype)


def _attn_kernel(q_ref, k_ref, v_ref, *rest, scale, has_mask):
    # one batch, all heads folded: q (1,H,Lq,dh), k/v (1,H,Lk,dh), mask (Lq,Lk)
    if has_mask:
        m_ref, o_ref = rest
    else:
        (o_ref,) = rest
    q = q_ref[0].astype(jnp.bfloat16)
    k = k_ref[0].astype(jnp.bfloat16)
    v = v_ref[0].astype(jnp.bfloat16)
    # no in-kernel transpose: contraction expressed via einsum/dot_general
    s = jnp.einsum("hqd,hkd->hqk", q, k,
                   preferred_element_type=jnp.float32) * scale
    if has_mask:
        s = s + m_ref[...]
    s = s - jnp.max(s, axis=-1, keepdims=True)
    p = jnp.exp(s)
    denom = jnp.sum(p, axis=-1, keepdims=True)
    p = p * pl.reciprocal(denom, approx=True)
    o = jnp.einsum("hqk,hkd->hqd", p.astype(jnp.bfloat16), v,
                   preferred_element_type=jnp.float32)
    o_ref[0] = o.astype(o_ref.dtype)


def _embed_scale_pe_kernel(e_ref, pe_ref, o_ref, *, scale):
    # embedding * sqrt(d_model) + positional encoding (PE broadcast over batch in-kernel)
    o_ref[...] = e_ref[...] * scale + pe_ref[...]


# ----------------------------- Pallas wrappers -------------------------------

def pallas_linear(x, w, b, activation=None,
                  tm_target=256, tn_target=256, tk_target=512):
    # x: (M, K), w: (K, N), b: (N,)   — tiled matmul + bias (+ReLU)
    M, K = x.shape
    N = w.shape[1]
    tm = _pick_tile(M, tm_target, 8)
    tn = _pick_tile(N, tn_target, 128)
    tk = _pick_tile(K, tk_target, 128)
    grid = (M // tm, N // tn, K // tk)
    kern = functools.partial(_matmul_kernel, activation=activation)
    return pl.pallas_call(
        kern,
        out_shape=jax.ShapeDtypeStruct((M, N), jnp.float32),
        grid=grid,
        in_specs=[pl.BlockSpec((tm, tk), lambda i, j, k: (i, k)),
                  pl.BlockSpec((tk, tn), lambda i, j, k: (k, j)),
                  pl.BlockSpec((1, tn), lambda i, j, k: (0, j))],
        out_specs=pl.BlockSpec((tm, tn), lambda i, j, k: (i, j)),
        scratch_shapes=[pltpu.VMEM((tm, tn), jnp.float32)],
        compiler_params=pltpu.CompilerParams(
            dimension_semantics=("parallel", "parallel", "arbitrary")),
    )(x, w, b.reshape(1, N))


def pallas_linear_residual_ln(x, w, b, res, gamma, beta,
                              tm_target=256, tk_target=512):
    # LayerNorm(x @ w + b + res) fused; N (= d_model) kept whole for the norm.
    M, K = x.shape
    N = w.shape[1]
    tm = _pick_tile(M, tm_target, 8)
    tk = _pick_tile(K, tk_target, 128)
    grid = (M // tm, K // tk)
    return pl.pallas_call(
        _matmul_res_ln_kernel,
        out_shape=jax.ShapeDtypeStruct((M, N), jnp.float32),
        grid=grid,
        in_specs=[pl.BlockSpec((tm, tk), lambda i, k: (i, k)),
                  pl.BlockSpec((tk, N), lambda i, k: (k, 0)),
                  pl.BlockSpec((1, N), lambda i, k: (0, 0)),
                  pl.BlockSpec((tm, N), lambda i, k: (i, 0)),
                  pl.BlockSpec((1, N), lambda i, k: (0, 0)),
                  pl.BlockSpec((1, N), lambda i, k: (0, 0))],
        out_specs=pl.BlockSpec((tm, N), lambda i, k: (i, 0)),
        scratch_shapes=[pltpu.VMEM((tm, N), jnp.float32)],
        compiler_params=pltpu.CompilerParams(
            dimension_semantics=("parallel", "arbitrary")),
    )(x, w, b.reshape(1, N), res, gamma.reshape(1, N), beta.reshape(1, N))


def pallas_attention_core(q, k, v, mask, scale):
    # q: (B, H, Lq, dh), k/v: (B, H, Lk, dh), mask: (Lq, Lk) additive or None
    B, H, Lq, dh = q.shape
    Lk = k.shape[2]
    has_mask = mask is not None
    kern = functools.partial(_attn_kernel, scale=scale, has_mask=has_mask)
    in_specs = [pl.BlockSpec((1, H, Lq, dh), lambda b: (b, 0, 0, 0)),
                pl.BlockSpec((1, H, Lk, dh), lambda b: (b, 0, 0, 0)),
                pl.BlockSpec((1, H, Lk, dh), lambda b: (b, 0, 0, 0))]
    args = [q, k, v]
    if has_mask:
        in_specs.append(pl.BlockSpec((Lq, Lk), lambda b: (0, 0)))
        args.append(mask)
    return pl.pallas_call(
        kern,
        out_shape=jax.ShapeDtypeStruct((B, H, Lq, dh), jnp.float32),
        grid=(B,),
        in_specs=in_specs,
        out_specs=pl.BlockSpec((1, H, Lq, dh), lambda b: (b, 0, 0, 0)),
        compiler_params=pltpu.CompilerParams(dimension_semantics=("parallel",)),
    )(*args)


def pallas_embed_scale_pe(emb, pe, scale):
    # emb: (S, B, D), pe: (S, 1, D) — PE never materialized at (S, B, D)
    S, B, D = emb.shape
    ts = _pick_tile(S, 256, 1)
    kern = functools.partial(_embed_scale_pe_kernel, scale=scale)
    return pl.pallas_call(
        kern,
        out_shape=jax.ShapeDtypeStruct((S, B, D), jnp.float32),
        grid=(S // ts,),
        in_specs=[pl.BlockSpec((ts, B, D), lambda i: (i, 0, 0)),
                  pl.BlockSpec((ts, 1, D), lambda i: (i, 0, 0))],
        out_specs=pl.BlockSpec((ts, B, D), lambda i: (i, 0, 0)),
        compiler_params=pltpu.CompilerParams(dimension_semantics=("parallel",)),
    )(emb, pe)


# --------------------------- model building blocks ---------------------------

def multi_head_attention(query, key, value, mask, p, nhead):
    # query: (Lq, B, D); key/value: (Lk, B, D); mask: (Lq, Lk) additive or None.
    # Returns the pre-out-projection concat of heads, flattened to (Lq*B, D);
    # the out-projection + residual + LayerNorm is fused by the caller.
    Lq, B, D = query.shape
    Lk = key.shape[0]
    dh = D // nhead
    scale = 1.0 / math.sqrt(dh)

    w_in = p["in_proj_w"].T          # (D, 3D); PyTorch stores (3D, D) = (out, in)
    b_in = p["in_proj_b"]            # (3D,)

    if query is key and key is value:
        # self-attention: single fused QKV projection (one matmul, lane-dense 3D output)
        qkv = pallas_linear(query.reshape(Lq * B, D), w_in, b_in)          # (Lq*B, 3D)
        qkv = jnp.transpose(qkv.reshape(Lq, B, 3, nhead, dh), (2, 1, 3, 0, 4))
        qh, kh, vh = qkv[0], qkv[1], qkv[2]                                # (B,H,L,dh)
    else:
        # cross-attention: fused K|V projection of memory, separate Q projection
        wq, wkv = w_in[:, :D], w_in[:, D:]
        bq, bkv = b_in[:D], b_in[D:]
        qp = pallas_linear(query.reshape(Lq * B, D), wq, bq)               # (Lq*B, D)
        kvp = pallas_linear(key.reshape(Lk * B, D), wkv, bkv)              # (Lk*B, 2D)
        qh = jnp.transpose(qp.reshape(Lq, B, nhead, dh), (1, 2, 0, 3))
        kv = jnp.transpose(kvp.reshape(Lk, B, 2, nhead, dh), (2, 1, 3, 0, 4))
        kh, vh = kv[0], kv[1]

    oh = pallas_attention_core(qh, kh, vh, mask, scale)                    # (B,H,Lq,dh)
    # TODO(synk): head split/merge transposes stay in XLA glue; pushing them into the
    # attention kernel via BlockSpec head-slicing only pays off once dh >= 128.
    return jnp.transpose(oh, (2, 0, 1, 3)).reshape(Lq * B, D)


def encoder_layer(src, src_mask, p, nhead):
    L, B, D = src.shape
    src_flat = src.reshape(L * B, D)
    attn = multi_head_attention(src, src, src, src_mask, p["self_attn"], nhead)
    # fused: out-projection + bias + residual + LayerNorm1
    x = pallas_linear_residual_ln(attn, p["self_attn"]["out_proj_w"].T,
                                  p["self_attn"]["out_proj_b"],
                                  src_flat, p["ln1_g"], p["ln1_b"])
    h = pallas_linear(x, p["lin1_w"].T, p["lin1_b"], activation="relu")
    # fused: lin2 + bias + residual + LayerNorm2
    x = pallas_linear_residual_ln(h, p["lin2_w"].T, p["lin2_b"],
                                  x, p["ln2_g"], p["ln2_b"])
    return x.reshape(L, B, D)


def decoder_layer(tgt, memory, tgt_mask, p, nhead):
    T, B, D = tgt.shape
    tgt_flat = tgt.reshape(T * B, D)
    sa = multi_head_attention(tgt, tgt, tgt, tgt_mask, p["self_attn"], nhead)
    x = pallas_linear_residual_ln(sa, p["self_attn"]["out_proj_w"].T,
                                  p["self_attn"]["out_proj_b"],
                                  tgt_flat, p["ln1_g"], p["ln1_b"])
    x3 = x.reshape(T, B, D)
    # memory_mask=None in PyTorch → no mask input at all (no zero-tile DMA)
    ca = multi_head_attention(x3, memory, memory, None, p["cross_attn"], nhead)
    x = pallas_linear_residual_ln(ca, p["cross_attn"]["out_proj_w"].T,
                                  p["cross_attn"]["out_proj_b"],
                                  x, p["ln2_g"], p["ln2_b"])
    h = pallas_linear(x, p["lin1_w"].T, p["lin1_b"], activation="relu")
    x = pallas_linear_residual_ln(h, p["lin2_w"].T, p["lin2_b"],
                                  x, p["ln3_g"], p["ln3_b"])
    return x.reshape(T, B, D)


def causal_mask(sz):
    i = jnp.arange(sz)[:, None]
    j = jnp.arange(sz)[None, :]
    return jnp.where(j <= i, 0.0, -jnp.inf).astype(jnp.float32)


def sinusoidal_pe(max_len, d_model):
    # computed at init with static Python ints (fixes ConcretizationTypeError)
    pos = jnp.arange(max_len, dtype=jnp.float32)[:, None]
    div = jnp.exp(jnp.arange(0, d_model, 2, dtype=jnp.float32)
                  * (-math.log(10000.0) / d_model))
    pe = jnp.zeros((max_len, d_model), jnp.float32)
    pe = pe.at[:, 0::2].set(jnp.sin(pos * div))
    pe = pe.at[:, 1::2].set(jnp.cos(pos * div))
    return pe


def transformer_forward(cfg, params, src_tokens, tgt):
    # cfg is a plain-Python (static) dict closed over by functools.partial
    nhead = cfg["nhead"]
    D = cfg["d_model"]
    S, B = src_tokens.shape
    T = tgt.shape[0]

    src_mask = causal_mask(S)
    tgt_mask = causal_mask(T)

    # TODO(synk): embedding gather is data-dependent; it stays in XLA glue.
    emb = params["emb"][src_tokens]                              # (S, B, D)
    pe = params["pe"][:S].reshape(S, 1, D)                       # rank-1 in batch
    x = pallas_embed_scale_pe(emb, pe, math.sqrt(D))

    for lp in params["enc_layers"]:
        x = encoder_layer(x, src_mask, lp, nhead)
    memory = x

    y = tgt
    for lp in params["dec_layers"]:
        y = decoder_layer(y, memory, tgt_mask, lp, nhead)

    out = pallas_linear(y.reshape(T * B, D), params["dec_w"].T, params["dec_b"])
    return out.reshape(T, B, cfg["ntoken"])


# ------------------------------- parameters ---------------------------------

def init_params(key, ntoken, d_model, nhead, nhid, nlayers, max_len=512):
    keys = iter(jax.random.split(key, 256))

    def u(shape, r=0.1):
        return jax.random.uniform(next(keys), shape, jnp.float32, -r, r)

    def attn_params():
        return {
            "in_proj_w": u((3 * d_model, d_model)),
            "in_proj_b": jnp.zeros((3 * d_model,), jnp.float32),
            "out_proj_w": u((d_model, d_model)),
            "out_proj_b": jnp.zeros((d_model,), jnp.float32),
        }

    def enc_layer_params():
        return {
            "self_attn": attn_params(),
            "ln1_g": jnp.ones((d_model,), jnp.float32),
            "ln1_b": jnp.zeros((d_model,), jnp.float32),
            "lin1_w": u((nhid, d_model)), "lin1_b": jnp.zeros((nhid,), jnp.float32),
            "lin2_w": u((d_model, nhid)), "lin2_b": jnp.zeros((d_model,), jnp.float32),
            "ln2_g": jnp.ones((d_model,), jnp.float32),
            "ln2_b": jnp.zeros((d_model,), jnp.float32),
        }

    def dec_layer_params():
        p = enc_layer_params()
        p["cross_attn"] = attn_params()
        p["ln3_g"] = jnp.ones((d_model,), jnp.float32)
        p["ln3_b"] = jnp.zeros((d_model,), jnp.float32)
        return p

    return {
        "emb": u((ntoken, d_model), 0.1),            # encoder.weight.uniform_(-0.1, 0.1)
        "pe": sinusoidal_pe(max_len, d_model),       # precomputed (static shapes)
        "enc_layers": [enc_layer_params() for _ in range(nlayers)],
        "dec_layers": [dec_layer_params() for _ in range(nlayers)],
        "dec_w": u((ntoken, d_model), 0.1),          # decoder.weight.uniform_(-0.1, 0.1)
        "dec_b": jnp.zeros((ntoken,), jnp.float32),  # decoder.bias.zero_()
    }


# ---------------------------------- main -------------------------------------

if __name__ == "__main__":
    ntoken, d_model, nhead, nhid, nlayers = 32, 32, 4, 64, 2
    S, T, B = 8, 8, 2

    key = jax.random.PRNGKey(0)
    k_param, k_src, k_tgt = jax.random.split(key, 3)

    params = init_params(k_param, ntoken, d_model, nhead, nhid, nlayers)
    cfg = {"ntoken": ntoken, "d_model": d_model, "nhead": nhead}

    src = jax.random.randint(k_src, (S, B), 0, ntoken, dtype=jnp.int32)
    tgt = jax.random.normal(k_tgt, (T, B, d_model), jnp.float32)

    fwd = jax.jit(functools.partial(transformer_forward, cfg))
    out = fwd(params, src, tgt)
    jax.block_until_ready(out)

    assert out.shape == (T, B, ntoken), out.shape
    assert bool(jnp.all(jnp.isfinite(out)))
    print("KERNEL_OK")
</pallas_src>

<mosaic_0001>
module attributes {stable_mosaic.version = 11 : i64} {
  func.func @_matmul_kernel(%arg0: i32, %arg1: i32, %arg2: i32, %arg3: memref<16x32xf32, #tpu.memory_space<vmem>>, %arg4: memref<32x96xf32, #tpu.memory_space<vmem>>, %arg5: memref<1x96xf32, #tpu.memory_space<vmem>>, %arg6: memref<16x96xf32, #tpu.memory_space<vmem>>, %arg7: memref<16x96xf32, #tpu.memory_space<vmem>>) attributes {dimension_semantics = [#tpu.dimension_semantics<parallel>, #tpu.dimension_semantics<parallel>, #tpu.dimension_semantics<arbitrary>], iteration_bounds = array<i64: 1, 1, 1>, scalar_prefetch = 0 : i64, scratch_operands = 1 : i64, tpu.core_type = #tpu.core_type<tc>, window_params = [{transform_indices = @transform_0, window_bounds = array<i64: 16, 32>}, {transform_indices = @transform_1, window_bounds = array<i64: 32, 96>}, {transform_indices = @transform_2, window_bounds = array<i64: 1, 96>}, {transform_indices = @transform_3, window_bounds = array<i64: 16, 96>}]} {
    %c0_i32 = arith.constant 0 : i32
    %0 = arith.cmpi eq, %arg2, %c0_i32 : i32
    %1 = arith.extui %0 : i1 to i32
    %c0_i32_0 = arith.constant 0 : i32
    %2 = arith.cmpi ne, %1, %c0_i32_0 : i32
    scf.if %2 {
      %cst_10 = arith.constant 0.000000e+00 : f32
      %14 = vector.broadcast %cst_10 : f32 to vector<16x96xf32>
      %c0_11 = arith.constant 0 : index
      %c0_12 = arith.constant 0 : index
      %15 = vector.load %arg7[%c0_11, %c0_12] : memref<16x96xf32, #tpu.memory_space<vmem>>, vector<16x96xf32>
      tpu.vector_store %arg7[%c0_11, %c0_12], %14 {strides = array<i32>} : memref<16x96xf32, #tpu.memory_space<vmem>>, vector<16x96xf32>,
    } else {
    }
    %c0 = arith.constant 0 : index
    %c0_1 = arith.constant 0 : index
    %3 = vector.load %arg7[%c0, %c0_1] : memref<16x96xf32, #tpu.memory_space<vmem>>, vector<16x96xf32>
    %c0_2 = arith.constant 0 : index
    %c0_3 = arith.constant 0 : index
    %4 = vector.load %arg3[%c0_2, %c0_3] : memref<16x32xf32, #tpu.memory_space<vmem>>, vector<16x32xf32>
    %5 = arith.truncf %4 : vector<16x32xf32> to vector<16x32xbf16>
    %c0_4 = arith.constant 0 : index
    %c0_5 = arith.constant 0 : index
    %6 = vector.load %arg4[%c0_4, %c0_5] : memref<32x96xf32, #tpu.memory_space<vmem>>, vector<32x96xf32>
    %7 = arith.truncf %6 : vector<32x96xf32> to vector<32x96xbf16>
    %cst = arith.constant dense<0.000000e+00> : vector<16x96xf32>
    %8 = tpu.matmul %5, %7, %cst {dimension_numbers = #tpu.dot_dimension_numbers<[1], [0], [0], [1], [0, 0, 1, 1], [], []>} : vector<16x32xbf16>, vector<32x96xbf16>, vector<16x96xf32> -> vector<16x96xf32>
    %9 = arith.addf %3, %8 : vector<16x96xf32>
    %c0_6 = arith.constant 0 : index
    %c0_7 = arith.constant 0 : index
    %10 = vector.load %arg7[%c0_6, %c0_7] : memref<16x96xf32, #tpu.memory_space<vmem>>, vector<16x96xf32>
    tpu.vector_store %arg7[%c0_6, %c0_7], %9 {strides = array<i32>} : memref<16x96xf32, #tpu.memory_space<vmem>>, vector<16x96xf32>,
    %c0_i32_8 = arith.constant 0 : i32
    %11 = arith.cmpi eq, %arg2, %c0_i32_8 : i32
    %12 = arith.extui %11 : i1 to i32
    %c0_i32_9 = arith.constant 0 : i32
    %13 = arith.cmpi ne, %12, %c0_i32_9 : i32
    scf.if %13 {
      %c0_10 = arith.constant 0 : index
      %c0_11 = arith.constant 0 : index
      %14 = vector.load %arg7[%c0_10, %c0_11] : memref<16x96xf32, #tpu.memory_space<vmem>>, vector<16x96xf32>
      %c0_12 = arith.constant 0 : index
      %c0_13 = arith.constant 0 : index
      %15 = vector.load %arg5[%c0_12, %c0_13] : memref<1x96xf32, #tpu.memory_space<vmem>>, vector<1x96xf32>
      %16 = vector.broadcast %15 : vector<1x96xf32> to vector<16x96xf32>
      %17 = arith.addf %14, %16 : vector<16x96xf32>
      %c0_14 = arith.constant 0 : index
      %c0_15 = arith.constant 0 : index
      %18 = vector.load %arg6[%c0_14, %c0_15] : memref<16x96xf32, #tpu.memory_space<vmem>>, vector<16x96xf32>
      tpu.vector_store %arg6[%c0_14, %c0_15], %17 {strides = array<i32>} : memref<16x96xf32, #tpu.memory_space<vmem>>, vector<16x96xf32>,
    } else {
    }
    return
  }
  func.func @transform_0(%arg0: i32, %arg1: i32, %arg2: i32) -> (i32, i32) {
    %c0_i32 = arith.constant 0 : i32
    return %arg0, %arg2 : i32, i32
  }
  func.func @transform_1(%arg0: i32, %arg1: i32, %arg2: i32) -> (i32, i32) {
    %c0_i32 = arith.constant 0 : i32
    return %arg2, %arg1 : i32, i32
  }
  func.func @transform_2(%arg0: i32, %arg1: i32, %arg2: i32) -> (i32, i32) {
    %c0_i32 = arith.constant 0 : i32
    %c0_i32_0 = arith.constant 0 : i32
    return %c0_i32, %arg1 : i32, i32
  }
  func.func @transform_3(%arg0: i32, %arg1: i32, %arg2: i32) -> (i32, i32) {
    %c0_i32 = arith.constant 0 : i32
    return %arg0, %arg1 : i32, i32
  }
}

module attributes {stable_mosaic.version = 11 : i64} {
  func.func @_attn_kernel(%arg0: i32, %arg1: memref<1x4x8x8xf32, #tpu.memory_space<vmem>>, %arg2: memref<1x4x8x8xf32, #tpu.memory_space<vmem>>, %arg3: memref<1x4x8x8xf32, #tpu.memory_space<vmem>>, %arg4: memref<8x8xf32, #tpu.memory_space<vmem>>, %arg5: memref<1x4x8x8xf32, #tpu.memory_space<vmem>>) attributes {dimension_semantics = [#tpu.dimension_semantics<parallel>], iteration_bounds = array<i64: 2>, scalar_prefetch = 0 : i64, scratch_operands = 0 : i64, tpu.core_type = #tpu.core_type<tc>, window_params = [{transform_indices = @transform_0, window_bounds = array<i64: 1, 4, 8, 8>}, {transform_indices = @transform_1, window_bounds = array<i64: 1, 4, 8, 8>}, {transform_indices = @transform_2, window_bounds = array<i64: 1, 4, 8, 8>}, {pipeline_mode = #tpu.pipeline_mode<synchronous>, transform_indices = @transform_3, window_bounds = array<i64: 8, 8>}, {transform_indices = @transform_4, window_bounds = array<i64: 1, 4, 8, 8>}]} {
    %c0 = arith.constant 0 : index
    %c0_0 = arith.constant 0 : index
    %c0_1 = arith.constant 0 : index
    %c0_2 = arith.constant 0 : index
    %0 = vector.load %arg1[%c0, %c0_0, %c0_1, %c0_2] : memref<1x4x8x8xf32, #tpu.memory_space<vmem>>, vector<1x4x8x8xf32>
    %1 = vector.shape_cast %0 : vector<1x4x8x8xf32> to vector<4x8x8xf32>
    %2 = arith.truncf %1 : vector<4x8x8xf32> to vector<4x8x8xbf16>
    %c0_3 = arith.constant 0 : index
    %c0_4 = arith.constant 0 : index
    %c0_5 = arith.constant 0 : index
    %c0_6 = arith.constant 0 : index
    %3 = vector.load %arg2[%c0_3, %c0_4, %c0_5, %c0_6] : memref<1x4x8x8xf32, #tpu.memory_space<vmem>>, vector<1x4x8x8xf32>
    %4 = vector.shape_cast %3 : vector<1x4x8x8xf32> to vector<4x8x8xf32>
    %5 = arith.truncf %4 : vector<4x8x8xf32> to vector<4x8x8xbf16>
    %c0_7 = arith.constant 0 : index
    %c0_8 = arith.constant 0 : index
    %c0_9 = arith.constant 0 : index
    %c0_10 = arith.constant 0 : index
    %6 = vector.load %arg3[%c0_7, %c0_8, %c0_9, %c0_10] : memref<1x4x8x8xf32, #tpu.memory_space<vmem>>, vector<1x4x8x8xf32>
    %7 = vector.shape_cast %6 : vector<1x4x8x8xf32> to vector<4x8x8xf32>
    %8 = arith.truncf %7 : vector<4x8x8xf32> to vector<4x8x8xbf16>
    "tpu.trace_start"() <{level = 10 : i32, message = "hqd,hkd->hqk"}> : () -> ()
    %cst = arith.constant dense<0.000000e+00> : vector<4x8x8xf32>
    %9 = tpu.matmul %2, %5, %cst {dimension_numbers = #tpu.dot_dimension_numbers<[2], [2], [1], [1], [0, 0, 0, 1, 1, 1], [0], [0]>} : vector<4x8x8xbf16>, vector<4x8x8xbf16>, vector<4x8x8xf32> -> vector<4x8x8xf32>
    "tpu.trace_stop"() : () -> ()
    %cst_11 = arith.constant 0.353553385 : f32
    %10 = vector.broadcast %cst_11 : f32 to vector<4x8x8xf32>
    %11 = arith.mulf %9, %10 : vector<4x8x8xf32>
    %c0_12 = arith.constant 0 : index
    %c0_13 = arith.constant 0 : index
    %12 = vector.load %arg4[%c0_12, %c0_13] : memref<8x8xf32, #tpu.memory_space<vmem>>, vector<8x8xf32>
    %13 = vector.shape_cast %12 : vector<8x8xf32> to vector<1x8x8xf32>
    %14 = vector.broadcast %13 : vector<1x8x8xf32> to vector<4x8x8xf32>
    %15 = arith.addf %11, %14 : vector<4x8x8xf32>
    %cst_14 = arith.constant dense<0xFF800000> : vector<4x8xf32>
    %16 = vector.multi_reduction <maximumf>, %15, %cst_14 [2] : vector<4x8x8xf32> to vector<4x8xf32>
    %17 = vector.shape_cast %16 : vector<4x8xf32> to vector<4x8x1xf32>
    %18 = vector.broadcast %17 : vector<4x8x1xf32> to vector<4x8x8xf32>
    %19 = arith.subf %15, %18 : vector<4x8x8xf32>
    %20 = math.exp %19 : vector<4x8x8xf32>
    %cst_15 = arith.constant dense<0.000000e+00> : vector<4x8xf32>
    %21 = vector.multi_reduction <add>, %20, %cst_15 [2] : vector<4x8x8xf32> to vector<4x8xf32>
    %22 = vector.shape_cast %21 : vector<4x8xf32> to vector<4x8x1xf32>
    %23 = tpu.reciprocal %22 {approx = true} : vector<4x8x1xf32> -> vector<4x8x1xf32>
    %24 = vector.broadcast %23 : vector<4x8x1xf32> to vector<4x8x8xf32>
    %25 = arith.mulf %20, %24 : vector<4x8x8xf32>
    %26 = arith.truncf %25 : vector<4x8x8xf32> to vector<4x8x8xbf16>
    "tpu.trace_start"() <{level = 10 : i32, message = "hqk,hkd->hqd"}> : () -> ()
    %cst_16 = arith.constant dense<0.000000e+00> : vector<4x8x8xf32>
    %27 = tpu.matmul %26, %8, %cst_16 {dimension_numbers = #tpu.dot_dimension_numbers<[2], [1], [1], [2], [0, 0, 0, 1, 1, 2], [0], [0]>} : vector<4x8x8xbf16>, vector<4x8x8xbf16>, vector<4x8x8xf32> -> vector<4x8x8xf32>
    "tpu.trace_stop"() : () -> ()
    %c0_17 = arith.constant 0 : index
    %c0_18 = arith.constant 0 : index
    %c0_19 = arith.constant 0 : index
    %c0_20 = arith.constant 0 : index
    %28 = vector.load %arg5[%c0_17, %c0_18, %c0_19, %c0_20] : memref<1x4x8x8xf32, #tpu.memory_space<vmem>>, vector<1x4x8x8xf32>
    %29 = vector.shape_cast %28 : vector<1x4x8x8xf32> to vector<4x8x8xf32>
    %30 = vector.shape_cast %27 : vector<4x8x8xf32> to vector<1x4x8x8xf32>
    tpu.vector_store %arg5[%c0_17, %c0_18, %c0_19, %c0_20], %30 {strides = array<i32>} : memref<1x4x8x8xf32, #tpu.memory_space<vmem>>, vector<1x4x8x8xf32>,
    return
  }
  func.func @transform_0(%arg0: i32) -> (i32, i32, i32, i32) {
    %c0_i32 = arith.constant 0 : i32
    %c0_i32_0 = arith.constant 0 : i32
    %c0_i32_1 = arith.constant 0 : i32
    %c0_i32_2 = arith.constant 0 : i32
    return %arg0, %c0_i32, %c0_i32_0, %c0_i32_1 : i32, i32, i32, i32
  }
  func.func @transform_1(%arg0: i32) -> (i32, i32, i32, i32) {
    %c0_i32 = arith.constant 0 : i32
    %c0_i32_0 = arith.constant 0 : i32
    %c0_i32_1 = arith.constant 0 : i32
    %c0_i32_2 = arith.constant 0 : i32
    return %arg0, %c0_i32, %c0_i32_0, %c0_i32_1 : i32, i32, i32, i32
  }
  func.func @transform_2(%arg0: i32) -> (i32, i32, i32, i32) {
    %c0_i32 = arith.constant 0 : i32
    %c0_i32_0 = arith.constant 0 : i32
    %c0_i32_1 = arith.constant 0 : i32
    %c0_i32_2 = arith.constant 0 : i32
    return %arg0, %c0_i32, %c0_i32_0, %c0_i32_1 : i32, i32, i32, i32
  }
  func.func @transform_3(%arg0: i32) -> (i32, i32) {
    %c0_i32 = arith.constant 0 : i32
    %c0_i32_0 = arith.constant 0 : i32
    %c0_i32_1 = arith.constant 0 : i32
    return %c0_i32, %c0_i32_0 : i32, i32
  }
  func.func @transform_4(%arg0: i32) -> (i32, i32, i32, i32) {
    %c0_i32 = arith.constant 0 : i32
    %c0_i32_0 = arith.constant 0 : i32
    %c0_i32_1 = arith.constant 0 : i32
    %c0_i32_2 = arith.constant 0 : i32
    return %arg0, %c0_i32, %c0_i32_0, %c0_i32_1 : i32, i32, i32, i32
  }
}

module attributes {stable_mosaic.version = 11 : i64} {
  func.func @_matmul_res_ln_kernel(%arg0: i32, %arg1: i32, %arg2: memref<16x32xf32, #tpu.memory_space<vmem>>, %arg3: memref<32x32xf32, #tpu.memory_space<vmem>>, %arg4: memref<1x32xf32, #tpu.memory_space<vmem>>, %arg5: memref<16x32xf32, #tpu.memory_space<vmem>>, %arg6: memref<1x32xf32, #tpu.memory_space<vmem>>, %arg7: memref<1x32xf32, #tpu.memory_space<vmem>>, %arg8: memref<16x32xf32, #tpu.memory_space<vmem>>, %arg9: memref<16x32xf32, #tpu.memory_space<vmem>>) attributes {dimension_semantics = [#tpu.dimension_semantics<parallel>, #tpu.dimension_semantics<arbitrary>], iteration_bounds = array<i64: 1, 1>, scalar_prefetch = 0 : i64, scratch_operands = 1 : i64, tpu.core_type = #tpu.core_type<tc>, window_params = [{transform_indices = @transform_0, window_bounds = array<i64: 16, 32>}, {transform_indices = @transform_1, window_bounds = array<i64: 32, 32>}, {pipeline_mode = #tpu.pipeline_mode<synchronous>, transform_indices = @transform_2, window_bounds = array<i64: 1, 32>}, {transform_indices = @transform_3, window_bounds = array<i64: 16, 32>}, {pipeline_mode = #tpu.pipeline_mode<synchronous>, transform_indices = @transform_4, window_bounds = array<i64: 1, 32>}, {pipeline_mode = #tpu.pipeline_mode<synchronous>, transform_indices = @transform_5, window_bounds = array<i64: 1, 32>}, {transform_indices = @transform_6, window_bounds = array<i64: 16, 32>}]} {
    %c0_i32 = arith.constant 0 : i32
    %0 = arith.cmpi eq, %arg1, %c0_i32 : i32
    %1 = arith.extui %0 : i1 to i32
    %c0_i32_0 = arith.constant 0 : i32
    %2 = arith.cmpi ne, %1, %c0_i32_0 : i32
    scf.if %2 {
      %cst_10 = arith.constant 0.000000e+00 : f32
      %14 = vector.broadcast %cst_10 : f32 to vector<16x32xf32>
      %c0_11 = arith.constant 0 : index
      %c0_12 = arith.constant 0 : index
      %15 = vector.load %arg9[%c0_11, %c0_12] : memref<16x32xf32, #tpu.memory_space<vmem>>, vector<16x32xf32>
      tpu.vector_store %arg9[%c0_11, %c0_12], %14 {strides = array<i32>} : memref<16x32xf32, #tpu.memory_space<vmem>>, vector<16x32xf32>,
    } else {
    }
    %c0 = arith.constant 0 : index
    %c0_1 = arith.constant 0 : index
    %3 = vector.load %arg9[%c0, %c0_1] : memref<16x32xf32, #tpu.memory_space<vmem>>, vector<16x32xf32>
    %c0_2 = arith.constant 0 : index
    %c0_3 = arith.constant 0 : index
    %4 = vector.load %arg2[%c0_2, %c0_3] : memref<16x32xf32, #tpu.memory_space<vmem>>, vector<16x32xf32>
    %5 = arith.truncf %4 : vector<16x32xf32> to vector<16x32xbf16>
    %c0_4 = arith.constant 0 : index
    %c0_5 = arith.constant 0 : index
    %6 = vector.load %arg3[%c0_4, %c0_5] : memref<32x32xf32, #tpu.memory_space<vmem>>, vector<32x32xf32>
    %7 = arith.truncf %6 : vector<32x32xf32> to vector<32x32xbf16>
    %cst = arith.constant dense<0.000000e+00> : vector<16x32xf32>
    %8 = tpu.matmul %5, %7, %cst {dimension_numbers = #tpu.dot_dimension_numbers<[1], [0], [0], [1], [0, 0, 1, 1], [], []>} : vector<16x32xbf16>, vector<32x32xbf16>, vector<16x32xf32> -> vector<16x32xf32>
    %9 = arith.addf %3, %8 : vector<16x32xf32>
    %c0_6 = arith.constant 0 : index
    %c0_7 = arith.constant 0 : index
    %10 = vector.load %arg9[%c0_6, %c0_7] : memref<16x32xf32, #tpu.memory_space<vmem>>, vector<16x32xf32>
    tpu.vector_store %arg9[%c0_6, %c0_7], %9 {strides = array<i32>} : memref<16x32xf32, #tpu.memory_space<vmem>>, vector<16x32xf32>,
    %c0_i32_8 = arith.constant 0 : i32
    %11 = arith.cmpi eq, %arg1, %c0_i32_8 : i32
    %12 = arith.extui %11 : i1 to i32
    %c0_i32_9 = arith.constant 0 : i32
    %13 = arith.cmpi ne, %12, %c0_i32_9 : i32
    scf.if %13 {
      %c0_10 = arith.constant 0 : index
      %c0_11 = arith.constant 0 : index
      %14 = vector.load %arg9[%c0_10, %c0_11] : memref<16x32xf32, #tpu.memory_space<vmem>>, vector<16x32xf32>
      %c0_12 = arith.constant 0 : index
      %c0_13 = arith.constant 0 : index
      %15 = vector.load %arg4[%c0_12, %c0_13] : memref<1x32xf32, #tpu.memory_space<vmem>>, vector<1x32xf32>
      %16 = vector.broadcast %15 : vector<1x32xf32> to vector<16x32xf32>
      %17 = arith.addf %14, %16 : vector<16x32xf32>
      %c0_14 = arith.constant 0 : index
      %c0_15 = arith.constant 0 : index
      %18 = vector.load %arg5[%c0_14, %c0_15] : memref<16x32xf32, #tpu.memory_space<vmem>>, vector<16x32xf32>
      %19 = arith.addf %17, %18 : vector<16x32xf32>
      %cst_16 = arith.constant dense<0.000000e+00> : vector<16xf32>
      %20 = vector.multi_reduction <add>, %19, %cst_16 [1] : vector<16x32xf32> to vector<16xf32>
      %21 = vector.shape_cast %20 : vector<16xf32> to vector<16x1xf32>
      %cst_17 = arith.constant 3.200000e+01 : f32
      %22 = vector.broadcast %cst_17 : f32 to vector<16x1xf32>
      %23 = arith.divf %21, %22 : vector<16x1xf32>
      %24 = vector.broadcast %23 : vector<16x1xf32> to vector<16x32xf32>
      %25 = arith.subf %19, %24 : vector<16x32xf32>
      %26 = arith.mulf %25, %25 : vector<16x32xf32>
      %cst_18 = arith.constant dense<0.000000e+00> : vector<16xf32>
      %27 = vector.multi_reduction <add>, %26, %cst_18 [1] : vector<16x32xf32> to vector<16xf32>
      %28 = vector.shape_cast %27 : vector<16xf32> to vector<16x1xf32>
      %cst_19 = arith.constant 3.200000e+01 : f32
      %29 = vector.broadcast %cst_19 : f32 to vector<16x1xf32>
      %30 = arith.divf %28, %29 : vector<16x1xf32>
      %31 = vector.broadcast %23 : vector<16x1xf32> to vector<16x32xf32>
      %32 = arith.subf %19, %31 : vector<16x32xf32>
      %cst_20 = arith.constant 9.99999974E-6 : f32
      %33 = vector.broadcast %cst_20 : f32 to vector<16x1xf32>
      %34 = arith.addf %30, %33 : vector<16x1xf32>
      %35 = math.rsqrt %34 : vector<16x1xf32>
      %36 = vector.broadcast %35 : vector<16x1xf32> to vector<16x32xf32>
      %37 = arith.mulf %32, %36 : vector<16x32xf32>
      %c0_21 = arith.constant 0 : index
      %c0_22 = arith.constant 0 : index
      %38 = vector.load %arg6[%c0_21, %c0_22] : memref<1x32xf32, #tpu.memory_space<vmem>>, vector<1x32xf32>
      %39 = vector.broadcast %38 : vector<1x32xf32> to vector<16x32xf32>
      %40 = arith.mulf %37, %39 : vector<16x32xf32>
      %c0_23 = arith.constant 0 : index
      %c0_24 = arith.constant 0 : index
      %41 = vector.load %arg7[%c0_23, %c0_24] : memref<1x32xf32, #tpu.memory_space<vmem>>, vector<1x32xf32>
      %42 = vector.broadcast %41 : vector<1x32xf32> to vector<16x32xf32>
      %43 = arith.addf %40, %42 : vector<16x32xf32>
      %c0_25 = arith.constant 0 : index
      %c0_26 = arith.constant 0 : index
      %44 = vector.load %arg8[%c0_25, %c0_26] : memref<16x32xf32, #tpu.memory_space<vmem>>, vector<16x32xf32>
      tpu.vector_store %arg8[%c0_25, %c0_26], %43 {strides = array<i32>} : memref<16x32xf32, #tpu.memory_space<vmem>>, vector<16x32xf32>,
    } else {
    }
    return
  }
  func.func @transform_0(%arg0: i32, %arg1: i32) -> (i32, i32) {
    %c0_i32 = arith.constant 0 : i32
    return %arg0, %arg1 : i32, i32
  }
  func.func @transform_1(%arg0: i32, %arg1: i32) -> (i32, i32) {
    %c0_i32 = arith.constant 0 : i32
    %c0_i32_0 = arith.constant 0 : i32
    return %arg1, %c0_i32 : i32, i32
  }
  func.func @transform_2(%arg0: i32, %arg1: i32) -> (i32, i32) {
    %c0_i32 = arith.constant 0 : i32
    %c0_i32_0 = arith.constant 0 : i32
    %c0_i32_1 = arith.constant 0 : i32
    return %c0_i32, %c0_i32_0 : i32, i32
  }
  func.func @transform_3(%arg0: i32, %arg1: i32) -> (i32, i32) {
    %c0_i32 = arith.constant 0 : i32
    %c0_i32_0 = arith.constant 0 : i32
    return %arg0, %c0_i32 : i32, i32
  }
  func.func @transform_4(%arg0: i32, %arg1: i32) -> (i32, i32) {
    %c0_i32 = arith.constant 0 : i32
    %c0_i32_0 = arith.constant 0 : i32
    %c0_i32_1 = arith.constant 0 : i32
    return %c0_i32, %c0_i32_0 : i32, i32
  }
  func.func @transform_5(%arg0: i32, %arg1: i32) -> (i32, i32) {
    %c0_i32 = arith.constant 0 : i32
    %c0_i32_0 = arith.constant 0 : i32
    %c0_i32_1 = arith.constant 0 : i32
    return %c0_i32, %c0_i32_0 : i32, i32
  }
  func.func @transform_6(%arg0: i32, %arg1: i32) -> (i32, i32) {
    %c0_i32 = arith.constant 0 : i32
    %c0_i32_0 = arith.constant 0 : i32
    return %arg0, %c0_i32 : i32, i32
  }
}

module attributes {stable_mosaic.version = 11 : i64} {
  func.func @_matmul_kernel(%arg0: i32, %arg1: i32, %arg2: i32, %arg3: memref<16x32xf32, #tpu.memory_space<vmem>>, %arg4: memref<32x32xf32, #tpu.memory_space<vmem>>, %arg5: memref<1x32xf32, #tpu.memory_space<vmem>>, %arg6: memref<16x32xf32, #tpu.memory_space<vmem>>, %arg7: memref<16x32xf32, #tpu.memory_space<vmem>>) attributes {dimension_semantics = [#tpu.dimension_semantics<parallel>, #tpu.dimension_semantics<parallel>, #tpu.dimension_semantics<arbitrary>], iteration_bounds = array<i64: 1, 1, 1>, scalar_prefetch = 0 : i64, scratch_operands = 1 : i64, tpu.core_type = #tpu.core_type<tc>, window_params = [{transform_indices = @transform_0, window_bounds = array<i64: 16, 32>}, {transform_indices = @transform_1, window_bounds = array<i64: 32, 32>}, {transform_indices = @transform_2, window_bounds = array<i64: 1, 32>}, {transform_indices = @transform_3, window_bounds = array<i64: 16, 32>}]} {
    %c0_i32 = arith.constant 0 : i32
    %0 = arith.cmpi eq, %arg2, %c0_i32 : i32
    %1 = arith.extui %0 : i1 to i32
    %c0_i32_0 = arith.constant 0 : i32
    %2 = arith.cmpi ne, %1, %c0_i32_0 : i32
    scf.if %2 {
      %cst_10 = arith.constant 0.000000e+00 : f32
      %14 = vector.broadcast %cst_10 : f32 to vector<16x32xf32>
      %c0_11 = arith.constant 0 : index
      %c0_12 = arith.constant 0 : index
      %15 = vector.load %arg7[%c0_11, %c0_12] : memref<16x32xf32, #tpu.memory_space<vmem>>, vector<16x32xf32>
      tpu.vector_store %arg7[%c0_11, %c0_12], %14 {strides = array<i32>} : memref<16x32xf32, #tpu.memory_space<vmem>>, vector<16x32xf32>,
    } else {
    }
    %c0 = arith.constant 0 : index
    %c0_1 = arith.constant 0 : index
    %3 = vector.load %arg7[%c0, %c0_1] : memref<16x32xf32, #tpu.memory_space<vmem>>, vector<16x32xf32>
    %c0_2 = arith.constant 0 : index
    %c0_3 = arith.constant 0 : index
    %4 = vector.load %arg3[%c0_2, %c0_3] : memref<16x32xf32, #tpu.memory_space<vmem>>, vector<16x32xf32>
    %5 = arith.truncf %4 : vector<16x32xf32> to vector<16x32xbf16>
    %c0_4 = arith.constant 0 : index
    %c0_5 = arith.constant 0 : index
    %6 = vector.load %arg4[%c0_4, %c0_5] : memref<32x32xf32, #tpu.memory_space<vmem>>, vector<32x32xf32>
    %7 = arith.truncf %6 : vector<32x32xf32> to vector<32x32xbf16>
    %cst = arith.constant dense<0.000000e+00> : vector<16x32xf32>
    %8 = tpu.matmul %5, %7, %cst {dimension_numbers = #tpu.dot_dimension_numbers<[1], [0], [0], [1], [0, 0, 1, 1], [], []>} : vector<16x32xbf16>, vector<32x32xbf16>, vector<16x32xf32> -> vector<16x32xf32>
    %9 = arith.addf %3, %8 : vector<16x32xf32>
    %c0_6 = arith.constant 0 : index
    %c0_7 = arith.constant 0 : index
    %10 = vector.load %arg7[%c0_6, %c0_7] : memref<16x32xf32, #tpu.memory_space<vmem>>, vector<16x32xf32>
    tpu.vector_store %arg7[%c0_6, %c0_7], %9 {strides = array<i32>} : memref<16x32xf32, #tpu.memory_space<vmem>>, vector<16x32xf32>,
    %c0_i32_8 = arith.constant 0 : i32
    %11 = arith.cmpi eq, %arg2, %c0_i32_8 : i32
    %12 = arith.extui %11 : i1 to i32
    %c0_i32_9 = arith.constant 0 : i32
    %13 = arith.cmpi ne, %12, %c0_i32_9 : i32
    scf.if %13 {
      %c0_10 = arith.constant 0 : index
      %c0_11 = arith.constant 0 : index
      %14 = vector.load %arg7[%c0_10, %c0_11] : memref<16x32xf32, #tpu.memory_space<vmem>>, vector<16x32xf32>
      %c0_12 = arith.constant 0 : index
      %c0_13 = arith.constant 0 : index
      %15 = vector.load %arg5[%c0_12, %c0_13] : memref<1x32xf32, #tpu.memory_space<vmem>>, vector<1x32xf32>
      %16 = vector.broadcast %15 : vector<1x32xf32> to vector<16x32xf32>
      %17 = arith.addf %14, %16 : vector<16x32xf32>
      %c0_14 = arith.constant 0 : index
      %c0_15 = arith.constant 0 : index
      %18 = vector.load %arg6[%c0_14, %c0_15] : memref<16x32xf32, #tpu.memory_space<vmem>>, vector<16x32xf32>
      tpu.vector_store %arg6[%c0_14, %c0_15], %17 {strides = array<i32>} : memref<16x32xf32, #tpu.memory_space<vmem>>, vector<16x32xf32>,
    } else {
    }
    return
  }
  func.func @transform_0(%arg0: i32, %arg1: i32, %arg2: i32) -> (i32, i32) {
    %c0_i32 = arith.constant 0 : i32
    return %arg0, %arg2 : i32, i32
  }
  func.func @transform_1(%arg0: i32, %arg1: i32, %arg2: i32) -> (i32, i32) {
    %c0_i32 = arith.constant 0 : i32
    return %arg2, %arg1 : i32, i32
  }
  func.func @transform_2(%arg0: i32, %arg1: i32, %arg2: i32) -> (i32, i32) {
    %c0_i32 = arith.constant 0 : i32
    %c0_i32_0 = arith.constant 0 : i32
    return %c0_i32, %arg1 : i32, i32
  }
  func.func @transform_3(%arg0: i32, %arg1: i32, %arg2: i32) -> (i32, i32) {
    %c0_i32 = arith.constant 0 : i32
    return %arg0, %arg1 : i32, i32
  }
}

module attributes {stable_mosaic.version = 11 : i64} {
  func.func @_embed_scale_pe_kernel(%arg0: i32, %arg1: memref<8x2x32xf32, #tpu.memory_space<vmem>>, %arg2: memref<8x1x32xf32, #tpu.memory_space<vmem>>, %arg3: memref<8x2x32xf32, #tpu.memory_space<vmem>>) attributes {dimension_semantics = [#tpu.dimension_semantics<parallel>], iteration_bounds = array<i64: 1>, scalar_prefetch = 0 : i64, scratch_operands = 0 : i64, tpu.core_type = #tpu.core_type<tc>, window_params = [{transform_indices = @transform_0, window_bounds = array<i64: 8, 2, 32>}, {transform_indices = @transform_1, window_bounds = array<i64: 8, 1, 32>}, {transform_indices = @transform_2, window_bounds = array<i64: 8, 2, 32>}]} {
    %c0 = arith.constant 0 : index
    %c0_0 = arith.constant 0 : index
    %c0_1 = arith.constant 0 : index
    %0 = vector.load %arg1[%c0, %c0_0, %c0_1] : memref<8x2x32xf32, #tpu.memory_space<vmem>>, vector<8x2x32xf32>
    %cst = arith.constant 5.65685415 : f32
    %1 = vector.broadcast %cst : f32 to vector<8x2x32xf32>
    %2 = arith.mulf %0, %1 : vector<8x2x32xf32>
    %c0_2 = arith.constant 0 : index
    %c0_3 = arith.constant 0 : index
    %c0_4 = arith.constant 0 : index
    %3 = vector.load %arg2[%c0_2, %c0_3, %c0_4] : memref<8x1x32xf32, #tpu.memory_space<vmem>>, vector<8x1x32xf32>
    %4 = vector.broadcast %3 : vector<8x1x32xf32> to vector<8x2x32xf32>
    %5 = arith.addf %2, %4 : vector<8x2x32xf32>
    %c0_5 = arith.constant 0 : index
    %c0_6 = arith.constant 0 : index
    %c0_7 = arith.constant 0 : index
    %6 = vector.load %arg3[%c0_5, %c0_6, %c0_7] : memref<8x2x32xf32, #tpu.memory_space<vmem>>, vector<8x2x32xf32>
    tpu.vector_store %arg3[%c0_5, %c0_6, %c0_7], %5 {strides = array<i32>} : memref<8x2x32xf32, #tpu.memory_space<vmem>>, vector<8x2x32xf32>,
    return
  }
  func.func @transform_0(%arg0: i32) -> (i32, i32, i32) {
    %c0_i32 = arith.constant 0 : i32
    %c0_i32_0 = arith.constant 0 : i32
    %c0_i32_1 = arith.constant 0 : i32
    return %arg0, %c0_i32, %c0_i32_0 : i32, i32, i32
  }
  func.func @transform_1(%arg0: i32) -> (i32, i32, i32) {
    %c0_i32 = arith.constant 0 : i32
    %c0_i32_0 = arith.constant 0 : i32
    %c0_i32_1 = arith.constant 0 : i32
    return %arg0, %c0_i32, %c0_i32_0 : i32, i32, i32
  }
  func.func @transform_2(%arg0: i32) -> (i32, i32, i32) {
    %c0_i32 = arith.constant 0 : i32
    %c0_i32_0 = arith.constant 0 : i32
    %c0_i32_1 = arith.constant 0 : i32
    return %arg0, %c0_i32, %c0_i32_0 : i32, i32, i32
  }
}

module attributes {stable_mosaic.version = 11 : i64} {
  func.func @_matmul_kernel(%arg0: i32, %arg1: i32, %arg2: i32, %arg3: memref<16x32xf32, #tpu.memory_space<vmem>>, %arg4: memref<32x64xf32, #tpu.memory_space<vmem>>, %arg5: memref<1x64xf32, #tpu.memory_space<vmem>>, %arg6: memref<16x64xf32, #tpu.memory_space<vmem>>, %arg7: memref<16x64xf32, #tpu.memory_space<vmem>>) attributes {dimension_semantics = [#tpu.dimension_semantics<parallel>, #tpu.dimension_semantics<parallel>, #tpu.dimension_semantics<arbitrary>], iteration_bounds = array<i64: 1, 1, 1>, scalar_prefetch = 0 : i64, scratch_operands = 1 : i64, tpu.core_type = #tpu.core_type<tc>, window_params = [{transform_indices = @transform_0, window_bounds = array<i64: 16, 32>}, {transform_indices = @transform_1, window_bounds = array<i64: 32, 64>}, {transform_indices = @transform_2, window_bounds = array<i64: 1, 64>}, {transform_indices = @transform_3, window_bounds = array<i64: 16, 64>}]} {
    %c0_i32 = arith.constant 0 : i32
    %0 = arith.cmpi eq, %arg2, %c0_i32 : i32
    %1 = arith.extui %0 : i1 to i32
    %c0_i32_0 = arith.constant 0 : i32
    %2 = arith.cmpi ne, %1, %c0_i32_0 : i32
    scf.if %2 {
      %cst_10 = arith.constant 0.000000e+00 : f32
      %14 = vector.broadcast %cst_10 : f32 to vector<16x64xf32>
      %c0_11 = arith.constant 0 : index
      %c0_12 = arith.constant 0 : index
      %15 = vector.load %arg7[%c0_11, %c0_12] : memref<16x64xf32, #tpu.memory_space<vmem>>, vector<16x64xf32>
      tpu.vector_store %arg7[%c0_11, %c0_12], %14 {strides = array<i32>} : memref<16x64xf32, #tpu.memory_space<vmem>>, vector<16x64xf32>,
    } else {
    }
    %c0 = arith.constant 0 : index
    %c0_1 = arith.constant 0 : index
    %3 = vector.load %arg7[%c0, %c0_1] : memref<16x64xf32, #tpu.memory_space<vmem>>, vector<16x64xf32>
    %c0_2 = arith.constant 0 : index
    %c0_3 = arith.constant 0 : index
    %4 = vector.load %arg3[%c0_2, %c0_3] : memref<16x32xf32, #tpu.memory_space<vmem>>, vector<16x32xf32>
    %5 = arith.truncf %4 : vector<16x32xf32> to vector<16x32xbf16>
    %c0_4 = arith.constant 0 : index
    %c0_5 = arith.constant 0 : index
    %6 = vector.load %arg4[%c0_4, %c0_5] : memref<32x64xf32, #tpu.memory_space<vmem>>, vector<32x64xf32>
    %7 = arith.truncf %6 : vector<32x64xf32> to vector<32x64xbf16>
    %cst = arith.constant dense<0.000000e+00> : vector<16x64xf32>
    %8 = tpu.matmul %5, %7, %cst {dimension_numbers = #tpu.dot_dimension_numbers<[1], [0], [0], [1], [0, 0, 1, 1], [], []>} : vector<16x32xbf16>, vector<32x64xbf16>, vector<16x64xf32> -> vector<16x64xf32>
    %9 = arith.addf %3, %8 : vector<16x64xf32>
    %c0_6 = arith.constant 0 : index
    %c0_7 = arith.constant 0 : index
    %10 = vector.load %arg7[%c0_6, %c0_7] : memref<16x64xf32, #tpu.memory_space<vmem>>, vector<16x64xf32>
    tpu.vector_store %arg7[%c0_6, %c0_7], %9 {strides = array<i32>} : memref<16x64xf32, #tpu.memory_space<vmem>>, vector<16x64xf32>,
    %c0_i32_8 = arith.constant 0 : i32
    %11 = arith.cmpi eq, %arg2, %c0_i32_8 : i32
    %12 = arith.extui %11 : i1 to i32
    %c0_i32_9 = arith.constant 0 : i32
    %13 = arith.cmpi ne, %12, %c0_i32_9 : i32
    scf.if %13 {
      %c0_10 = arith.constant 0 : index
      %c0_11 = arith.constant 0 : index
      %14 = vector.load %arg7[%c0_10, %c0_11] : memref<16x64xf32, #tpu.memory_space<vmem>>, vector<16x64xf32>
      %c0_12 = arith.constant 0 : index
      %c0_13 = arith.constant 0 : index
      %15 = vector.load %arg5[%c0_12, %c0_13] : memref<1x64xf32, #tpu.memory_space<vmem>>, vector<1x64xf32>
      %16 = vector.broadcast %15 : vector<1x64xf32> to vector<16x64xf32>
      %17 = arith.addf %14, %16 : vector<16x64xf32>
      %cst_14 = arith.constant 0.000000e+00 : f32
      %18 = vector.broadcast %cst_14 : f32 to vector<16x64xf32>
      %19 = arith.maximumf %17, %18 : vector<16x64xf32>
      %c0_15 = arith.constant 0 : index
      %c0_16 = arith.constant 0 : index
      %20 = vector.load %arg6[%c0_15, %c0_16] : memref<16x64xf32, #tpu.memory_space<vmem>>, vector<16x64xf32>
      tpu.vector_store %arg6[%c0_15, %c0_16], %19 {strides = array<i32>} : memref<16x64xf32, #tpu.memory_space<vmem>>, vector<16x64xf32>,
    } else {
    }
    return
  }
  func.func @transform_0(%arg0: i32, %arg1: i32, %arg2: i32) -> (i32, i32) {
    %c0_i32 = arith.constant 0 : i32
    return %arg0, %arg2 : i32, i32
  }
  func.func @transform_1(%arg0: i32, %arg1: i32, %arg2: i32) -> (i32, i32) {
    %c0_i32 = arith.constant 0 : i32
    return %arg2, %arg1 : i32, i32
  }
  func.func @transform_2(%arg0: i32, %arg1: i32, %arg2: i32) -> (i32, i32) {
    %c0_i32 = arith.constant 0 : i32
    %c0_i32_0 = arith.constant 0 : i32
    return %c0_i32, %arg1 : i32, i32
  }
  func.func @transform_3(%arg0: i32, %arg1: i32, %arg2: i32) -> (i32, i32) {
    %c0_i32 = arith.constant 0 : i32
    return %arg0, %arg1 : i32, i32
  }
}

module attributes {stable_mosaic.version = 11 : i64} {
  func.func @_matmul_res_ln_kernel(%arg0: i32, %arg1: i32, %arg2: memref<16x64xf32, #tpu.memory_space<vmem>>, %arg3: memref<64x32xf32, #tpu.memory_space<vmem>>, %arg4: memref<1x32xf32, #tpu.memory_space<vmem>>, %arg5: memref<16x32xf32, #tpu.memory_space<vmem>>, %arg6: memref<1x32xf32, #tpu.memory_space<vmem>>, %arg7: memref<1x32xf32, #tpu.memory_space<vmem>>, %arg8: memref<16x32xf32, #tpu.memory_space<vmem>>, %arg9: memref<16x32xf32, #tpu.memory_space<vmem>>) attributes {dimension_semantics = [#tpu.dimension_semantics<parallel>, #tpu.dimension_semantics<arbitrary>], iteration_bounds = array<i64: 1, 1>, scalar_prefetch = 0 : i64, scratch_operands = 1 : i64, tpu.core_type = #tpu.core_type<tc>, window_params = [{transform_indices = @transform_0, window_bounds = array<i64: 16, 64>}, {transform_indices = @transform_1, window_bounds = array<i64: 64, 32>}, {pipeline_mode = #tpu.pipeline_mode<synchronous>, transform_indices = @transform_2, window_bounds = array<i64: 1, 32>}, {transform_indices = @transform_3, window_bounds = array<i64: 16, 32>}, {pipeline_mode = #tpu.pipeline_mode<synchronous>, transform_indices = @transform_4, window_bounds = array<i64: 1, 32>}, {pipeline_mode = #tpu.pipeline_mode<synchronous>, transform_indices = @transform_5, window_bounds = array<i64: 1, 32>}, {transform_indices = @transform_6, window_bounds = array<i64: 16, 32>}]} {
    %c0_i32 = arith.constant 0 : i32
    %0 = arith.cmpi eq, %arg1, %c0_i32 : i32
    %1 = arith.extui %0 : i1 to i32
    %c0_i32_0 = arith.constant 0 : i32
    %2 = arith.cmpi ne, %1, %c0_i32_0 : i32
    scf.if %2 {
      %cst_10 = arith.constant 0.000000e+00 : f32
      %14 = vector.broadcast %cst_10 : f32 to vector<16x32xf32>
      %c0_11 = arith.constant 0 : index
      %c0_12 = arith.constant 0 : index
      %15 = vector.load %arg9[%c0_11, %c0_12] : memref<16x32xf32, #tpu.memory_space<vmem>>, vector<16x32xf32>
      tpu.vector_store %arg9[%c0_11, %c0_12], %14 {strides = array<i32>} : memref<16x32xf32, #tpu.memory_space<vmem>>, vector<16x32xf32>,
    } else {
    }
    %c0 = arith.constant 0 : index
    %c0_1 = arith.constant 0 : index
    %3 = vector.load %arg9[%c0, %c0_1] : memref<16x32xf32, #tpu.memory_space<vmem>>, vector<16x32xf32>
    %c0_2 = arith.constant 0 : index
    %c0_3 = arith.constant 0 : index
    %4 = vector.load %arg2[%c0_2, %c0_3] : memref<16x64xf32, #tpu.memory_space<vmem>>, vector<16x64xf32>
    %5 = arith.truncf %4 : vector<16x64xf32> to vector<16x64xbf16>
    %c0_4 = arith.constant 0 : index
    %c0_5 = arith.constant 0 : index
    %6 = vector.load %arg3[%c0_4, %c0_5] : memref<64x32xf32, #tpu.memory_space<vmem>>, vector<64x32xf32>
    %7 = arith.truncf %6 : vector<64x32xf32> to vector<64x32xbf16>
    %cst = arith.constant dense<0.000000e+00> : vector<16x32xf32>
    %8 = tpu.matmul %5, %7, %cst {dimension_numbers = #tpu.dot_dimension_numbers<[1], [0], [0], [1], [0, 0, 1, 1], [], []>} : vector<16x64xbf16>, vector<64x32xbf16>, vector<16x32xf32> -> vector<16x32xf32>
    %9 = arith.addf %3, %8 : vector<16x32xf32>
    %c0_6 = arith.constant 0 : index
    %c0_7 = arith.constant 0 : index
    %10 = vector.load %arg9[%c0_6, %c0_7] : memref<16x32xf32, #tpu.memory_space<vmem>>, vector<16x32xf32>
    tpu.vector_store %arg9[%c0_6, %c0_7], %9 {strides = array<i32>} : memref<16x32xf32, #tpu.memory_space<vmem>>, vector<16x32xf32>,
    %c0_i32_8 = arith.constant 0 : i32
    %11 = arith.cmpi eq, %arg1, %c0_i32_8 : i32
    %12 = arith.extui %11 : i1 to i32
    %c0_i32_9 = arith.constant 0 : i32
    %13 = arith.cmpi ne, %12, %c0_i32_9 : i32
    scf.if %13 {
      %c0_10 = arith.constant 0 : index
      %c0_11 = arith.constant 0 : index
      %14 = vector.load %arg9[%c0_10, %c0_11] : memref<16x32xf32, #tpu.memory_space<vmem>>, vector<16x32xf32>
      %c0_12 = arith.constant 0 : index
      %c0_13 = arith.constant 0 : index
      %15 = vector.load %arg4[%c0_12, %c0_13] : memref<1x32xf32, #tpu.memory_space<vmem>>, vector<1x32xf32>
      %16 = vector.broadcast %15 : vector<1x32xf32> to vector<16x32xf32>
      %17 = arith.addf %14, %16 : vector<16x32xf32>
      %c0_14 = arith.constant 0 : index
      %c0_15 = arith.constant 0 : index
      %18 = vector.load %arg5[%c0_14, %c0_15] : memref<16x32xf32, #tpu.memory_space<vmem>>, vector<16x32xf32>
      %19 = arith.addf %17, %18 : vector<16x32xf32>
      %cst_16 = arith.constant dense<0.000000e+00> : vector<16xf32>
      %20 = vector.multi_reduction <add>, %19, %cst_16 [1] : vector<16x32xf32> to vector<16xf32>
      %21 = vector.shape_cast %20 : vector<16xf32> to vector<16x1xf32>
      %cst_17 = arith.constant 3.200000e+01 : f32
      %22 = vector.broadcast %cst_17 : f32 to vector<16x1xf32>
      %23 = arith.divf %21, %22 : vector<16x1xf32>
      %24 = vector.broadcast %23 : vector<16x1xf32> to vector<16x32xf32>
      %25 = arith.subf %19, %24 : vector<16x32xf32>
      %26 = arith.mulf %25, %25 : vector<16x32xf32>
      %cst_18 = arith.constant dense<0.000000e+00> : vector<16xf32>
      %27 = vector.multi_reduction <add>, %26, %cst_18 [1] : vector<16x32xf32> to vector<16xf32>
      %28 = vector.shape_cast %27 : vector<16xf32> to vector<16x1xf32>
      %cst_19 = arith.constant 3.200000e+01 : f32
      %29 = vector.broadcast %cst_19 : f32 to vector<16x1xf32>
      %30 = arith.divf %28, %29 : vector<16x1xf32>
      %31 = vector.broadcast %23 : vector<16x1xf32> to vector<16x32xf32>
      %32 = arith.subf %19, %31 : vector<16x32xf32>
      %cst_20 = arith.constant 9.99999974E-6 : f32
      %33 = vector.broadcast %cst_20 : f32 to vector<16x1xf32>
      %34 = arith.addf %30, %33 : vector<16x1xf32>
      %35 = math.rsqrt %34 : vector<16x1xf32>
      %36 = vector.broadcast %35 : vector<16x1xf32> to vector<16x32xf32>
      %37 = arith.mulf %32, %36 : vector<16x32xf32>
      %c0_21 = arith.constant 0 : index
      %c0_22 = arith.constant 0 : index
      %38 = vector.load %arg6[%c0_21, %c0_22] : memref<1x32xf32, #tpu.memory_space<vmem>>, vector<1x32xf32>
      %39 = vector.broadcast %38 : vector<1x32xf32> to vector<16x32xf32>
      %40 = arith.mulf %37, %39 : vector<16x32xf32>
      %c0_23 = arith.constant 0 : index
      %c0_24 = arith.constant 0 : index
      %41 = vector.load %arg7[%c0_23, %c0_24] : memref<1x32xf32, #tpu.memory_space<vmem>>, vector<1x32xf32>
      %42 = vector.broadcast %41 : vector<1x32xf32> to vector<16x32xf32>
      %43 = arith.addf %40, %42 : vector<16x32xf32>
      %c0_25 = arith.constant 0 : index
      %c0_26 = arith.constant 0 : index
      %44 = vector.load %arg8[%c0_25, %c0_26] : memref<16x32xf32, #tpu.memory_space<vmem>>, vector<16x32xf32>
      tpu.vector_store %arg8[%c0_25, %c0_26], %43 {strides = array<i32>} : memref<16x32xf32, #tpu.memory_space<vmem>>, vector<16x32xf32>,
    } else {
    }
    return
  }
  func.func @transform_0(%arg0: i32, %arg1: i32) -> (i32, i32) {
    %c0_i32 = arith.constant 0 : i32
    return %arg0, %arg1 : i32, i32
  }
  func.func @transform_1(%arg0: i32, %arg1: i32) -> (i32, i32) {
    %c0_i32 = arith.constant 0 : i32
    %c0_i32_0 = arith.constant 0 : i32
    return %arg1, %c0_i32 : i32, i32
  }
  func.func @transform_2(%arg0: i32, %arg1: i32) -> (i32, i32) {
    %c0_i32 = arith.constant 0 : i32
    %c0_i32_0 = arith.constant 0 : i32
    %c0_i32_1 = arith.constant 0 : i32
    return %c0_i32, %c0_i32_0 : i32, i32
  }
  func.func @transform_3(%arg0: i32, %arg1: i32) -> (i32, i32) {
    %c0_i32 = arith.constant 0 : i32
    %c0_i32_0 = arith.constant 0 : i32
    return %arg0, %c0_i32 : i32, i32
  }
  func.func @transform_4(%arg0: i32, %arg1: i32) -> (i32, i32) {
    %c0_i32 = arith.constant 0 : i32
    %c0_i32_0 = arith.constant 0 : i32
    %c0_i32_1 = arith.constant 0 : i32
    return %c0_i32, %c0_i32_0 : i32, i32
  }
  func.func @transform_5(%arg0: i32, %arg1: i32) -> (i32, i32) {
    %c0_i32 = arith.constant 0 : i32
    %c0_i32_0 = arith.constant 0 : i32
    %c0_i32_1 = arith.constant 0 : i32
    return %c0_i32, %c0_i32_0 : i32, i32
  }
  func.func @transform_6(%arg0: i32, %arg1: i32) -> (i32, i32) {
    %c0_i32 = arith.constant 0 : i32
    %c0_i32_0 = arith.constant 0 : i32
    return %arg0, %c0_i32 : i32, i32
  }
}

module attributes {stable_mosaic.version = 11 : i64} {
  func.func @_matmul_kernel(%arg0: i32, %arg1: i32, %arg2: i32, %arg3: memref<16x32xf32, #tpu.memory_space<vmem>>, %arg4: memref<32x64xf32, #tpu.memory_space<vmem>>, %arg5: memref<1x64xf32, #tpu.memory_space<vmem>>, %arg6: memref<16x64xf32, #tpu.memory_space<vmem>>, %arg7: memref<16x64xf32, #tpu.memory_space<vmem>>) attributes {dimension_semantics = [#tpu.dimension_semantics<parallel>, #tpu.dimension_semantics<parallel>, #tpu.dimension_semantics<arbitrary>], iteration_bounds = array<i64: 1, 1, 1>, scalar_prefetch = 0 : i64, scratch_operands = 1 : i64, tpu.core_type = #tpu.core_type<tc>, window_params = [{transform_indices = @transform_0, window_bounds = array<i64: 16, 32>}, {transform_indices = @transform_1, window_bounds = array<i64: 32, 64>}, {transform_indices = @transform_2, window_bounds = array<i64: 1, 64>}, {transform_indices = @transform_3, window_bounds = array<i64: 16, 64>}]} {
    %c0_i32 = arith.constant 0 : i32
    %0 = arith.cmpi eq, %arg2, %c0_i32 : i32
    %1 = arith.extui %0 : i1 to i32
    %c0_i32_0 = arith.constant 0 : i32
    %2 = arith.cmpi ne, %1, %c0_i32_0 : i32
    scf.if %2 {
      %cst_10 = arith.constant 0.000000e+00 : f32
      %14 = vector.broadcast %cst_10 : f32 to vector<16x64xf32>
      %c0_11 = arith.constant 0 : index
      %c0_12 = arith.constant 0 : index
      %15 = vector.load %arg7[%c0_11, %c0_12] : memref<16x64xf32, #tpu.memory_space<vmem>>, vector<16x64xf32>
      tpu.vector_store %arg7[%c0_11, %c0_12], %14 {strides = array<i32>} : memref<16x64xf32, #tpu.memory_space<vmem>>, vector<16x64xf32>,
    } else {
    }
    %c0 = arith.constant 0 : index
    %c0_1 = arith.constant 0 : index
    %3 = vector.load %arg7[%c0, %c0_1] : memref<16x64xf32, #tpu.memory_space<vmem>>, vector<16x64xf32>
    %c0_2 = arith.constant 0 : index
    %c0_3 = arith.constant 0 : index
    %4 = vector.load %arg3[%c0_2, %c0_3] : memref<16x32xf32, #tpu.memory_space<vmem>>, vector<16x32xf32>
    %5 = arith.truncf %4 : vector<16x32xf32> to vector<16x32xbf16>
    %c0_4 = arith.constant 0 : index
    %c0_5 = arith.constant 0 : index
    %6 = vector.load %arg4[%c0_4, %c0_5] : memref<32x64xf32, #tpu.memory_space<vmem>>, vector<32x64xf32>
    %7 = arith.truncf %6 : vector<32x64xf32> to vector<32x64xbf16>
    %cst = arith.constant dense<0.000000e+00> : vector<16x64xf32>
    %8 = tpu.matmul %5, %7, %cst {dimension_numbers = #tpu.dot_dimension_numbers<[1], [0], [0], [1], [0, 0, 1, 1], [], []>} : vector<16x32xbf16>, vector<32x64xbf16>, vector<16x64xf32> -> vector<16x64xf32>
    %9 = arith.addf %3, %8 : vector<16x64xf32>
    %c0_6 = arith.constant 0 : index
    %c0_7 = arith.constant 0 : index
    %10 = vector.load %arg7[%c0_6, %c0_7] : memref<16x64xf32, #tpu.memory_space<vmem>>, vector<16x64xf32>
    tpu.vector_store %arg7[%c0_6, %c0_7], %9 {strides = array<i32>} : memref<16x64xf32, #tpu.memory_space<vmem>>, vector<16x64xf32>,
    %c0_i32_8 = arith.constant 0 : i32
    %11 = arith.cmpi eq, %arg2, %c0_i32_8 : i32
    %12 = arith.extui %11 : i1 to i32
    %c0_i32_9 = arith.constant 0 : i32
    %13 = arith.cmpi ne, %12, %c0_i32_9 : i32
    scf.if %13 {
      %c0_10 = arith.constant 0 : index
      %c0_11 = arith.constant 0 : index
      %14 = vector.load %arg7[%c0_10, %c0_11] : memref<16x64xf32, #tpu.memory_space<vmem>>, vector<16x64xf32>
      %c0_12 = arith.constant 0 : index
      %c0_13 = arith.constant 0 : index
      %15 = vector.load %arg5[%c0_12, %c0_13] : memref<1x64xf32, #tpu.memory_space<vmem>>, vector<1x64xf32>
      %16 = vector.broadcast %15 : vector<1x64xf32> to vector<16x64xf32>
      %17 = arith.addf %14, %16 : vector<16x64xf32>
      %c0_14 = arith.constant 0 : index
      %c0_15 = arith.constant 0 : index
      %18 = vector.load %arg6[%c0_14, %c0_15] : memref<16x64xf32, #tpu.memory_space<vmem>>, vector<16x64xf32>
      tpu.vector_store %arg6[%c0_14, %c0_15], %17 {strides = array<i32>} : memref<16x64xf32, #tpu.memory_space<vmem>>, vector<16x64xf32>,
    } else {
    }
    return
  }
  func.func @transform_0(%arg0: i32, %arg1: i32, %arg2: i32) -> (i32, i32) {
    %c0_i32 = arith.constant 0 : i32
    return %arg0, %arg2 : i32, i32
  }
  func.func @transform_1(%arg0: i32, %arg1: i32, %arg2: i32) -> (i32, i32) {
    %c0_i32 = arith.constant 0 : i32
    return %arg2, %arg1 : i32, i32
  }
  func.func @transform_2(%arg0: i32, %arg1: i32, %arg2: i32) -> (i32, i32) {
    %c0_i32 = arith.constant 0 : i32
    %c0_i32_0 = arith.constant 0 : i32
    return %c0_i32, %arg1 : i32, i32
  }
  func.func @transform_3(%arg0: i32, %arg1: i32, %arg2: i32) -> (i32, i32) {
    %c0_i32 = arith.constant 0 : i32
    return %arg0, %arg1 : i32, i32
  }
}

module attributes {stable_mosaic.version = 11 : i64} {
  func.func @_attn_kernel(%arg0: i32, %arg1: memref<1x4x8x8xf32, #tpu.memory_space<vmem>>, %arg2: memref<1x4x8x8xf32, #tpu.memory_space<vmem>>, %arg3: memref<1x4x8x8xf32, #tpu.memory_space<vmem>>, %arg4: memref<1x4x8x8xf32, #tpu.memory_space<vmem>>) attributes {dimension_semantics = [#tpu.dimension_semantics<parallel>], iteration_bounds = array<i64: 2>, scalar_prefetch = 0 : i64, scratch_operands = 0 : i64, tpu.core_type = #tpu.core_type<tc>, window_params = [{transform_indices = @transform_0, window_bounds = array<i64: 1, 4, 8, 8>}, {transform_indices = @transform_1, window_bounds = array<i64: 1, 4, 8, 8>}, {transform_indices = @transform_2, window_bounds = array<i64: 1, 4, 8, 8>}, {transform_indices = @transform_3, window_bounds = array<i64: 1, 4, 8, 8>}]} {
    %c0 = arith.constant 0 : index
    %c0_0 = arith.constant 0 : index
    %c0_1 = arith.constant 0 : index
    %c0_2 = arith.constant 0 : index
    %0 = vector.load %arg1[%c0, %c0_0, %c0_1, %c0_2] : memref<1x4x8x8xf32, #tpu.memory_space<vmem>>, vector<1x4x8x8xf32>
    %1 = vector.shape_cast %0 : vector<1x4x8x8xf32> to vector<4x8x8xf32>
    %2 = arith.truncf %1 : vector<4x8x8xf32> to vector<4x8x8xbf16>
    %c0_3 = arith.constant 0 : index
    %c0_4 = arith.constant 0 : index
    %c0_5 = arith.constant 0 : index
    %c0_6 = arith.constant 0 : index
    %3 = vector.load %arg2[%c0_3, %c0_4, %c0_5, %c0_6] : memref<1x4x8x8xf32, #tpu.memory_space<vmem>>, vector<1x4x8x8xf32>
    %4 = vector.shape_cast %3 : vector<1x4x8x8xf32> to vector<4x8x8xf32>
    %5 = arith.truncf %4 : vector<4x8x8xf32> to vector<4x8x8xbf16>
    %c0_7 = arith.constant 0 : index
    %c0_8 = arith.constant 0 : index
    %c0_9 = arith.constant 0 : index
    %c0_10 = arith.constant 0 : index
    %6 = vector.load %arg3[%c0_7, %c0_8, %c0_9, %c0_10] : memref<1x4x8x8xf32, #tpu.memory_space<vmem>>, vector<1x4x8x8xf32>
    %7 = vector.shape_cast %6 : vector<1x4x8x8xf32> to vector<4x8x8xf32>
    %8 = arith.truncf %7 : vector<4x8x8xf32> to vector<4x8x8xbf16>
    "tpu.trace_start"() <{level = 10 : i32, message = "hqd,hkd->hqk"}> : () -> ()
    %cst = arith.constant dense<0.000000e+00> : vector<4x8x8xf32>
    %9 = tpu.matmul %2, %5, %cst {dimension_numbers = #tpu.dot_dimension_numbers<[2], [2], [1], [1], [0, 0, 0, 1, 1, 1], [0], [0]>} : vector<4x8x8xbf16>, vector<4x8x8xbf16>, vector<4x8x8xf32> -> vector<4x8x8xf32>
    "tpu.trace_stop"() : () -> ()
    %cst_11 = arith.constant 0.353553385 : f32
    %10 = vector.broadcast %cst_11 : f32 to vector<4x8x8xf32>
    %11 = arith.mulf %9, %10 : vector<4x8x8xf32>
    %cst_12 = arith.constant dense<0xFF800000> : vector<4x8xf32>
    %12 = vector.multi_reduction <maximumf>, %11, %cst_12 [2] : vector<4x8x8xf32> to vector<4x8xf32>
    %13 = vector.shape_cast %12 : vector<4x8xf32> to vector<4x8x1xf32>
    %14 = vector.broadcast %13 : vector<4x8x1xf32> to vector<4x8x8xf32>
    %15 = arith.subf %11, %14 : vector<4x8x8xf32>
    %16 = math.exp %15 : vector<4x8x8xf32>
    %cst_13 = arith.constant dense<0.000000e+00> : vector<4x8xf32>
    %17 = vector.multi_reduction <add>, %16, %cst_13 [2] : vector<4x8x8xf32> to vector<4x8xf32>
    %18 = vector.shape_cast %17 : vector<4x8xf32> to vector<4x8x1xf32>
    %19 = tpu.reciprocal %18 {approx = true} : vector<4x8x1xf32> -> vector<4x8x1xf32>
    %20 = vector.broadcast %19 : vector<4x8x1xf32> to vector<4x8x8xf32>
    %21 = arith.mulf %16, %20 : vector<4x8x8xf32>
    %22 = arith.truncf %21 : vector<4x8x8xf32> to vector<4x8x8xbf16>
    "tpu.trace_start"() <{level = 10 : i32, message = "hqk,hkd->hqd"}> : () -> ()
    %cst_14 = arith.constant dense<0.000000e+00> : vector<4x8x8xf32>
    %23 = tpu.matmul %22, %8, %cst_14 {dimension_numbers = #tpu.dot_dimension_numbers<[2], [1], [1], [2], [0, 0, 0, 1, 1, 2], [0], [0]>} : vector<4x8x8xbf16>, vector<4x8x8xbf16>, vector<4x8x8xf32> -> vector<4x8x8xf32>
    "tpu.trace_stop"() : () -> ()
    %c0_15 = arith.constant 0 : index
    %c0_16 = arith.constant 0 : index
    %c0_17 = arith.constant 0 : index
    %c0_18 = arith.constant 0 : index
    %24 = vector.load %arg4[%c0_15, %c0_16, %c0_17, %c0_18] : memref<1x4x8x8xf32, #tpu.memory_space<vmem>>, vector<1x4x8x8xf32>
    %25 = vector.shape_cast %24 : vector<1x4x8x8xf32> to vector<4x8x8xf32>
    %26 = vector.shape_cast %23 : vector<4x8x8xf32> to vector<1x4x8x8xf32>
    tpu.vector_store %arg4[%c0_15, %c0_16, %c0_17, %c0_18], %26 {strides = array<i32>} : memref<1x4x8x8xf32, #tpu.memory_space<vmem>>, vector<1x4x8x8xf32>,
    return
  }
  func.func @transform_0(%arg0: i32) -> (i32, i32, i32, i32) {
    %c0_i32 = arith.constant 0 : i32
    %c0_i32_0 = arith.constant 0 : i32
    %c0_i32_1 = arith.constant 0 : i32
    %c0_i32_2 = arith.constant 0 : i32
    return %arg0, %c0_i32, %c0_i32_0, %c0_i32_1 : i32, i32, i32, i32
  }
  func.func @transform_1(%arg0: i32) -> (i32, i32, i32, i32) {
    %c0_i32 = arith.constant 0 : i32
    %c0_i32_0 = arith.constant 0 : i32
    %c0_i32_1 = arith.constant 0 : i32
    %c0_i32_2 = arith.constant 0 : i32
    return %arg0, %c0_i32, %c0_i32_0, %c0_i32_1 : i32, i32, i32, i32
  }
  func.func @transform_2(%arg0: i32) -> (i32, i32, i32, i32) {
    %c0_i32 = arith.constant 0 : i32
    %c0_i32_0 = arith.constant 0 : i32
    %c0_i32_1 = arith.constant 0 : i32
    %c0_i32_2 = arith.constant 0 : i32
    return %arg0, %c0_i32, %c0_i32_0, %c0_i32_1 : i32, i32, i32, i32
  }
  func.func @transform_3(%arg0: i32) -> (i32, i32, i32, i32) {
    %c0_i32 = arith.constant 0 : i32
    %c0_i32_0 = arith.constant 0 : i32
    %c0_i32_1 = arith.constant 0 : i32
    %c0_i32_2 = arith.constant 0 : i32
    return %arg0, %c0_i32, %c0_i32_0, %c0_i32_1 : i32, i32, i32, i32
  }
}

module attributes {stable_mosaic.version = 11 : i64} {
  func.func @_matmul_kernel(%arg0: i32, %arg1: i32, %arg2: i32, %arg3: memref<16x32xf32, #tpu.memory_space<vmem>>, %arg4: memref<32x32xf32, #tpu.memory_space<vmem>>, %arg5: memref<1x32xf32, #tpu.memory_space<vmem>>, %arg6: memref<16x32xf32, #tpu.memory_space<vmem>>, %arg7: memref<16x32xf32, #tpu.memory_space<vmem>>) attributes {dimension_semantics = [#tpu.dimension_semantics<parallel>, #tpu.dimension_semantics<parallel>, #tpu.dimension_semantics<arbitrary>], iteration_bounds = array<i64: 1, 1, 1>, scalar_prefetch = 0 : i64, scratch_operands = 1 : i64, tpu.core_type = #tpu.core_type<tc>, window_params = [{transform_indices = @transform_0, window_bounds = array<i64: 16, 32>}, {transform_indices = @transform_1, window_bounds = array<i64: 32, 32>}, {transform_indices = @transform_2, window_bounds = array<i64: 1, 32>}, {transform_indices = @transform_3, window_bounds = array<i64: 16, 32>}]} {
    %c0_i32 = arith.constant 0 : i32
    %0 = arith.cmpi eq, %arg2, %c0_i32 : i32
    %1 = arith.extui %0 : i1 to i32
    %c0_i32_0 = arith.constant 0 : i32
    %2 = arith.cmpi ne, %1, %c0_i32_0 : i32
    scf.if %2 {
      %cst_10 = arith.constant 0.000000e+00 : f32
      %14 = vector.broadcast %cst_10 : f32 to vector<16x32xf32>
      %c0_11 = arith.constant 0 : index
      %c0_12 = arith.constant 0 : index
      %15 = vector.load %arg7[%c0_11, %c0_12] : memref<16x32xf32, #tpu.memory_space<vmem>>, vector<16x32xf32>
      tpu.vector_store %arg7[%c0_11, %c0_12], %14 {strides = array<i32>} : memref<16x32xf32, #tpu.memory_space<vmem>>, vector<16x32xf32>,
    } else {
    }
    %c0 = arith.constant 0 : index
    %c0_1 = arith.constant 0 : index
    %3 = vector.load %arg7[%c0, %c0_1] : memref<16x32xf32, #tpu.memory_space<vmem>>, vector<16x32xf32>
    %c0_2 = arith.constant 0 : index
    %c0_3 = arith.constant 0 : index
    %4 = vector.load %arg3[%c0_2, %c0_3] : memref<16x32xf32, #tpu.memory_space<vmem>>, vector<16x32xf32>
    %5 = arith.truncf %4 : vector<16x32xf32> to vector<16x32xbf16>
    %c0_4 = arith.constant 0 : index
    %c0_5 = arith.constant 0 : index
    %6 = vector.load %arg4[%c0_4, %c0_5] : memref<32x32xf32, #tpu.memory_space<vmem>>, vector<32x32xf32>
    %7 = arith.truncf %6 : vector<32x32xf32> to vector<32x32xbf16>
    %cst = arith.constant dense<0.000000e+00> : vector<16x32xf32>
    %8 = tpu.matmul %5, %7, %cst {dimension_numbers = #tpu.dot_dimension_numbers<[1], [0], [0], [1], [0, 0, 1, 1], [], []>} : vector<16x32xbf16>, vector<32x32xbf16>, vector<16x32xf32> -> vector<16x32xf32>
    %9 = arith.addf %3, %8 : vector<16x32xf32>
    %c0_6 = arith.constant 0 : index
    %c0_7 = arith.constant 0 : index
    %10 = vector.load %arg7[%c0_6, %c0_7] : memref<16x32xf32, #tpu.memory_space<vmem>>, vector<16x32xf32>
    tpu.vector_store %arg7[%c0_6, %c0_7], %9 {strides = array<i32>} : memref<16x32xf32, #tpu.memory_space<vmem>>, vector<16x32xf32>,
    %c0_i32_8 = arith.constant 0 : i32
    %11 = arith.cmpi eq, %arg2, %c0_i32_8 : i32
    %12 = arith.extui %11 : i1 to i32
    %c0_i32_9 = arith.constant 0 : i32
    %13 = arith.cmpi ne, %12, %c0_i32_9 : i32
    scf.if %13 {
      %c0_10 = arith.constant 0 : index
      %c0_11 = arith.constant 0 : index
      %14 = vector.load %arg7[%c0_10, %c0_11] : memref<16x32xf32, #tpu.memory_space<vmem>>, vector<16x32xf32>
      %c0_12 = arith.constant 0 : index
      %c0_13 = arith.constant 0 : index
      %15 = vector.load %arg5[%c0_12, %c0_13] : memref<1x32xf32, #tpu.memory_space<vmem>>, vector<1x32xf32>
      %16 = vector.broadcast %15 : vector<1x32xf32> to vector<16x32xf32>
      %17 = arith.addf %14, %16 : vector<16x32xf32>
      %c0_14 = arith.constant 0 : index
      %c0_15 = arith.constant 0 : index
      %18 = vector.load %arg6[%c0_14, %c0_15] : memref<16x32xf32, #tpu.memory_space<vmem>>, vector<16x32xf32>
      tpu.vector_store %arg6[%c0_14, %c0_15], %17 {strides = array<i32>} : memref<16x32xf32, #tpu.memory_space<vmem>>, vector<16x32xf32>,
    } else {
    }
    return
  }
  func.func @transform_0(%arg0: i32, %arg1: i32, %arg2: i32) -> (i32, i32) {
    %c0_i32 = arith.constant 0 : i32
    return %arg0, %arg2 : i32, i32
  }
  func.func @transform_1(%arg0: i32, %arg1: i32, %arg2: i32) -> (i32, i32) {
    %c0_i32 = arith.constant 0 : i32
    return %arg2, %arg1 : i32, i32
  }
  func.func @transform_2(%arg0: i32, %arg1: i32, %arg2: i32) -> (i32, i32) {
    %c0_i32 = arith.constant 0 : i32
    %c0_i32_0 = arith.constant 0 : i32
    return %c0_i32, %arg1 : i32, i32
  }
  func.func @transform_3(%arg0: i32, %arg1: i32, %arg2: i32) -> (i32, i32) {
    %c0_i32 = arith.constant 0 : i32
    return %arg0, %arg1 : i32, i32
  }
}

</mosaic_0001>

<llo_original>
// kernel: transformer_forward.41
$region0: #{transformer_forward.41}
  #allocation0 [shape = 'u32[]', space=smem, size = 0x4, offset = 0x4, fixed_abs, tag = 'smem constant byte address 0x4 - core index']
  #allocation1 [shape = 'u32[72,128]{1,0:T(1,128)}', space=vmem, size = 0x9000, scoped, tag = 'internal scratch']
  #allocation2 [shape = 'f32[16,96]{1,0:T(8,128)}', space=vmem, size = 0x2000, scoped, tag = 'scratch operand']
  %s0 = inlined_call_operand.vmem [shape: f32[16,32], index: 0, kind: input, shape index: {}]
  %s1 = inlined_call_operand.vmem [shape: f32[32,96], index: 1, kind: input, shape index: {}]
  %s2 = inlined_call_operand.vmem [shape: f32[1,96], index: 2, kind: input, shape index: {}]
  %s3 = inlined_call_operand.vmem [shape: f32[16,96], index: 3, kind: output, shape index: {}]
  %s4 = sld [smem:[#allocation0]]
  $region30: #{transformer_forward.41} parent=0
    _
  %s6 = ssub.s32 1, %s4
  %s7 = scalar_select 0, %s6, %s4
  // Predicated region
  $region2: #{transformer_forward.41} parent=0 // pred_check
    _
  $region3: #{transformer_forward.41} parent=0 // pred_check_branch
    %9 = sbr.rel (0) target = $region5
  $region4: #{transformer_forward.41} parent=0 // pred_region
    _
  $region5: #{transformer_forward.41} parent=0 // pred_fallthru
    _
  // Predicated region
  $region6: #{transformer_forward.41} parent=0 // pred_check
    _
  $region7: #{transformer_forward.41} parent=0 // pred_check_branch
    %11 = sbr.rel (0) target = $region9
  $region8: #{transformer_forward.41} parent=0 // pred_region
    _
  $region9: #{transformer_forward.41} parent=0 // pred_fallthru
    _
  // Predicated region
  $region10: #{transformer_forward.41} parent=0 // pred_check
    _
  $region11: #{transformer_forward.41} parent=0 // pred_check_branch
    %13 = sbr.rel (0) target = $region13
  $region12: #{transformer_forward.41} parent=0 // pred_region
    _
  $region13: #{transformer_forward.41} parent=0 // pred_fallthru
    _
  %p15 = scmp.eq.s32.totalorder 0, 0
  // Predicated region
  $region14: #{transformer_forward.41} parent=0 // pred_check
    %p16 = pneg %p15
  $region15: #{transformer_forward.41} parent=0 // pred_check_branch
    %18 = sbr.rel (%p16) target = $region17
  $region16: #{transformer_forward.41} parent=0 // pred_region
    %vm19 = vcmask 785408
    %20 = vst.msk [vmem:[#allocation2] sm:$0xff] %vm19, 0.0
    %21 = vst.msk [vmem:[#allocation2 + $0x8] sm:$0xff] %vm19, 0.0
  $region17: #{transformer_forward.41} parent=0 // pred_fallthru
    _
  %v22 = vld [vmem:[#allocation2] sm:$0xff]
  %v23 = vld [vmem:[#allocation2 + $0x8] sm:$0xff]
  %v24 = vld [vmem:[%s0] sm:$0xff]
  %v25 = vld [vmem:[%s0 + $0x8] sm:$0xff]
  %v26 = vpack.c.bf16 %v25, %v24
  %v27 = vld [vmem:[%s1] sm:$0xff]
  %v28 = vld [vmem:[%s1 + $0x8] sm:$0xff]
  %v29 = vld [vmem:[%s1 + $0x10] sm:$0xff]
  %v30 = vld [vmem:[%s1 + $0x18] sm:$0xff]
  %v31 = vpack.c.bf16 %v28, %v27
  %v32 = vpack.c.bf16 %v30, %v29
  %vm33 = vcmask 261120
  %v35 = vsel %vm33, %v26, 0
  %37 = vmatpush.bf16.msra.mxu0 0
  %38 = vmatpush.bf16.msra.mxu0 0
  %39 = vmatpush.bf16.msra.mxu0 0
  %40 = vmatpush.bf16.msra.mxu0 0
  %41 = vmatpush.bf16.msra.mxu0 0
  %42 = vmatpush.bf16.msra.mxu0 0
  %43 = vmatpush.bf16.msra.mxu0 %v32
  %44 = vmatpush.bf16.msra.mxu0 %v31
  %45 = vmatmul.bf16.gmra.mxu0 %v35
  %v46 = vpop.f32.mrf.mxu0
  %v47 = vadd.f32 0.0, %v46
  %v48 = vpop.f32.mrf.mxu0
  %v49 = vadd.f32 0.0, %v48
  %50 = vdwg.mxu0
  %v51 = vadd.f32 %v22, %v47
  %v52 = vadd.f32 %v23, %v49
  %vm53 = vcmask 785408
  %54 = vst.msk [vmem:[#allocation2] sm:$0xff] %vm53, %v51
  %55 = vst.msk [vmem:[#allocation2 + $0x8] sm:$0xff] %vm53, %v52
  // Predicated region
  $region18: #{transformer_forward.41} parent=0 // pred_check
    %p56 = pneg %p15
  $region19: #{transformer_forward.41} parent=0 // pred_check_branch
    %58 = sbr.rel (%p56) target = $region21
  $region20: #{transformer_forward.41} parent=0 // pred_region
    %v59 = vld [vmem:[#allocation2] sm:$0xff]
    %v60 = vld [vmem:[#allocation2 + $0x8] sm:$0xff]
    %v61 = vld [vmem:[%s2] sm:$0x1]
    %v63 = vperm.slane %v61, 0
    %v65 = vadd.f32 %v59, %v63
    %v66 = vadd.f32 %v60, %v63
    %67 = vst.msk [vmem:[%s3] sm:$0xff] %vm53, %v65
    %68 = vst.msk [vmem:[%s3 + $0x8] sm:$0xff] %vm53, %v66
  $region21: #{transformer_forward.41} parent=0 // pred_fallthru
    _
  // Predicated region
  $region22: #{transformer_forward.41} parent=0 // pred_check
    _
  $region23: #{transformer_forward.41} parent=0 // pred_check_branch
    %70 = sbr.rel (0) target = $region25
  $region24: #{transformer_forward.41} parent=0 // pred_region
    _
  $region25: #{transformer_forward.41} parent=0 // pred_fallthru
    _
  // Predicated region
  $region26: #{transformer_forward.41} parent=0 // pred_check
    _
  $region27: #{transformer_forward.41} parent=0 // pred_check_branch
    %72 = sbr.rel (0) target = $region29
  $region28: #{transformer_forward.41} parent=0 // pred_region
    _
  $region29: #{transformer_forward.41} parent=0 // pred_fallthru
    _

// kernel: transformer_forward.42
$region0: #{transformer_forward.42}
  #allocation0 [shape = 'u32[]', space=smem, size = 0x4, offset = 0x4, fixed_abs, tag = 'smem constant byte address 0x4 - core index']
  #allocation1 [shape = 'u32[72,128]{1,0:T(1,128)}', space=vmem, size = 0x9000, scoped, tag = 'internal scratch']
  %s0 = inlined_call_operand.vmem [shape: f32[2,4,8,8], index: 0, kind: input, shape index: {}]
  %s1 = inlined_call_operand.vmem [shape: f32[2,4,8,8], index: 1, kind: input, shape index: {}]
  %s2 = inlined_call_operand.vmem [shape: f32[2,4,8,8], index: 2, kind: input, shape index: {}]
  %s3 = inlined_call_operand.vmem [shape: f32[8,8], index: 3, kind: input, shape index: {}]
  %s4 = inlined_call_operand.vmem [shape: f32[2,4,8,8], index: 4, kind: output, shape index: {}]
  %s5 = sld [smem:[#allocation0]]
  $region49: #{transformer_forward.42} parent=0
    _
  %s7 = ssub.s32 1, %s5
  %s8 = scalar_select 0, %s7, %s5
  loop: start=0, step=1, limit=4
  $region2: #{transformer_forward.42} parent=0 // loop_pre_header
    _
  $region3: #{transformer_forward.42} parent=0 // loop_header
    %s10 = sphi 0, %s14
    %p11 = scmp.ge.s32.totalorder %s10, 4
    %s20 = sphi 0, %s22
    %s23 = sphi 0, %s20
    %s24 = sphi 0, %s23
    %s40 = sphi 0, %s24
    %s46 = sphi 0, %s48
    %s49 = sphi 0, %s46
    %s50 = sphi 0, %s49
    %s66 = sphi 0, %s50
    %s72 = sphi 0, %s74
    %s75 = sphi 0, %s72
    %s76 = sphi 0, %s75
    %s92 = sphi 0, %s76
    %s96 = sphi 0, %s96
    %s98 = sphi 0, %s96
    %s99 = sphi 0, %s98
    %s113 = sphi 0, %s99
    %s119 = sphi 0, %s121
    %s122 = sphi 0, %s119
    %s123 = sphi 0, %s122
    %s139 = sphi 0, %s123
  $region4: #{transformer_forward.42} parent=0 // loop_header_branch
    %13 = sbr.rel (%p11) target = $region8
  $region5: #{transformer_forward.42} parent=0 // loop_body
    %s15 = ssub.s32 %s10, 1
    %s16 = ssub.s32 %s10, 2
    %s17 = sadd.s32 %s10, 1
    %s18 = ssub.s32 %s10, %s17
    %p19 = scmp.eq.s32.totalorder %s18, 0
    %s21 = sadd.s32 %s20, 1
    %s22 = scalar_select %p19, %s20, %s21
    %p25 = pneg %p19
    %p26 = scmp.eq.s32.totalorder %s10, 1
    %p27 = por %p25, %p26
    %p28 = scmp.ne.s32.totalorder %s20, %s23
    %p29 = scmp.eq.s32.totalorder %s10, 0
    %p30 = por %p28, %p29
    %p31 = scmp.ne.s32.totalorder %s20, %s23
    %p32 = scmp.eq.s32.totalorder %s15, 1
    %p33 = por %p31, %p32
    %p34 = scmp.ne.s32.totalorder %s23, %s24
    %p35 = scmp.eq.s32.totalorder %s15, 0
    %p36 = por %p34, %p35
    %p37 = scmp.ne.s32.totalorder %s23, %s24
    %p38 = scmp.eq.s32.totalorder %s16, 1
    %p39 = por %p37, %p38
    %p41 = scmp.ne.s32.totalorder %s24, %s40
    %p42 = scmp.eq.s32.totalorder %s16, 0
    %p43 = por %p41, %p42
    %s44 = ssub.s32 %s10, %s17
    %p45 = scmp.eq.s32.totalorder %s44, 0
    %s47 = sadd.s32 %s46, 1
    %s48 = scalar_select %p45, %s46, %s47
    %p51 = pneg %p45
    %p52 = scmp.eq.s32.totalorder %s10, 1
    %p53 = por %p51, %p52
    %p54 = scmp.ne.s32.totalorder %s46, %s49
    %p55 = scmp.eq.s32.totalorder %s10, 0
    %p56 = por %p54, %p55
    %p57 = scmp.ne.s32.totalorder %s46, %s49
    %p58 = scmp.eq.s32.totalorder %s15, 1
    %p59 = por %p57, %p58
    %p60 = scmp.ne.s32.totalorder %s49, %s50
    %p61 = scmp.eq.s32.totalorder %s15, 0
    %p62 = por %p60, %p61
    %p63 = scmp.ne.s32.totalorder %s49, %s50
    %p64 = scmp.eq.s32.totalorder %s16, 1
    %p65 = por %p63, %p64
    %p67 = scmp.ne.s32.totalorder %s50, %s66
    %p68 = scmp.eq.s32.totalorder %s16, 0
    %p69 = por %p67, %p68
    %s70 = ssub.s32 %s10, %s17
    %p71 = scmp.eq.s32.totalorder %s70, 0
    %s73 = sadd.s32 %s72, 1
    %s74 = scalar_select %p71, %s72, %s73
    %p77 = pneg %p71
    %p78 = scmp.eq.s32.totalorder %s10, 1
    %p79 = por %p77, %p78
    %p80 = scmp.ne.s32.totalorder %s72, %s75
    %p81 = scmp.eq.s32.totalorder %s10, 0
    %p82 = por %p80, %p81
    %p83 = scmp.ne.s32.totalorder %s72, %s75
    %p84 = scmp.eq.s32.totalorder %s15, 1
    %p85 = por %p83, %p84
    %p86 = scmp.ne.s32.totalorder %s75, %s76
    %p87 = scmp.eq.s32.totalorder %s15, 0
    %p88 = por %p86, %p87
    %p89 = scmp.ne.s32.totalorder %s75, %s76
    %p90 = scmp.eq.s32.totalorder %s16, 1
    %p91 = por %p89, %p90
    %p93 = scmp.ne.s32.totalorder %s76, %s92
    %p94 = scmp.eq.s32.totalorder %s16, 0
    %p95 = por %p93, %p94
    %s97 = sadd.s32 %s96, 1
    %p100 = scmp.eq.s32.totalorder %s10, 1
    %p101 = scmp.ne.s32.totalorder %s96, %s98
    %p102 = scmp.eq.s32.totalorder %s10, 0
    %p103 = por %p101, %p102
    %p104 = scmp.ne.s32.totalorder %s96, %s98
    %p105 = scmp.eq.s32.totalorder %s15, 1
    %p106 = por %p104, %p105
    %p107 = scmp.ne.s32.totalorder %s98, %s99
    %p108 = scmp.eq.s32.totalorder %s15, 0
    %p109 = por %p107, %p108
    %p110 = scmp.ne.s32.totalorder %s98, %s99
    %p111 = scmp.eq.s32.totalorder %s16, 1
    %p112 = por %p110, %p111
    %p114 = scmp.ne.s32.totalorder %s99, %s113
    %p115 = scmp.eq.s32.totalorder %s16, 0
    %p116 = por %p114, %p115
    %s117 = ssub.s32 %s10, %s17
    %p118 = scmp.eq.s32.totalorder %s117, 0
    %s120 = sadd.s32 %s119, 1
    %s121 = scalar_select %p118, %s119, %s120
    %p124 = pneg %p118
    %p125 = scmp.eq.s32.totalorder %s10, 1
    %p126 = por %p124, %p125
    %p127 = scmp.ne.s32.totalorder %s119, %s122
    %p128 = scmp.eq.s32.totalorder %s10, 0
    %p129 = por %p127, %p128
    %p130 = scmp.ne.s32.totalorder %s119, %s122
    %p131 = scmp.eq.s32.totalorder %s15, 1
    %p132 = por %p130, %p131
    %p133 = scmp.ne.s32.totalorder %s122, %s123
    %p134 = scmp.eq.s32.totalorder %s15, 0
    %p135 = por %p133, %p134
    %p136 = scmp.ne.s32.totalorder %s122, %s123
    %p137 = scmp.eq.s32.totalorder %s16, 1
    %p138 = por %p136, %p137
    %p140 = scmp.ne.s32.totalorder %s123, %s139
    %p141 = scmp.eq.s32.totalorder %s16, 0
    %p142 = por %p140, %p141
    %p143 = scmp.le.s32.totalorder 1, %s10
    %p144 = scmp.lt.s32.totalorder %s10, 3
    %p145 = pnand %p143, %p144
    %p146 = pneg %p145
    // Predicated region
    $region9: #{transformer_forward.42} parent=5 // pred_check
      _
    $region10: #{transformer_forward.42} parent=5 // pred_check_branch
      %148 = sbr.rel (%p145) target = $region12
    $region11: #{transformer_forward.42} parent=5 // pred_region
      %s149 = ssub.s32 %s10, 1
      // Predicated region
      $region13: #{transformer_forward.42} parent=11 // pred_check
        %p150 = pneg %p109
      $region14: #{transformer_forward.42} parent=11 // pred_check_branch
        %152 = sbr.rel (%p150) target = $region16
      $region15: #{transformer_forward.42} parent=11 // pred_region
        _
      $region16: #{transformer_forward.42} parent=11 // pred_fallthru
        _
    $region12: #{transformer_forward.42} parent=5 // pred_fallthru
      _
    %p153 = scmp.lt.s32.totalorder %s10, 2
    // Predicated region
    $region17: #{transformer_forward.42} parent=5 // pred_check
      %p154 = pneg %p153
    $region18: #{transformer_forward.42} parent=5 // pred_check_branch
      %156 = sbr.rel (%p154) target = $region20
    $region19: #{transformer_forward.42} parent=5 // pred_region
      // Predicated region
      $region21: #{transformer_forward.42} parent=19 // pred_check
        %p157 = pneg %p30
      $region22: #{transformer_forward.42} parent=19 // pred_check_branch
        %159 = sbr.rel (%p157) target = $region24
      $region23: #{transformer_forward.42} parent=19 // pred_region
        %p160 = scmp.lt.s32.totalorder %s10, 1
        %s161 = scalar_select %p160, %s10, 1
        %s162 = smul.addr %s161, 4
        %s163 = smul.addr %s162, 8
        %s164 = scalar_lea.vmem %s0, %s163
      $region24: #{transformer_forward.42} parent=19 // pred_fallthru
        _
      // Predicated region
      $region25: #{transformer_forward.42} parent=19 // pred_check
        %p165 = pneg %p56
      $region26: #{transformer_forward.42} parent=19 // pred_check_branch
        %167 = sbr.rel (%p165) target = $region28
      $region27: #{transformer_forward.42} parent=19 // pred_region
        %p168 = scmp.lt.s32.totalorder %s10, 1
        %s169 = scalar_select %p168, %s10, 1
        %s170 = smul.addr %s169, 4
        %s171 = smul.addr %s170, 8
        %s172 = scalar_lea.vmem %s1, %s171
      $region28: #{transformer_forward.42} parent=19 // pred_fallthru
        _
      // Predicated region
      $region29: #{transformer_forward.42} parent=19 // pred_check
        %p173 = pneg %p82
      $region30: #{transformer_forward.42} parent=19 // pred_check_branch
        %175 = sbr.rel (%p173) target = $region32
      $region31: #{transformer_forward.42} parent=19 // pred_region
        %p176 = scmp.lt.s32.totalorder %s10, 1
        %s177 = scalar_select %p176, %s10, 1
        %s178 = smul.addr %s177, 4
        %s179 = smul.addr %s178, 8
        %s180 = scalar_lea.vmem %s2, %s179
      $region32: #{transformer_forward.42} parent=19 // pred_fallthru
        _
    $region20: #{transformer_forward.42} parent=5 // pred_fallthru
      _
    %p181 = scmp.le.s32.totalorder 1, %s10
    %p182 = scmp.lt.s32.totalorder %s10, 3
    %p183 = pnand %p181, %p182
    %p184 = pneg %p183
    // Predicated region
    $region33: #{transformer_forward.42} parent=5 // pred_check
      _
    $region34: #{transformer_forward.42} parent=5 // pred_check_branch
      %186 = sbr.rel (%p183) target = $region36
    $region35: #{transformer_forward.42} parent=5 // pred_region
      %s187 = ssub.s32 %s10, 1
      %p188 = scmp.lt.s32.totalorder %s15, 1
      %s189 = scalar_select %p188, %s15, 1
      %s190 = smul.addr %s189, 4
      %s191 = smul.addr %s190, 8
      %s192 = scalar_lea.vmem %s0, %s191
      %p193 = pneg %p36
      %p194 = pneg %p33
      %p195 = scmp.lt.s32.totalorder %s15, 1
      %s196 = scalar_select %p195, %s15, 1
      %s197 = smul.addr %s196, 4
      %s198 = smul.addr %s197, 8
      %s199 = scalar_lea.vmem %s1, %s198
      %p200 = pneg %p62
      %p201 = pneg %p59
      %p202 = scmp.lt.s32.totalorder %s15, 1
      %s203 = scalar_select %p202, %s15, 1
      %s204 = smul.addr %s203, 4
      %s205 = smul.addr %s204, 8
      %s206 = scalar_lea.vmem %s2, %s205
      %p207 = pneg %p88
      %p208 = pneg %p85
      %p209 = pneg %p109
      %p210 = pneg %p106
      %p211 = pneg %p135
      %p212 = pneg %p132
      %p213 = scmp.lt.s32.totalorder %s15, 1
      %s214 = scalar_select %p213, %s15, 1
      %s215 = smul.addr %s214, 4
      %s216 = smul.addr %s215, 8
      %s217 = scalar_lea.vmem %s4, %s216
      %p218 = scmp.lt.s32.totalorder %s15, 1
      %s219 = scalar_select %p218, %s15, 1
      %s220 = smul.addr %s219, 4
      %s221 = smul.addr %s220, 8
      %s222 = scalar_lea.vmem %s0, %s221
      %p223 = scmp.lt.s32.totalorder %s15, 1
      %s224 = scalar_select %p223, %s15, 1
      %s225 = smul.addr %s224, 4
      %s226 = smul.addr %s225, 8
      %s227 = scalar_lea.vmem %s1, %s226
      %p228 = scmp.lt.s32.totalorder %s15, 1
      %s229 = scalar_select %p228, %s15, 1
      %s230 = smul.addr %s229, 4
      %s231 = smul.addr %s230, 8
      %s232 = scalar_lea.vmem %s2, %s231
      %p233 = scmp.lt.s32.totalorder %s15, 1
      %s234 = scalar_select %p233, %s15, 1
      %s235 = smul.addr %s234, 4
      %s236 = smul.addr %s235, 8
      %s237 = scalar_lea.vmem %s4, %s236
      %v239 = vld [vmem:[%s222] sm:$0xff]
      %v240 = vld [vmem:[%s222 + $0x8] sm:$0xff]
      %v241 = vld [vmem:[%s222 + $0x10] sm:$0xff]
      %v242 = vld [vmem:[%s222 + $0x18] sm:$0xff]
      %v243 = vpack.c.bf16 %v239, %v239
      %v244 = vpack.c.bf16 %v240, %v240
      %v245 = vpack.c.bf16 %v241, %v241
      %v246 = vpack.c.bf16 %v242, %v242
      %v247 = vld [vmem:[%s227] sm:$0xff]
      %v248 = vld [vmem:[%s227 + $0x8] sm:$0xff]
      %v249 = vld [vmem:[%s227 + $0x10] sm:$0xff]
      %v250 = vld [vmem:[%s227 + $0x18] sm:$0xff]
      %v251 = vpack.c.bf16 %v247, %v247
      %v252 = vpack.c.bf16 %v248, %v248
      %v253 = vpack.c.bf16 %v249, %v249
      %v254 = vpack.c.bf16 %v250, %v250
      %v255 = vld [vmem:[%s232] sm:$0xff]
      %v256 = vld [vmem:[%s232 + $0x8] sm:$0xff]
      %v257 = vld [vmem:[%s232 + $0x10] sm:$0xff]
      %v258 = vld [vmem:[%s232 + $0x18] sm:$0xff]
      %v259 = vpack.c.bf16 %v255, %v255
      %v260 = vpack.c.bf16 %v256, %v256
      %v261 = vpack.c.bf16 %v257, %v257
      %v262 = vpack.c.bf16 %v258, %v258
      %vm263 = vcmask 64512
      %v265 = vsel %vm263, %v243, 0
      %v268 = vsel %vm263, %v251, 0
      %270 = vmatpush.bf16.xpose.msra.mxu0 0
      %271 = vmatpush.bf16.xpose.msra.mxu0 0
      %272 = vmatpush.bf16.xpose.msra.mxu0 0
      %273 = vmatpush.bf16.xpose.msra.mxu0 0
      %274 = vmatpush.bf16.xpose.msra.mxu0 0
      %275 = vmatpush.bf16.xpose.msra.mxu0 0
      %276 = vmatpush.bf16.xpose.msra.mxu0 0
      %277 = vmatpush.bf16.xpose.msra.mxu0 %v268
      %278 = vmatmul.bf16.gmra.mxu0 %v265
      %v279 = vpop.f32.mrf.mxu0
      %v280 = vadd.f32 0.0, %v279
      %v281 = vpop.f32.mrf.mxu0
      %282 = vdwg.mxu0
      %v284 = vsel %vm263, %v244, 0
      %v287 = vsel %vm263, %v252, 0
      %289 = vmatpush.bf16.xpose.msra.mxu0 0
      %290 = vmatpush.bf16.xpose.msra.mxu0 0
      %291 = vmatpush.bf16.xpose.msra.mxu0 0
      %292 = vmatpush.bf16.xpose.msra.mxu0 0
      %293 = vmatpush.bf16.xpose.msra.mxu0 0
      %294 = vmatpush.bf16.xpose.msra.mxu0 0
      %295 = vmatpush.bf16.xpose.msra.mxu0 0
      %296 = vmatpush.bf16.xpose.msra.mxu0 %v287
      %297 = vmatmul.bf16.gmra.mxu0 %v284
      %v298 = vpop.f32.mrf.mxu0
      %v299 = vadd.f32 0.0, %v298
      %v300 = vpop.f32.mrf.mxu0
      %301 = vdwg.mxu0
      %v303 = vsel %vm263, %v245, 0
      %v306 = vsel %vm263, %v253, 0
      %308 = vmatpush.bf16.xpose.msra.mxu0 0
      %309 = vmatpush.bf16.xpose.msra.mxu0 0
      %310 = vmatpush.bf16.xpose.msra.mxu0 0
      %311 = vmatpush.bf16.xpose.msra.mxu0 0
      %312 = vmatpush.bf16.xpose.msra.mxu0 0
      %313 = vmatpush.bf16.xpose.msra.mxu0 0
      %314 = vmatpush.bf16.xpose.msra.mxu0 0
      %315 = vmatpush.bf16.xpose.msra.mxu0 %v306
      %316 = vmatmul.bf16.gmra.mxu0 %v303
      %v317 = vpop.f32.mrf.mxu0
      %v318 = vadd.f32 0.0, %v317
      %v319 = vpop.f32.mrf.mxu0
      %320 = vdwg.mxu0
      %v322 = vsel %vm263, %v246, 0
      %v325 = vsel %vm263, %v254, 0
      %327 = vmatpush.bf16.xpose.msra.mxu0 0
      %328 = vmatpush.bf16.xpose.msra.mxu0 0
      %329 = vmatpush.bf16.xpose.msra.mxu0 0
      %330 = vmatpush.bf16.xpose.msra.mxu0 0
      %331 = vmatpush.bf16.xpose.msra.mxu0 0
      %332 = vmatpush.bf16.xpose.msra.mxu0 0
      %333 = vmatpush.bf16.xpose.msra.mxu0 0
      %334 = vmatpush.bf16.xpose.msra.mxu0 %v325
      %335 = vmatmul.bf16.gmra.mxu0 %v322
      %v336 = vpop.f32.mrf.mxu0
      %v337 = vadd.f32 0.0, %v336
      %v338 = vpop.f32.mrf.mxu0
      %339 = vdwg.mxu0
      %v340 = vmul.f32 %v280, 0.35355338
      %v341 = vmul.f32 %v299, 0.35355338
      %v342 = vmul.f32 %v318, 0.35355338
      %v343 = vmul.f32 %v337, 0.35355338
      %v344 = vld [vmem:[%s3] sm:$0xff]
      %v345 = vadd.f32 %v340, %v344
      %v346 = vadd.f32 %v341, %v344
      %v347 = vadd.f32 %v342, %v344
      %v348 = vadd.f32 %v343, %v344
      %v349 = vsel %vm263, %v345, -inf
      %350 = vmax.xlane.f32.xlu0 %v349
      %v351 = vpop.xlane.xlu0 %350
      %v352 = vsel %vm263, %v346, -inf
      %353 = vmax.xlane.f32.xlu0 %v352
      %v354 = vpop.xlane.xlu0 %353
      %v355 = vsel %vm263, %v347, -inf
      %356 = vmax.xlane.f32.xlu0 %v355
      %v357 = vpop.xlane.xlu0 %356
      %v358 = vsel %vm263, %v348, -inf
      %359 = vmax.xlane.f32.xlu0 %v358
      %v360 = vpop.xlane.xlu0 %359
      %v361 = vsub.f32 %v345, %v351
      %v362 = vsub.f32 %v346, %v354
      %v363 = vsub.f32 %v347, %v357
      %v364 = vsub.f32 %v348, %v360
      %v365 = vmul.f32 %v361, 1.442695
      %v366 = vpow.pop %v365
      %v367 = vmul.f32 %v362, 1.442695
      %v368 = vpow.pop %v367
      %v369 = vmul.f32 %v363, 1.442695
      %v370 = vpow.pop %v369
      %v371 = vmul.f32 %v364, 1.442695
      %v372 = vpow.pop %v371
      %v373 = vsel %vm263, %v366, 0.0
      %374 = vadd.xlane.f32.xlu0 %v373
      %v375 = vpop.xlane.xlu0 %374
      %v376 = vsel %vm263, %v368, 0.0
      %377 = vadd.xlane.f32.xlu0 %v376
      %v378 = vpop.xlane.xlu0 %377
      %v379 = vsel %vm263, %v370, 0.0
      %380 = vadd.xlane.f32.xlu0 %v379
      %v381 = vpop.xlane.xlu0 %380
      %v382 = vsel %vm263, %v372, 0.0
      %383 = vadd.xlane.f32.xlu0 %v382
      %v384 = vpop.xlane.xlu0 %383
      %v385 = vrcp.pop %v375
      %v386 = vrcp.pop %v378
      %v387 = vrcp.pop %v381
      %v388 = vrcp.pop %v384
      %v389 = vmul.f32 %v366, %v385
      %v390 = vmul.f32 %v368, %v386
      %v391 = vmul.f32 %v370, %v387
      %v392 = vmul.f32 %v372, %v388
      %v393 = vpack.c.bf16 %v389, %v389
      %v394 = vpack.c.bf16 %v390, %v390
      %v395 = vpack.c.bf16 %v391, %v391
      %v396 = vpack.c.bf16 %v392, %v392
      %v398 = vsel %vm263, %v393, 0
      %vm400 = vcmask 1043456
      %v402 = vsel %vm400, %v259, 0
      %404 = vmatpush.bf16.msra.mxu0 0
      %405 = vmatpush.bf16.msra.mxu0 0
      %406 = vmatpush.bf16.msra.mxu0 0
      %407 = vmatpush.bf16.msra.mxu0 0
      %408 = vmatpush.bf16.msra.mxu0 0
      %409 = vmatpush.bf16.msra.mxu0 0
      %410 = vmatpush.bf16.msra.mxu0 0
      %411 = vmatpush.bf16.msra.mxu0 %v402
      %412 = vmatmul.bf16.gmra.mxu0 %v398
      %v413 = vpop.f32.mrf.mxu0
      %v414 = vadd.f32 0.0, %v413
      %v415 = vpop.f32.mrf.mxu0
      %416 = vdwg.mxu0
      %v418 = vsel %vm263, %v394, 0
      %v421 = vsel %vm400, %v260, 0
      %423 = vmatpush.bf16.msra.mxu0 0
      %424 = vmatpush.bf16.msra.mxu0 0
      %425 = vmatpush.bf16.msra.mxu0 0
      %426 = vmatpush.bf16.msra.mxu0 0
      %427 = vmatpush.bf16.msra.mxu0 0
      %428 = vmatpush.bf16.msra.mxu0 0
      %429 = vmatpush.bf16.msra.mxu0 0
      %430 = vmatpush.bf16.msra.mxu0 %v421
      %431 = vmatmul.bf16.gmra.mxu0 %v418
      %v432 = vpop.f32.mrf.mxu0
      %v433 = vadd.f32 0.0, %v432
      %v434 = vpop.f32.mrf.mxu0
      %435 = vdwg.mxu0
      %v437 = vsel %vm263, %v395, 0
      %v440 = vsel %vm400, %v261, 0
      %442 = vmatpush.bf16.msra.mxu0 0
      %443 = vmatpush.bf16.msra.mxu0 0
      %444 = vmatpush.bf16.msra.mxu0 0
      %445 = vmatpush.bf16.msra.mxu0 0
      %446 = vmatpush.bf16.msra.mxu0 0
      %447 = vmatpush.bf16.msra.mxu0 0
      %448 = vmatpush.bf16.msra.mxu0 0
      %449 = vmatpush.bf16.msra.mxu0 %v440
      %450 = vmatmul.bf16.gmra.mxu0 %v437
      %v451 = vpop.f32.mrf.mxu0
      %v452 = vadd.f32 0.0, %v451
      %v453 = vpop.f32.mrf.mxu0
      %454 = vdwg.mxu0
      %v456 = vsel %vm263, %v396, 0
      %v459 = vsel %vm400, %v262, 0
      %461 = vmatpush.bf16.msra.mxu0 0
      %462 = vmatpush.bf16.msra.mxu0 0
      %463 = vmatpush.bf16.msra.mxu0 0
      %464 = vmatpush.bf16.msra.mxu0 0
      %465 = vmatpush.bf16.msra.mxu0 0
      %466 = vmatpush.bf16.msra.mxu0 0
      %467 = vmatpush.bf16.msra.mxu0 0
      %468 = vmatpush.bf16.msra.mxu0 %v459
      %469 = vmatmul.bf16.gmra.mxu0 %v456
      %v470 = vpop.f32.mrf.mxu0
      %v471 = vadd.f32 0.0, %v470
      %v472 = vpop.f32.mrf.mxu0
      %473 = vdwg.mxu0
      %474 = vst.msk [vmem:[%s237] sm:$0xff] %vm263, %v414
      %475 = vst.msk [vmem:[%s237 + $0x8] sm:$0xff] %vm263, %v433
      %476 = vst.msk [vmem:[%s237 + $0x10] sm:$0xff] %vm263, %v452
      %477 = vst.msk [vmem:[%s237 + $0x18] sm:$0xff] %vm263, %v471
      %p478 = scmp.lt.s32.totalorder %s15, 1
      %s479 = scalar_select %p478, %s15, 1
      %s480 = smul.addr %s479, 4
      %s481 = smul.addr %s480, 8
      %s482 = scalar_lea.vmem %s4, %s481
      // Predicated region
      $region37: #{transformer_forward.42} parent=35 // pred_check
        %p483 = pneg %p132
      $region38: #{transformer_forward.42} parent=35 // pred_check_branch
        %485 = sbr.rel (%p483) target = $region40
      $region39: #{transformer_forward.42} parent=35 // pred_region
        _
      $region40: #{transformer_forward.42} parent=35 // pred_fallthru
        _
    $region36: #{transformer_forward.42} parent=5 // pred_fallthru
      _
    %p486 = scmp.le.s32.totalorder 2, %s10
    // Predicated region
    $region41: #{transformer_forward.42} parent=5 // pred_check
      %p487 = pneg %p486
    $region42: #{transformer_forward.42} parent=5 // pred_check_branch
      %489 = sbr.rel (%p487) target = $region44
    $region43: #{transformer_forward.42} parent=5 // pred_region
      %s490 = ssub.s32 %s10, 2
      // Predicated region
      $region45: #{transformer_forward.42} parent=43 // pred_check
        %p491 = pneg %p138
      $region46: #{transformer_forward.42} parent=43 // pred_check_branch
        %493 = sbr.rel (%p491) target = $region48
      $region47: #{transformer_forward.42} parent=43 // pred_region
        %p494 = scmp.lt.s32.totalorder %s16, 1
        %s495 = scalar_select %p494, %s16, 1
        %s496 = smul.addr %s495, 4
        %s497 = smul.addr %s496, 8
        %s498 = scalar_lea.vmem %s4, %s497
      $region48: #{transformer_forward.42} parent=43 // pred_fallthru
        _
    $region44: #{transformer_forward.42} parent=5 // pred_fallthru
      _
  $region6: #{transformer_forward.42} parent=0 // loop_footer
    %s14 = sadd.s32 1, %s10
  $region7: #{transformer_forward.42} parent=0 // loop_footer_branch
    %9 = sbr.rel target = $region3
  $region8: #{transformer_forward.42} parent=0 // loop_exit
    _

// kernel: transformer_forward.44
$region0: #{transformer_forward.44}
  #allocation0 [shape = 'u32[]', space=smem, size = 0x4, offset = 0x4, fixed_abs, tag = 'smem constant byte address 0x4 - core index']
  #allocation1 [shape = 'u32[72,128]{1,0:T(1,128)}', space=vmem, size = 0x9000, scoped, tag = 'internal scratch']
  #allocation2 [shape = 'f32[16,32]{1,0:T(8,128)}', space=vmem, size = 0x2000, scoped, tag = 'scratch operand']
  %s0 = inlined_call_operand.vmem [shape: f32[16,32], index: 0, kind: input, shape index: {}]
  %s1 = inlined_call_operand.vmem [shape: f32[32,32], index: 1, kind: input, shape index: {}]
  %s2 = inlined_call_operand.vmem [shape: f32[1,32], index: 2, kind: input, shape index: {}]
  %s3 = inlined_call_operand.vmem [shape: f32[16,32], index: 3, kind: output, shape index: {}]
  %s4 = sld [smem:[#allocation0]]
  $region30: #{transformer_forward.44} parent=0
    _
  %s6 = ssub.s32 1, %s4
  %s7 = scalar_select 0, %s6, %s4
  // Predicated region
  $region2: #{transformer_forward.44} parent=0 // pred_check
    _
  $region3: #{transformer_forward.44} parent=0 // pred_check_branch
    %9 = sbr.rel (0) target = $region5
  $region4: #{transformer_forward.44} parent=0 // pred_region
    _
  $region5: #{transformer_forward.44} parent=0 // pred_fallthru
    _
  // Predicated region
  $region6: #{transformer_forward.44} parent=0 // pred_check
    _
  $region7: #{transformer_forward.44} parent=0 // pred_check_branch
    %11 = sbr.rel (0) target = $region9
  $region8: #{transformer_forward.44} parent=0 // pred_region
    _
  $region9: #{transformer_forward.44} parent=0 // pred_fallthru
    _
  // Predicated region
  $region10: #{transformer_forward.44} parent=0 // pred_check
    _
  $region11: #{transformer_forward.44} parent=0 // pred_check_branch
    %13 = sbr.rel (0) target = $region13
  $region12: #{transformer_forward.44} parent=0 // pred_region
    _
  $region13: #{transformer_forward.44} parent=0 // pred_fallthru
    _
  %p15 = scmp.eq.s32.totalorder 0, 0
  // Predicated region
  $region14: #{transformer_forward.44} parent=0 // pred_check
    %p16 = pneg %p15
  $region15: #{transformer_forward.44} parent=0 // pred_check_branch
    %18 = sbr.rel (%p16) target = $region17
  $region16: #{transformer_forward.44} parent=0 // pred_region
    %vm19 = vcmask 261120
    %20 = vst.msk [vmem:[#allocation2] sm:$0xff] %vm19, 0.0
    %21 = vst.msk [vmem:[#allocation2 + $0x8] sm:$0xff] %vm19, 0.0
  $region17: #{transformer_forward.44} parent=0 // pred_fallthru
    _
  %v22 = vld [vmem:[#allocation2] sm:$0xff]
  %v23 = vld [vmem:[#allocation2 + $0x8] sm:$0xff]
  %v24 = vld [vmem:[%s0] sm:$0xff]
  %v25 = vld [vmem:[%s0 + $0x8] sm:$0xff]
  %v26 = vpack.c.bf16 %v25, %v24
  %v27 = vld [vmem:[%s1] sm:$0xff]
  %v28 = vld [vmem:[%s1 + $0x8] sm:$0xff]
  %v29 = vld [vmem:[%s1 + $0x10] sm:$0xff]
  %v30 = vld [vmem:[%s1 + $0x18] sm:$0xff]
  %v31 = vpack.c.bf16 %v28, %v27
  %v32 = vpack.c.bf16 %v30, %v29
  %vm33 = vcmask 261120
  %v35 = vsel %vm33, %v26, 0
  %37 = vmatpush.bf16.msra.mxu0 0
  %38 = vmatpush.bf16.msra.mxu0 0
  %39 = vmatpush.bf16.msra.mxu0 0
  %40 = vmatpush.bf16.msra.mxu0 0
  %41 = vmatpush.bf16.msra.mxu0 0
  %42 = vmatpush.bf16.msra.mxu0 0
  %43 = vmatpush.bf16.msra.mxu0 %v32
  %44 = vmatpush.bf16.msra.mxu0 %v31
  %45 = vmatmul.bf16.gmra.mxu0 %v35
  %v46 = vpop.f32.mrf.mxu0
  %v47 = vadd.f32 0.0, %v46
  %v48 = vpop.f32.mrf.mxu0
  %v49 = vadd.f32 0.0, %v48
  %50 = vdwg.mxu0
  %v51 = vadd.f32 %v22, %v47
  %v52 = vadd.f32 %v23, %v49
  %53 = vst.msk [vmem:[#allocation2] sm:$0xff] %vm33, %v51
  %54 = vst.msk [vmem:[#allocation2 + $0x8] sm:$0xff] %vm33, %v52
  // Predicated region
  $region18: #{transformer_forward.44} parent=0 // pred_check
    %p55 = pneg %p15
  $region19: #{transformer_forward.44} parent=0 // pred_check_branch
    %57 = sbr.rel (%p55) target = $region21
  $region20: #{transformer_forward.44} parent=0 // pred_region
    %v58 = vld [vmem:[#allocation2] sm:$0xff]
    %v59 = vld [vmem:[#allocation2 + $0x8] sm:$0xff]
    %v60 = vld [vmem:[%s2] sm:$0x1]
    %v62 = vperm.slane %v60, 0
    %v64 = vadd.f32 %v58, %v62
    %v65 = vadd.f32 %v59, %v62
    %66 = vst.msk [vmem:[%s3] sm:$0xff] %vm33, %v64
    %67 = vst.msk [vmem:[%s3 + $0x8] sm:$0xff] %vm33, %v65
  $region21: #{transformer_forward.44} parent=0 // pred_fallthru
    _
  // Predicated region
  $region22: #{transformer_forward.44} parent=0 // pred_check
    _
  $region23: #{transformer_forward.44} parent=0 // pred_check_branch
    %69 = sbr.rel (0) target = $region25
  $region24: #{transformer_forward.44} parent=0 // pred_region
    _
  $region25: #{transformer_forward.44} parent=0 // pred_fallthru
    _
  // Predicated region
  $region26: #{transformer_forward.44} parent=0 // pred_check
    _
  $region27: #{transformer_forward.44} parent=0 // pred_check_branch
    %71 = sbr.rel (0) target = $region29
  $region28: #{transformer_forward.44} parent=0 // pred_region
    _
  $region29: #{transformer_forward.44} parent=0 // pred_fallthru
    _

// kernel: transformer_forward.43
$region0: #{transformer_forward.43}
  #allocation0 [shape = 'u32[]', space=smem, size = 0x4, offset = 0x4, fixed_abs, tag = 'smem constant byte address 0x4 - core index']
  #allocation1 [shape = 'u32[72,128]{1,0:T(1,128)}', space=vmem, size = 0x9000, scoped, tag = 'internal scratch']
  #allocation2 [shape = 'f32[16,32]{1,0:T(8,128)}', space=vmem, size = 0x2000, scoped, tag = 'scratch operand']
  %s0 = inlined_call_operand.vmem [shape: f32[16,32], index: 0, kind: input, shape index: {}]
  %s1 = inlined_call_operand.vmem [shape: f32[32,32], index: 1, kind: input, shape index: {}]
  %s2 = inlined_call_operand.vmem [shape: f32[1,32], index: 2, kind: input, shape index: {}]
  %s3 = inlined_call_operand.vmem [shape: f32[16,32], index: 3, kind: input, shape index: {}]
  %s4 = inlined_call_operand.vmem [shape: f32[1,32], index: 4, kind: input, shape index: {}]
  %s5 = inlined_call_operand.vmem [shape: f32[1,32], index: 5, kind: input, shape index: {}]
  %s6 = inlined_call_operand.vmem [shape: f32[16,32], index: 6, kind: output, shape index: {}]
  %s7 = sld [smem:[#allocation0]]
  $region42: #{transformer_forward.43} parent=0
    _
  %s9 = ssub.s32 1, %s7
  %s10 = scalar_select 0, %s9, %s7
  // Predicated region
  $region2: #{transformer_forward.43} parent=0 // pred_check
    _
  $region3: #{transformer_forward.43} parent=0 // pred_check_branch
    %12 = sbr.rel (0) target = $region5
  $region4: #{transformer_forward.43} parent=0 // pred_region
    _
  $region5: #{transformer_forward.43} parent=0 // pred_fallthru
    _
  // Predicated region
  $region6: #{transformer_forward.43} parent=0 // pred_check
    _
  $region7: #{transformer_forward.43} parent=0 // pred_check_branch
    %14 = sbr.rel (0) target = $region9
  $region8: #{transformer_forward.43} parent=0 // pred_region
    _
  $region9: #{transformer_forward.43} parent=0 // pred_fallthru
    _
  // Predicated region
  $region10: #{transformer_forward.43} parent=0 // pred_check
    _
  $region11: #{transformer_forward.43} parent=0 // pred_check_branch
    %16 = sbr.rel (0) target = $region13
  $region12: #{transformer_forward.43} parent=0 // pred_region
    _
  $region13: #{transformer_forward.43} parent=0 // pred_fallthru
    _
  // Predicated region
  $region14: #{transformer_forward.43} parent=0 // pred_check
    _
  $region15: #{transformer_forward.43} parent=0 // pred_check_branch
    %18 = sbr.rel (0) target = $region17
  $region16: #{transformer_forward.43} parent=0 // pred_region
    _
  $region17: #{transformer_forward.43} parent=0 // pred_fallthru
    _
  // Predicated region
  $region18: #{transformer_forward.43} parent=0 // pred_check
    _
  $region19: #{transformer_forward.43} parent=0 // pred_check_branch
    %20 = sbr.rel (0) target = $region21
  $region20: #{transformer_forward.43} parent=0 // pred_region
    _
  $region21: #{transformer_forward.43} parent=0 // pred_fallthru
    _
  // Predicated region
  $region22: #{transformer_forward.43} parent=0 // pred_check
    _
  $region23: #{transformer_forward.43} parent=0 // pred_check_branch
    %22 = sbr.rel (0) target = $region25
  $region24: #{transformer_forward.43} parent=0 // pred_region
    _
  $region25: #{transformer_forward.43} parent=0 // pred_fallthru
    _
  %p24 = scmp.eq.s32.totalorder 0, 0
  // Predicated region
  $region26: #{transformer_forward.43} parent=0 // pred_check
    %p25 = pneg %p24
  $region27: #{transformer_forward.43} parent=0 // pred_check_branch
    %27 = sbr.rel (%p25) target = $region29
  $region28: #{transformer_forward.43} parent=0 // pred_region
    %vm28 = vcmask 261120
    %29 = vst.msk [vmem:[#allocation2] sm:$0xff] %vm28, 0.0
    %30 = vst.msk [vmem:[#allocation2 + $0x8] sm:$0xff] %vm28, 0.0
  $region29: #{transformer_forward.43} parent=0 // pred_fallthru
    _
  %v31 = vld [vmem:[#allocation2] sm:$0xff]
  %v32 = vld [vmem:[#allocation2 + $0x8] sm:$0xff]
  %v33 = vld [vmem:[%s0] sm:$0xff]
  %v34 = vld [vmem:[%s0 + $0x8] sm:$0xff]
  %v35 = vpack.c.bf16 %v34, %v33
  %v36 = vld [vmem:[%s1] sm:$0xff]
  %v37 = vld [vmem:[%s1 + $0x8] sm:$0xff]
  %v38 = vld [vmem:[%s1 + $0x10] sm:$0xff]
  %v39 = vld [vmem:[%s1 + $0x18] sm:$0xff]
  %v40 = vpack.c.bf16 %v37, %v36
  %v41 = vpack.c.bf16 %v39, %v38
  %vm42 = vcmask 261120
  %v44 = vsel %vm42, %v35, 0
  %46 = vmatpush.bf16.msra.mxu0 0
  %47 = vmatpush.bf16.msra.mxu0 0
  %48 = vmatpush.bf16.msra.mxu0 0
  %49 = vmatpush.bf16.msra.mxu0 0
  %50 = vmatpush.bf16.msra.mxu0 0
  %51 = vmatpush.bf16.msra.mxu0 0
  %52 = vmatpush.bf16.msra.mxu0 %v41
  %53 = vmatpush.bf16.msra.mxu0 %v40
  %54 = vmatmul.bf16.gmra.mxu0 %v44
  %v55 = vpop.f32.mrf.mxu0
  %v56 = vadd.f32 0.0, %v55
  %v57 = vpop.f32.mrf.mxu0
  %v58 = vadd.f32 0.0, %v57
  %59 = vdwg.mxu0
  %v60 = vadd.f32 %v31, %v56
  %v61 = vadd.f32 %v32, %v58
  %62 = vst.msk [vmem:[#allocation2] sm:$0xff] %vm42, %v60
  %63 = vst.msk [vmem:[#allocation2 + $0x8] sm:$0xff] %vm42, %v61
  // Predicated region
  $region30: #{transformer_forward.43} parent=0 // pred_check
    %p64 = pneg %p24
  $region31: #{transformer_forward.43} parent=0 // pred_check_branch
    %66 = sbr.rel (%p64) target = $region33
  $region32: #{transformer_forward.43} parent=0 // pred_region
    %v67 = vld [vmem:[#allocation2] sm:$0xff]
    %v68 = vld [vmem:[#allocation2 + $0x8] sm:$0xff]
    %v69 = vld [vmem:[%s2] sm:$0x1]
    %v71 = vperm.slane %v69, 0
    %v73 = vadd.f32 %v67, %v71
    %v74 = vadd.f32 %v68, %v71
    %v75 = vld [vmem:[%s3] sm:$0xff]
    %v76 = vld [vmem:[%s3 + $0x8] sm:$0xff]
    %v77 = vadd.f32 %v73, %v75
    %v78 = vadd.f32 %v74, %v76
    %v79 = vsel %vm42, %v77, 0.0
    %80 = vadd.xlane.f32.xlu0 %v79
    %v81 = vpop.xlane.xlu0 %80
    %v82 = vsel %vm42, %v78, 0.0
    %83 = vadd.xlane.f32.xlu0 %v82
    %v84 = vpop.xlane.xlu0 %83
    %v85 = vrcp.pop 32.0
    %v86 = vmul.f32 32.0, %v85
    %v87 = vsub.f32 1.0, %v86
    %v88 = vmul.f32 %v85, %v87
    %v89 = vadd.f32 %v85, %v88
    %vm90 = vweird.f32 %v85
    %v91 = vsel %vm90, %v85, %v89
    %v92 = vmul.f32 %v81, %v91
    %v93 = vmul.f32 %v84, %v91
    %v94 = vsub.f32 %v77, %v92
    %v95 = vsub.f32 %v78, %v93
    %v96 = vmul.f32 %v94, %v94
    %v97 = vmul.f32 %v95, %v95
    %v98 = vsel %vm42, %v96, 0.0
    %99 = vadd.xlane.f32.xlu0 %v98
    %v100 = vpop.xlane.xlu0 %99
    %v101 = vsel %vm42, %v97, 0.0
    %102 = vadd.xlane.f32.xlu0 %v101
    %v103 = vpop.xlane.xlu0 %102
    %v104 = vmul.f32 %v100, %v91
    %v105 = vmul.f32 %v103, %v91
    %v106 = vadd.f32 %v104, 1e-05
    %v107 = vadd.f32 %v105, 1e-05
    %v108 = vrsqrt.pop %v106
    %v109 = vmul.f32 %v108, %v106
    %v110 = vmul.f32 %v109, %v108
    %v111 = vmul.f32 0.5, %v110
    %v112 = vsub.f32 1.5, %v111
    %v113 = vmul.f32 %v108, %v112
    %vm114 = vweird.f32 %v106
    %vm115 = vweird.f32 %v108
    %vm116 = vmor %vm114, %vm115
    %v117 = vsel %vm116, %v108, %v113
    %v118 = vrsqrt.pop %v107
    %v119 = vmul.f32 %v118, %v107
    %v120 = vmul.f32 %v119, %v118
    %v121 = vmul.f32 0.5, %v120
    %v122 = vsub.f32 1.5, %v121
    %v123 = vmul.f32 %v118, %v122
    %vm124 = vweird.f32 %v107
    %vm125 = vweird.f32 %v118
    %vm126 = vmor %vm124, %vm125
    %v127 = vsel %vm126, %v118, %v123
    %v128 = vmul.f32 %v94, %v117
    %v129 = vmul.f32 %v95, %v127
    %v130 = vld [vmem:[%s4] sm:$0x1]
    %v132 = vperm.slane %v130, 0
    %v134 = vmul.f32 %v128, %v132
    %v135 = vmul.f32 %v129, %v132
    %v136 = vld [vmem:[%s5] sm:$0x1]
    %v138 = vperm.slane %v136, 0
    %v140 = vadd.f32 %v134, %v138
    %v141 = vadd.f32 %v135, %v138
    %142 = vst.msk [vmem:[%s6] sm:$0xff] %vm42, %v140
    %143 = vst.msk [vmem:[%s6 + $0x8] sm:$0xff] %vm42, %v141
  $region33: #{transformer_forward.43} parent=0 // pred_fallthru
    _
  // Predicated region
  $region34: #{transformer_forward.43} parent=0 // pred_check
    _
  $region35: #{transformer_forward.43} parent=0 // pred_check_branch
    %145 = sbr.rel (0) target = $region37
  $region36: #{transformer_forward.43} parent=0 // pred_region
    _
  $region37: #{transformer_forward.43} parent=0 // pred_fallthru
    _
  // Predicated region
  $region38: #{transformer_forward.43} parent=0 // pred_check
    _
  $region39: #{transformer_forward.43} parent=0 // pred_check_branch
    %147 = sbr.rel (0) target = $region41
  $region40: #{transformer_forward.43} parent=0 // pred_region
    _
  $region41: #{transformer_forward.43} parent=0 // pred_fallthru
    _

// kernel: transformer_forward.30
$region0: #{transformer_forward.30}
  #allocation0 [shape = 'u32[]', space=smem, size = 0x4, offset = 0x4, fixed_abs, tag = 'smem constant byte address 0x4 - core index']
  #allocation1 [shape = 'u32[72,128]{1,0:T(1,128)}', space=vmem, size = 0x9000, scoped, tag = 'internal scratch']
  %s0 = inlined_call_operand.vmem [shape: f32[8,2,32], index: 0, kind: input, shape index: {}]
  %s1 = inlined_call_operand.vmem [shape: f32[8,1,32], index: 1, kind: input, shape index: {}]
  %s2 = inlined_call_operand.vmem [shape: f32[8,2,32], index: 2, kind: output, shape index: {}]
  %s3 = sld [smem:[#allocation0]]
  $region18: #{transformer_forward.30} parent=0
    _
  %s5 = ssub.s32 1, %s3
  %s6 = scalar_select 0, %s5, %s3
  // Predicated region
  $region2: #{transformer_forward.30} parent=0 // pred_check
    _
  $region3: #{transformer_forward.30} parent=0 // pred_check_branch
    %8 = sbr.rel (0) target = $region5
  $region4: #{transformer_forward.30} parent=0 // pred_region
    _
  $region5: #{transformer_forward.30} parent=0 // pred_fallthru
    _
  // Predicated region
  $region6: #{transformer_forward.30} parent=0 // pred_check
    _
  $region7: #{transformer_forward.30} parent=0 // pred_check_branch
    %10 = sbr.rel (0) target = $region9
  $region8: #{transformer_forward.30} parent=0 // pred_region
    _
  $region9: #{transformer_forward.30} parent=0 // pred_fallthru
    _
  %v11 = vld [vmem:[%s0] sm:$0x3]
  %v12 = vld [vmem:[%s0 + $0x2] sm:$0x3]
  %v13 = vld [vmem:[%s0 + $0x4] sm:$0x3]
  %v14 = vld [vmem:[%s0 + $0x6] sm:$0x3]
  %v15 = vld [vmem:[%s0 + $0x8] sm:$0x3]
  %v16 = vld [vmem:[%s0 + $0xa] sm:$0x3]
  %v17 = vld [vmem:[%s0 + $0xc] sm:$0x3]
  %v18 = vld [vmem:[%s0 + $0xe] sm:$0x3]
  %v19 = vmul.f32 %v11, 5.656854
  %v20 = vmul.f32 %v12, 5.656854
  %v21 = vmul.f32 %v13, 5.656854
  %v22 = vmul.f32 %v14, 5.656854
  %v23 = vmul.f32 %v15, 5.656854
  %v24 = vmul.f32 %v16, 5.656854
  %v25 = vmul.f32 %v17, 5.656854
  %v26 = vmul.f32 %v18, 5.656854
  %v27 = vld [vmem:[%s1] sm:$0x1]
  %v28 = vld [vmem:[%s1 + $0x1] sm:$0x1]
  %v29 = vld [vmem:[%s1 + $0x2] sm:$0x1]
  %v30 = vld [vmem:[%s1 + $0x3] sm:$0x1]
  %v31 = vld [vmem:[%s1 + $0x4] sm:$0x1]
  %v32 = vld [vmem:[%s1 + $0x5] sm:$0x1]
  %v33 = vld [vmem:[%s1 + $0x6] sm:$0x1]
  %v34 = vld [vmem:[%s1 + $0x7] sm:$0x1]
  %v43 = vperm.slane %v27, 0
  %v44 = vperm.slane %v28, 0
  %v45 = vperm.slane %v29, 0
  %v46 = vperm.slane %v30, 0
  %v47 = vperm.slane %v31, 0
  %v48 = vperm.slane %v32, 0
  %v49 = vperm.slane %v33, 0
  %v50 = vperm.slane %v34, 0
  %v59 = vadd.f32 %v19, %v43
  %v60 = vadd.f32 %v20, %v44
  %v61 = vadd.f32 %v21, %v45
  %v62 = vadd.f32 %v22, %v46
  %v63 = vadd.f32 %v23, %v47
  %v64 = vadd.f32 %v24, %v48
  %v65 = vadd.f32 %v25, %v49
  %v66 = vadd.f32 %v26, %v50
  %vm67 = vcmask 254976
  %68 = vst.msk [vmem:[%s2] sm:$0x3] %vm67, %v59
  %69 = vst.msk [vmem:[%s2 + $0x2] sm:$0x3] %vm67, %v60
  %70 = vst.msk [vmem:[%s2 + $0x4] sm:$0x3] %vm67, %v61
  %71 = vst.msk [vmem:[%s2 + $0x6] sm:$0x3] %vm67, %v62
  %72 = vst.msk [vmem:[%s2 + $0x8] sm:$0x3] %vm67, %v63
  %73 = vst.msk [vmem:[%s2 + $0xa] sm:$0x3] %vm67, %v64
  %74 = vst.msk [vmem:[%s2 + $0xc] sm:$0x3] %vm67, %v65
  %75 = vst.msk [vmem:[%s2 + $0xe] sm:$0x3] %vm67, %v66
  // Predicated region
  $region10: #{transformer_forward.30} parent=0 // pred_check
    _
  $region11: #{transformer_forward.30} parent=0 // pred_check_branch
    %77 = sbr.rel (0) target = $region13
  $region12: #{transformer_forward.30} parent=0 // pred_region
    _
  $region13: #{transformer_forward.30} parent=0 // pred_fallthru
    _
  // Predicated region
  $region14: #{transformer_forward.30} parent=0 // pred_check
    _
  $region15: #{transformer_forward.30} parent=0 // pred_check_branch
    %79 = sbr.rel (0) target = $region17
  $region16: #{transformer_forward.30} parent=0 // pred_region
    _
  $region17: #{transformer_forward.30} parent=0 // pred_fallthru
    _

// kernel: transformer_forward.34
$region0: #{transformer_forward.34}
  #allocation0 [shape = 'u32[]', space=smem, size = 0x4, offset = 0x4, fixed_abs, tag = 'smem constant byte address 0x4 - core index']
  #allocation1 [shape = 'u32[72,128]{1,0:T(1,128)}', space=vmem, size = 0x9000, scoped, tag = 'internal scratch']
  #allocation2 [shape = 'f32[16,64]{1,0:T(8,128)}', space=vmem, size = 0x2000, scoped, tag = 'scratch operand']
  %s0 = inlined_call_operand.vmem [shape: f32[16,32], index: 0, kind: input, shape index: {}]
  %s1 = inlined_call_operand.vmem [shape: f32[32,64], index: 1, kind: input, shape index: {}]
  %s2 = inlined_call_operand.vmem [shape: f32[1,64], index: 2, kind: input, shape index: {}]
  %s3 = inlined_call_operand.vmem [shape: f32[16,64], index: 3, kind: output, shape index: {}]
  %s4 = sld [smem:[#allocation0]]
  $region30: #{transformer_forward.34} parent=0
    _
  %s6 = ssub.s32 1, %s4
  %s7 = scalar_select 0, %s6, %s4
  // Predicated region
  $region2: #{transformer_forward.34} parent=0 // pred_check
    _
  $region3: #{transformer_forward.34} parent=0 // pred_check_branch
    %9 = sbr.rel (0) target = $region5
  $region4: #{transformer_forward.34} parent=0 // pred_region
    _
  $region5: #{transformer_forward.34} parent=0 // pred_fallthru
    _
  // Predicated region
  $region6: #{transformer_forward.34} parent=0 // pred_check
    _
  $region7: #{transformer_forward.34} parent=0 // pred_check_branch
    %11 = sbr.rel (0) target = $region9
  $region8: #{transformer_forward.34} parent=0 // pred_region
    _
  $region9: #{transformer_forward.34} parent=0 // pred_fallthru
    _
  // Predicated region
  $region10: #{transformer_forward.34} parent=0 // pred_check
    _
  $region11: #{transformer_forward.34} parent=0 // pred_check_branch
    %13 = sbr.rel (0) target = $region13
  $region12: #{transformer_forward.34} parent=0 // pred_region
    _
  $region13: #{transformer_forward.34} parent=0 // pred_fallthru
    _
  %p15 = scmp.eq.s32.totalorder 0, 0
  // Predicated region
  $region14: #{transformer_forward.34} parent=0 // pred_check
    %p16 = pneg %p15
  $region15: #{transformer_forward.34} parent=0 // pred_check_branch
    %18 = sbr.rel (%p16) target = $region17
  $region16: #{transformer_forward.34} parent=0 // pred_region
    %vm19 = vcmask 523264
    %20 = vst.msk [vmem:[#allocation2] sm:$0xff] %vm19, 0.0
    %21 = vst.msk [vmem:[#allocation2 + $0x8] sm:$0xff] %vm19, 0.0
  $region17: #{transformer_forward.34} parent=0 // pred_fallthru
    _
  %v22 = vld [vmem:[#allocation2] sm:$0xff]
  %v23 = vld [vmem:[#allocation2 + $0x8] sm:$0xff]
  %v24 = vld [vmem:[%s0] sm:$0xff]
  %v25 = vld [vmem:[%s0 + $0x8] sm:$0xff]
  %v26 = vpack.c.bf16 %v25, %v24
  %v27 = vld [vmem:[%s1] sm:$0xff]
  %v28 = vld [vmem:[%s1 + $0x8] sm:$0xff]
  %v29 = vld [vmem:[%s1 + $0x10] sm:$0xff]
  %v30 = vld [vmem:[%s1 + $0x18] sm:$0xff]
  %v31 = vpack.c.bf16 %v28, %v27
  %v32 = vpack.c.bf16 %v30, %v29
  %vm33 = vcmask 261120
  %v35 = vsel %vm33, %v26, 0
  %37 = vmatpush.bf16.msra.mxu0 0
  %38 = vmatpush.bf16.msra.mxu0 0
  %39 = vmatpush.bf16.msra.mxu0 0
  %40 = vmatpush.bf16.msra.mxu0 0
  %41 = vmatpush.bf16.msra.mxu0 0
  %42 = vmatpush.bf16.msra.mxu0 0
  %43 = vmatpush.bf16.msra.mxu0 %v32
  %44 = vmatpush.bf16.msra.mxu0 %v31
  %45 = vmatmul.bf16.gmra.mxu0 %v35
  %v46 = vpop.f32.mrf.mxu0
  %v47 = vadd.f32 0.0, %v46
  %v48 = vpop.f32.mrf.mxu0
  %v49 = vadd.f32 0.0, %v48
  %50 = vdwg.mxu0
  %v51 = vadd.f32 %v22, %v47
  %v52 = vadd.f32 %v23, %v49
  %vm53 = vcmask 523264
  %54 = vst.msk [vmem:[#allocation2] sm:$0xff] %vm53, %v51
  %55 = vst.msk [vmem:[#allocation2 + $0x8] sm:$0xff] %vm53, %v52
  // Predicated region
  $region18: #{transformer_forward.34} parent=0 // pred_check
    %p56 = pneg %p15
  $region19: #{transformer_forward.34} parent=0 // pred_check_branch
    %58 = sbr.rel (%p56) target = $region21
  $region20: #{transformer_forward.34} parent=0 // pred_region
    %v59 = vld [vmem:[#allocation2] sm:$0xff]
    %v60 = vld [vmem:[#allocation2 + $0x8] sm:$0xff]
    %v61 = vld [vmem:[%s2] sm:$0x1]
    %v63 = vperm.slane %v61, 0
    %v65 = vadd.f32 %v59, %v63
    %v66 = vadd.f32 %v60, %v63
    %v67 = vmax.f32 %v65, 0.0
    %v68 = vmax.f32 %v66, 0.0
    %69 = vst.msk [vmem:[%s3] sm:$0xff] %vm53, %v67
    %70 = vst.msk [vmem:[%s3 + $0x8] sm:$0xff] %vm53, %v68
  $region21: #{transformer_forward.34} parent=0 // pred_fallthru
    _
  // Predicated region
  $region22: #{transformer_forward.34} parent=0 // pred_check
    _
  $region23: #{transformer_forward.34} parent=0 // pred_check_branch
    %72 = sbr.rel (0) target = $region25
  $region24: #{transformer_forward.34} parent=0 // pred_region
    _
  $region25: #{transformer_forward.34} parent=0 // pred_fallthru
    _
  // Predicated region
  $region26: #{transformer_forward.34} parent=0 // pred_check
    _
  $region27: #{transformer_forward.34} parent=0 // pred_check_branch
    %74 = sbr.rel (0) target = $region29
  $region28: #{transformer_forward.34} parent=0 // pred_region
    _
  $region29: #{transformer_forward.34} parent=0 // pred_fallthru
    _

// kernel: transformer_forward.35
$region0: #{transformer_forward.35}
  #allocation0 [shape = 'u32[]', space=smem, size = 0x4, offset = 0x4, fixed_abs, tag = 'smem constant byte address 0x4 - core index']
  #allocation1 [shape = 'u32[72,128]{1,0:T(1,128)}', space=vmem, size = 0x9000, scoped, tag = 'internal scratch']
  #allocation2 [shape = 'f32[16,32]{1,0:T(8,128)}', space=vmem, size = 0x2000, scoped, tag = 'scratch operand']
  %s0 = inlined_call_operand.vmem [shape: f32[16,64], index: 0, kind: input, shape index: {}]
  %s1 = inlined_call_operand.vmem [shape: f32[64,32], index: 1, kind: input, shape index: {}]
  %s2 = inlined_call_operand.vmem [shape: f32[1,32], index: 2, kind: input, shape index: {}]
  %s3 = inlined_call_operand.vmem [shape: f32[16,32], index: 3, kind: input, shape index: {}]
  %s4 = inlined_call_operand.vmem [shape: f32[1,32], index: 4, kind: input, shape index: {}]
  %s5 = inlined_call_operand.vmem [shape: f32[1,32], index: 5, kind: input, shape index: {}]
  %s6 = inlined_call_operand.vmem [shape: f32[16,32], index: 6, kind: output, shape index: {}]
  %s7 = sld [smem:[#allocation0]]
  $region42: #{transformer_forward.35} parent=0
    _
  %s9 = ssub.s32 1, %s7
  %s10 = scalar_select 0, %s9, %s7
  // Predicated region
  $region2: #{transformer_forward.35} parent=0 // pred_check
    _
  $region3: #{transformer_forward.35} parent=0 // pred_check_branch
    %12 = sbr.rel (0) target = $region5
  $region4: #{transformer_forward.35} parent=0 // pred_region
    _
  $region5: #{transformer_forward.35} parent=0 // pred_fallthru
    _
  // Predicated region
  $region6: #{transformer_forward.35} parent=0 // pred_check
    _
  $region7: #{transformer_forward.35} parent=0 // pred_check_branch
    %14 = sbr.rel (0) target = $region9
  $region8: #{transformer_forward.35} parent=0 // pred_region
    _
  $region9: #{transformer_forward.35} parent=0 // pred_fallthru
    _
  // Predicated region
  $region10: #{transformer_forward.35} parent=0 // pred_check
    _
  $region11: #{transformer_forward.35} parent=0 // pred_check_branch
    %16 = sbr.rel (0) target = $region13
  $region12: #{transformer_forward.35} parent=0 // pred_region
    _
  $region13: #{transformer_forward.35} parent=0 // pred_fallthru
    _
  // Predicated region
  $region14: #{transformer_forward.35} parent=0 // pred_check
    _
  $region15: #{transformer_forward.35} parent=0 // pred_check_branch
    %18 = sbr.rel (0) target = $region17
  $region16: #{transformer_forward.35} parent=0 // pred_region
    _
  $region17: #{transformer_forward.35} parent=0 // pred_fallthru
    _
  // Predicated region
  $region18: #{transformer_forward.35} parent=0 // pred_check
    _
  $region19: #{transformer_forward.35} parent=0 // pred_check_branch
    %20 = sbr.rel (0) target = $region21
  $region20: #{transformer_forward.35} parent=0 // pred_region
    _
  $region21: #{transformer_forward.35} parent=0 // pred_fallthru
    _
  // Predicated region
  $region22: #{transformer_forward.35} parent=0 // pred_check
    _
  $region23: #{transformer_forward.35} parent=0 // pred_check_branch
    %22 = sbr.rel (0) target = $region25
  $region24: #{transformer_forward.35} parent=0 // pred_region
    _
  $region25: #{transformer_forward.35} parent=0 // pred_fallthru
    _
  %p24 = scmp.eq.s32.totalorder 0, 0
  // Predicated region
  $region26: #{transformer_forward.35} parent=0 // pred_check
    %p25 = pneg %p24
  $region27: #{transformer_forward.35} parent=0 // pred_check_branch
    %27 = sbr.rel (%p25) target = $region29
  $region28: #{transformer_forward.35} parent=0 // pred_region
    %vm28 = vcmask 261120
    %29 = vst.msk [vmem:[#allocation2] sm:$0xff] %vm28, 0.0
    %30 = vst.msk [vmem:[#allocation2 + $0x8] sm:$0xff] %vm28, 0.0
  $region29: #{transformer_forward.35} parent=0 // pred_fallthru
    _
  %v31 = vld [vmem:[#allocation2] sm:$0xff]
  %v32 = vld [vmem:[#allocation2 + $0x8] sm:$0xff]
  %v33 = vld [vmem:[%s0] sm:$0xff]
  %v34 = vld [vmem:[%s0 + $0x8] sm:$0xff]
  %v35 = vpack.c.bf16 %v34, %v33
  %v36 = vld [vmem:[%s1] sm:$0xff]
  %v37 = vld [vmem:[%s1 + $0x8] sm:$0xff]
  %v38 = vld [vmem:[%s1 + $0x10] sm:$0xff]
  %v39 = vld [vmem:[%s1 + $0x18] sm:$0xff]
  %v40 = vld [vmem:[%s1 + $0x20] sm:$0xff]
  %v41 = vld [vmem:[%s1 + $0x28] sm:$0xff]
  %v42 = vld [vmem:[%s1 + $0x30] sm:$0xff]
  %v43 = vld [vmem:[%s1 + $0x38] sm:$0xff]
  %v44 = vpack.c.bf16 %v37, %v36
  %v45 = vpack.c.bf16 %v39, %v38
  %v46 = vpack.c.bf16 %v41, %v40
  %v47 = vpack.c.bf16 %v43, %v42
  %vm48 = vcmask 523264
  %v50 = vsel %vm48, %v35, 0
  %52 = vmatpush.bf16.msra.mxu0 0
  %53 = vmatpush.bf16.msra.mxu0 0
  %54 = vmatpush.bf16.msra.mxu0 0
  %55 = vmatpush.bf16.msra.mxu0 0
  %56 = vmatpush.bf16.msra.mxu0 %v47
  %57 = vmatpush.bf16.msra.mxu0 %v46
  %58 = vmatpush.bf16.msra.mxu0 %v45
  %59 = vmatpush.bf16.msra.mxu0 %v44
  %60 = vmatmul.bf16.gmra.mxu0 %v50
  %v61 = vpop.f32.mrf.mxu0
  %v62 = vadd.f32 0.0, %v61
  %v63 = vpop.f32.mrf.mxu0
  %v64 = vadd.f32 0.0, %v63
  %65 = vdwg.mxu0
  %v66 = vadd.f32 %v31, %v62
  %v67 = vadd.f32 %v32, %v64
  %vm68 = vcmask 261120
  %69 = vst.msk [vmem:[#allocation2] sm:$0xff] %vm68, %v66
  %70 = vst.msk [vmem:[#allocation2 + $0x8] sm:$0xff] %vm68, %v67
  // Predicated region
  $region30: #{transformer_forward.35} parent=0 // pred_check
    %p71 = pneg %p24
  $region31: #{transformer_forward.35} parent=0 // pred_check_branch
    %73 = sbr.rel (%p71) target = $region33
  $region32: #{transformer_forward.35} parent=0 // pred_region
    %v74 = vld [vmem:[#allocation2] sm:$0xff]
    %v75 = vld [vmem:[#allocation2 + $0x8] sm:$0xff]
    %v76 = vld [vmem:[%s2] sm:$0x1]
    %v78 = vperm.slane %v76, 0
    %v80 = vadd.f32 %v74, %v78
    %v81 = vadd.f32 %v75, %v78
    %v82 = vld [vmem:[%s3] sm:$0xff]
    %v83 = vld [vmem:[%s3 + $0x8] sm:$0xff]
    %v84 = vadd.f32 %v80, %v82
    %v85 = vadd.f32 %v81, %v83
    %v86 = vsel %vm68, %v84, 0.0
    %87 = vadd.xlane.f32.xlu0 %v86
    %v88 = vpop.xlane.xlu0 %87
    %v89 = vsel %vm68, %v85, 0.0
    %90 = vadd.xlane.f32.xlu0 %v89
    %v91 = vpop.xlane.xlu0 %90
    %v92 = vrcp.pop 32.0
    %v93 = vmul.f32 32.0, %v92
    %v94 = vsub.f32 1.0, %v93
    %v95 = vmul.f32 %v92, %v94
    %v96 = vadd.f32 %v92, %v95
    %vm97 = vweird.f32 %v92
    %v98 = vsel %vm97, %v92, %v96
    %v99 = vmul.f32 %v88, %v98
    %v100 = vmul.f32 %v91, %v98
    %v101 = vsub.f32 %v84, %v99
    %v102 = vsub.f32 %v85, %v100
    %v103 = vmul.f32 %v101, %v101
    %v104 = vmul.f32 %v102, %v102
    %v105 = vsel %vm68, %v103, 0.0
    %106 = vadd.xlane.f32.xlu0 %v105
    %v107 = vpop.xlane.xlu0 %106
    %v108 = vsel %vm68, %v104, 0.0
    %109 = vadd.xlane.f32.xlu0 %v108
    %v110 = vpop.xlane.xlu0 %109
    %v111 = vmul.f32 %v107, %v98
    %v112 = vmul.f32 %v110, %v98
    %v113 = vadd.f32 %v111, 1e-05
    %v114 = vadd.f32 %v112, 1e-05
    %v115 = vrsqrt.pop %v113
    %v116 = vmul.f32 %v115, %v113
    %v117 = vmul.f32 %v116, %v115
    %v118 = vmul.f32 0.5, %v117
    %v119 = vsub.f32 1.5, %v118
    %v120 = vmul.f32 %v115, %v119
    %vm121 = vweird.f32 %v113
    %vm122 = vweird.f32 %v115
    %vm123 = vmor %vm121, %vm122
    %v124 = vsel %vm123, %v115, %v120
    %v125 = vrsqrt.pop %v114
    %v126 = vmul.f32 %v125, %v114
    %v127 = vmul.f32 %v126, %v125
    %v128 = vmul.f32 0.5, %v127
    %v129 = vsub.f32 1.5, %v128
    %v130 = vmul.f32 %v125, %v129
    %vm131 = vweird.f32 %v114
    %vm132 = vweird.f32 %v125
    %vm133 = vmor %vm131, %vm132
    %v134 = vsel %vm133, %v125, %v130
    %v135 = vmul.f32 %v101, %v124
    %v136 = vmul.f32 %v102, %v134
    %v137 = vld [vmem:[%s4] sm:$0x1]
    %v139 = vperm.slane %v137, 0
    %v141 = vmul.f32 %v135, %v139
    %v142 = vmul.f32 %v136, %v139
    %v143 = vld [vmem:[%s5] sm:$0x1]
    %v145 = vperm.slane %v143, 0
    %v147 = vadd.f32 %v141, %v145
    %v148 = vadd.f32 %v142, %v145
    %149 = vst.msk [vmem:[%s6] sm:$0xff] %vm68, %v147
    %150 = vst.msk [vmem:[%s6 + $0x8] sm:$0xff] %vm68, %v148
  $region33: #{transformer_forward.35} parent=0 // pred_fallthru
    _
  // Predicated region
  $region34: #{transformer_forward.35} parent=0 // pred_check
    _
  $region35: #{transformer_forward.35} parent=0 // pred_check_branch
    %152 = sbr.rel (0) target = $region37
  $region36: #{transformer_forward.35} parent=0 // pred_region
    _
  $region37: #{transformer_forward.35} parent=0 // pred_fallthru
    _
  // Predicated region
  $region38: #{transformer_forward.35} parent=0 // pred_check
    _
  $region39: #{transformer_forward.35} parent=0 // pred_check_branch
    %154 = sbr.rel (0) target = $region41
  $region40: #{transformer_forward.35} parent=0 // pred_region
    _
  $region41: #{transformer_forward.35} parent=0 // pred_fallthru
    _

// kernel: transformer_forward.45
$region0: #{transformer_forward.45}
  #allocation0 [shape = 'u32[]', space=smem, size = 0x4, offset = 0x4, fixed_abs, tag = 'smem constant byte address 0x4 - core index']
  #allocation1 [shape = 'u32[72,128]{1,0:T(1,128)}', space=vmem, size = 0x9000, scoped, tag = 'internal scratch']
  #allocation2 [shape = 'f32[16,64]{1,0:T(8,128)}', space=vmem, size = 0x2000, scoped, tag = 'scratch operand']
  %s0 = inlined_call_operand.vmem [shape: f32[16,32], index: 0, kind: input, shape index: {}]
  %s1 = inlined_call_operand.vmem [shape: f32[32,64], index: 1, kind: input, shape index: {}]
  %s2 = inlined_call_operand.vmem [shape: f32[1,64], index: 2, kind: input, shape index: {}]
  %s3 = inlined_call_operand.vmem [shape: f32[16,64], index: 3, kind: output, shape index: {}]
  %s4 = sld [smem:[#allocation0]]
  $region30: #{transformer_forward.45} parent=0
    _
  %s6 = ssub.s32 1, %s4
  %s7 = scalar_select 0, %s6, %s4
  // Predicated region
  $region2: #{transformer_forward.45} parent=0 // pred_check
    _
  $region3: #{transformer_forward.45} parent=0 // pred_check_branch
    %9 = sbr.rel (0) target = $region5
  $region4: #{transformer_forward.45} parent=0 // pred_region
    _
  $region5: #{transformer_forward.45} parent=0 // pred_fallthru
    _
  // Predicated region
  $region6: #{transformer_forward.45} parent=0 // pred_check
    _
  $region7: #{transformer_forward.45} parent=0 // pred_check_branch
    %11 = sbr.rel (0) target = $region9
  $region8: #{transformer_forward.45} parent=0 // pred_region
    _
  $region9: #{transformer_forward.45} parent=0 // pred_fallthru
    _
  // Predicated region
  $region10: #{transformer_forward.45} parent=0 // pred_check
    _
  $region11: #{transformer_forward.45} parent=0 // pred_check_branch
    %13 = sbr.rel (0) target = $region13
  $region12: #{transformer_forward.45} parent=0 // pred_region
    _
  $region13: #{transformer_forward.45} parent=0 // pred_fallthru
    _
  %p15 = scmp.eq.s32.totalorder 0, 0
  // Predicated region
  $region14: #{transformer_forward.45} parent=0 // pred_check
    %p16 = pneg %p15
  $region15: #{transformer_forward.45} parent=0 // pred_check_branch
    %18 = sbr.rel (%p16) target = $region17
  $region16: #{transformer_forward.45} parent=0 // pred_region
    %vm19 = vcmask 523264
    %20 = vst.msk [vmem:[#allocation2] sm:$0xff] %vm19, 0.0
    %21 = vst.msk [vmem:[#allocation2 + $0x8] sm:$0xff] %vm19, 0.0
  $region17: #{transformer_forward.45} parent=0 // pred_fallthru
    _
  %v22 = vld [vmem:[#allocation2] sm:$0xff]
  %v23 = vld [vmem:[#allocation2 + $0x8] sm:$0xff]
  %v24 = vld [vmem:[%s0] sm:$0xff]
  %v25 = vld [vmem:[%s0 + $0x8] sm:$0xff]
  %v26 = vpack.c.bf16 %v25, %v24
  %v27 = vld [vmem:[%s1] sm:$0xff]
  %v28 = vld [vmem:[%s1 + $0x8] sm:$0xff]
  %v29 = vld [vmem:[%s1 + $0x10] sm:$0xff]
  %v30 = vld [vmem:[%s1 + $0x18] sm:$0xff]
  %v31 = vpack.c.bf16 %v28, %v27
  %v32 = vpack.c.bf16 %v30, %v29
  %vm33 = vcmask 261120
  %v35 = vsel %vm33, %v26, 0
  %37 = vmatpush.bf16.msra.mxu0 0
  %38 = vmatpush.bf16.msra.mxu0 0
  %39 = vmatpush.bf16.msra.mxu0 0
  %40 = vmatpush.bf16.msra.mxu0 0
  %41 = vmatpush.bf16.msra.mxu0 0
  %42 = vmatpush.bf16.msra.mxu0 0
  %43 = vmatpush.bf16.msra.mxu0 %v32
  %44 = vmatpush.bf16.msra.mxu0 %v31
  %45 = vmatmul.bf16.gmra.mxu0 %v35
  %v46 = vpop.f32.mrf.mxu0
  %v47 = vadd.f32 0.0, %v46
  %v48 = vpop.f32.mrf.mxu0
  %v49 = vadd.f32 0.0, %v48
  %50 = vdwg.mxu0
  %v51 = vadd.f32 %v22, %v47
  %v52 = vadd.f32 %v23, %v49
  %vm53 = vcmask 523264
  %54 = vst.msk [vmem:[#allocation2] sm:$0xff] %vm53, %v51
  %55 = vst.msk [vmem:[#allocation2 + $0x8] sm:$0xff] %vm53, %v52
  // Predicated region
  $region18: #{transformer_forward.45} parent=0 // pred_check
    %p56 = pneg %p15
  $region19: #{transformer_forward.45} parent=0 // pred_check_branch
    %58 = sbr.rel (%p56) target = $region21
  $region20: #{transformer_forward.45} parent=0 // pred_region
    %v59 = vld [vmem:[#allocation2] sm:$0xff]
    %v60 = vld [vmem:[#allocation2 + $0x8] sm:$0xff]
    %v61 = vld [vmem:[%s2] sm:$0x1]
    %v63 = vperm.slane %v61, 0
    %v65 = vadd.f32 %v59, %v63
    %v66 = vadd.f32 %v60, %v63
    %67 = vst.msk [vmem:[%s3] sm:$0xff] %vm53, %v65
    %68 = vst.msk [vmem:[%s3 + $0x8] sm:$0xff] %vm53, %v66
  $region21: #{transformer_forward.45} parent=0 // pred_fallthru
    _
  // Predicated region
  $region22: #{transformer_forward.45} parent=0 // pred_check
    _
  $region23: #{transformer_forward.45} parent=0 // pred_check_branch
    %70 = sbr.rel (0) target = $region25
  $region24: #{transformer_forward.45} parent=0 // pred_region
    _
  $region25: #{transformer_forward.45} parent=0 // pred_fallthru
    _
  // Predicated region
  $region26: #{transformer_forward.45} parent=0 // pred_check
    _
  $region27: #{transformer_forward.45} parent=0 // pred_check_branch
    %72 = sbr.rel (0) target = $region29
  $region28: #{transformer_forward.45} parent=0 // pred_region
    _
  $region29: #{transformer_forward.45} parent=0 // pred_fallthru
    _

// kernel: transformer_forward.59
$region0: #{transformer_forward.59}
  #allocation0 [shape = 'u32[]', space=smem, size = 0x4, offset = 0x4, fixed_abs, tag = 'smem constant byte address 0x4 - core index']
  #allocation1 [shape = 'u32[72,128]{1,0:T(1,128)}', space=vmem, size = 0x9000, scoped, tag = 'internal scratch']
  #allocation2 [shape = 'f32[16,32]{1,0:T(8,128)}', space=vmem, size = 0x2000, scoped, tag = 'scratch operand']
  %s0 = inlined_call_operand.vmem [shape: f32[16,32], index: 0, kind: input, shape index: {}]
  %s1 = inlined_call_operand.vmem [shape: f32[32,32], index: 1, kind: input, shape index: {}]
  %s2 = inlined_call_operand.vmem [shape: f32[1,32], index: 2, kind: input, shape index: {}]
  %s3 = inlined_call_operand.hbm [shape: f32[16,32], index: 3, kind: output, shape index: {}]
  %s4 = sld [smem:[#allocation0]]
  $region30: #{transformer_forward.59} parent=0
    _
  %s6 = ssub.s32 1, %s4
  %s7 = scalar_select 0, %s6, %s4
  $region1: #{transformer_forward.59} parent=0
    #allocation3 [shape = 'u8[8192]{0}', space=vmem, size = 0x2000, scoped, tag = 'output window, operand 0, single buffered']
    #allocation4 [shape = 's32[1]{0}', space=sflag, size = 0x4, scoped, tag = 'scoped memory for transformer_forward.59']
    %8 = vsyncpa [#allocation4], 0
    // Predicated region
    $region2: #{transformer_forward.59} parent=1 // pred_check
      _
    $region3: #{transformer_forward.59} parent=1 // pred_check_branch
      %10 = sbr.rel (0) target = $region5
    $region4: #{transformer_forward.59} parent=1 // pred_region
      _
    $region5: #{transformer_forward.59} parent=1 // pred_fallthru
      _
    // Predicated region
    $region6: #{transformer_forward.59} parent=1 // pred_check
      _
    $region7: #{transformer_forward.59} parent=1 // pred_check_branch
      %12 = sbr.rel (0) target = $region9
    $region8: #{transformer_forward.59} parent=1 // pred_region
      _
    $region9: #{transformer_forward.59} parent=1 // pred_fallthru
      _
    // Predicated region
    $region10: #{transformer_forward.59} parent=1 // pred_check
      _
    $region11: #{transformer_forward.59} parent=1 // pred_check_branch
      %14 = sbr.rel (0) target = $region13
    $region12: #{transformer_forward.59} parent=1 // pred_region
      _
    $region13: #{transformer_forward.59} parent=1 // pred_fallthru
      _
    %p16 = scmp.eq.s32.totalorder 0, 0
    // Predicated region
    $region14: #{transformer_forward.59} parent=1 // pred_check
      %p17 = pneg %p16
    $region15: #{transformer_forward.59} parent=1 // pred_check_branch
      %19 = sbr.rel (%p17) target = $region17
    $region16: #{transformer_forward.59} parent=1 // pred_region
      %vm20 = vcmask 261120
      %21 = vst.msk [vmem:[#allocation2] sm:$0xff] %vm20, 0.0
      %22 = vst.msk [vmem:[#allocation2 + $0x8] sm:$0xff] %vm20, 0.0
    $region17: #{transformer_forward.59} parent=1 // pred_fallthru
      _
    %v23 = vld [vmem:[#allocation2] sm:$0xff]
    %v24 = vld [vmem:[#allocation2 + $0x8] sm:$0xff]
    %v25 = vld [vmem:[%s0] sm:$0xff]
    %v26 = vld [vmem:[%s0 + $0x8] sm:$0xff]
    %v27 = vpack.c.bf16 %v26, %v25
    %v28 = vld [vmem:[%s1] sm:$0xff]
    %v29 = vld [vmem:[%s1 + $0x8] sm:$0xff]
    %v30 = vld [vmem:[%s1 + $0x10] sm:$0xff]
    %v31 = vld [vmem:[%s1 + $0x18] sm:$0xff]
    %v32 = vpack.c.bf16 %v29, %v28
    %v33 = vpack.c.bf16 %v31, %v30
    %vm34 = vcmask 261120
    %v36 = vsel %vm34, %v27, 0
    %38 = vmatpush.bf16.msra.mxu0 0
    %39 = vmatpush.bf16.msra.mxu0 0
    %40 = vmatpush.bf16.msra.mxu0 0
    %41 = vmatpush.bf16.msra.mxu0 0
    %42 = vmatpush.bf16.msra.mxu0 0
    %43 = vmatpush.bf16.msra.mxu0 0
    %44 = vmatpush.bf16.msra.mxu0 %v33
    %45 = vmatpush.bf16.msra.mxu0 %v32
    %46 = vmatmul.bf16.gmra.mxu0 %v36
    %v47 = vpop.f32.mrf.mxu0
    %v48 = vadd.f32 0.0, %v47
    %v49 = vpop.f32.mrf.mxu0
    %v50 = vadd.f32 0.0, %v49
    %51 = vdwg.mxu0
    %v52 = vadd.f32 %v23, %v48
    %v53 = vadd.f32 %v24, %v50
    %54 = vst.msk [vmem:[#allocation2] sm:$0xff] %vm34, %v52
    %55 = vst.msk [vmem:[#allocation2 + $0x8] sm:$0xff] %vm34, %v53
    // Predicated region
    $region18: #{transformer_forward.59} parent=1 // pred_check
      %p56 = pneg %p16
    $region19: #{transformer_forward.59} parent=1 // pred_check_branch
      %58 = sbr.rel (%p56) target = $region21
    $region20: #{transformer_forward.59} parent=1 // pred_region
      %v59 = vld [vmem:[#allocation2] sm:$0xff]
      %v60 = vld [vmem:[#allocation2 + $0x8] sm:$0xff]
      %v61 = vld [vmem:[%s2] sm:$0x1]
      %v63 = vperm.slane %v61, 0
      %v65 = vadd.f32 %v59, %v63
      %v66 = vadd.f32 %v60, %v63
      %67 = vst.msk [vmem:[#allocation3] sm:$0xff] %vm34, %v65
      %68 = vst.msk [vmem:[#allocation3 + $0x8] sm:$0xff] %vm34, %v66
    $region21: #{transformer_forward.59} parent=1 // pred_fallthru
      _
    // Predicated region
    $region22: #{transformer_forward.59} parent=1 // pred_check
      _
    $region23: #{transformer_forward.59} parent=1 // pred_check_branch
      %70 = sbr.rel (0) target = $region25
    $region24: #{transformer_forward.59} parent=1 // pred_region
      %72 = vsyncadd [#allocation4], 0
      %s73 = sshll.u32 [#allocation3], 4
      %s74 = int_to_ptr.vmem [resolvable:$true] %s73
      %s75 = sshll.u32 %s3, 4
      %s76 = int_to_ptr.hbm [resolvable:$true] %s75
      %81 = dma.vmem_to_hbm [thread:$0]  %s74, 256, %s76, [#allocation4], 128, 128, 8
    $region25: #{transformer_forward.59} parent=1 // pred_fallthru
      _
    // Predicated region
    $region26: #{transformer_forward.59} parent=1 // pred_check
      _
    $region27: #{transformer_forward.59} parent=1 // pred_check_branch
      %83 = sbr.rel (0) target = $region29
    $region28: #{transformer_forward.59} parent=1 // pred_region
      %85 = dma.done [#allocation4], 256
    $region29: #{transformer_forward.59} parent=1 // pred_fallthru
      _
    %86 = vsyncpa [#allocation4], 1

// kernel: transformer_forward.46
$region0: #{transformer_forward.46}
  #allocation0 [shape = 'u32[]', space=smem, size = 0x4, offset = 0x4, fixed_abs, tag = 'smem constant byte address 0x4 - core index']
  #allocation1 [shape = 'u32[72,128]{1,0:T(1,128)}', space=vmem, size = 0x9000, scoped, tag = 'internal scratch']
  %s0 = inlined_call_operand.vmem [shape: f32[2,4,8,8], index: 0, kind: input, shape index: {}]
  %s1 = inlined_call_operand.vmem [shape: f32[2,4,8,8], index: 1, kind: input, shape index: {}]
  %s2 = inlined_call_operand.vmem [shape: f32[2,4,8,8], index: 2, kind: input, shape index: {}]
  %s3 = inlined_call_operand.vmem [shape: f32[2,4,8,8], index: 3, kind: output, shape index: {}]
  %s4 = sld [smem:[#allocation0]]
  $region45: #{transformer_forward.46} parent=0
    _
  %s6 = ssub.s32 1, %s4
  %s7 = scalar_select 0, %s6, %s4
  loop: start=0, step=1, limit=4
  $region2: #{transformer_forward.46} parent=0 // loop_pre_header
    _
  $region3: #{transformer_forward.46} parent=0 // loop_header
    %s9 = sphi 0, %s13
    %p10 = scmp.ge.s32.totalorder %s9, 4
    %s19 = sphi 0, %s21
    %s22 = sphi 0, %s19
    %s23 = sphi 0, %s22
    %s39 = sphi 0, %s23
    %s45 = sphi 0, %s47
    %s48 = sphi 0, %s45
    %s49 = sphi 0, %s48
    %s65 = sphi 0, %s49
    %s71 = sphi 0, %s73
    %s74 = sphi 0, %s71
    %s75 = sphi 0, %s74
    %s91 = sphi 0, %s75
    %s97 = sphi 0, %s99
    %s100 = sphi 0, %s97
    %s101 = sphi 0, %s100
    %s117 = sphi 0, %s101
  $region4: #{transformer_forward.46} parent=0 // loop_header_branch
    %12 = sbr.rel (%p10) target = $region8
  $region5: #{transformer_forward.46} parent=0 // loop_body
    %s14 = ssub.s32 %s9, 1
    %s15 = ssub.s32 %s9, 2
    %s16 = sadd.s32 %s9, 1
    %s17 = ssub.s32 %s9, %s16
    %p18 = scmp.eq.s32.totalorder %s17, 0
    %s20 = sadd.s32 %s19, 1
    %s21 = scalar_select %p18, %s19, %s20
    %p24 = pneg %p18
    %p25 = scmp.eq.s32.totalorder %s9, 1
    %p26 = por %p24, %p25
    %p27 = scmp.ne.s32.totalorder %s19, %s22
    %p28 = scmp.eq.s32.totalorder %s9, 0
    %p29 = por %p27, %p28
    %p30 = scmp.ne.s32.totalorder %s19, %s22
    %p31 = scmp.eq.s32.totalorder %s14, 1
    %p32 = por %p30, %p31
    %p33 = scmp.ne.s32.totalorder %s22, %s23
    %p34 = scmp.eq.s32.totalorder %s14, 0
    %p35 = por %p33, %p34
    %p36 = scmp.ne.s32.totalorder %s22, %s23
    %p37 = scmp.eq.s32.totalorder %s15, 1
    %p38 = por %p36, %p37
    %p40 = scmp.ne.s32.totalorder %s23, %s39
    %p41 = scmp.eq.s32.totalorder %s15, 0
    %p42 = por %p40, %p41
    %s43 = ssub.s32 %s9, %s16
    %p44 = scmp.eq.s32.totalorder %s43, 0
    %s46 = sadd.s32 %s45, 1
    %s47 = scalar_select %p44, %s45, %s46
    %p50 = pneg %p44
    %p51 = scmp.eq.s32.totalorder %s9, 1
    %p52 = por %p50, %p51
    %p53 = scmp.ne.s32.totalorder %s45, %s48
    %p54 = scmp.eq.s32.totalorder %s9, 0
    %p55 = por %p53, %p54
    %p56 = scmp.ne.s32.totalorder %s45, %s48
    %p57 = scmp.eq.s32.totalorder %s14, 1
    %p58 = por %p56, %p57
    %p59 = scmp.ne.s32.totalorder %s48, %s49
    %p60 = scmp.eq.s32.totalorder %s14, 0
    %p61 = por %p59, %p60
    %p62 = scmp.ne.s32.totalorder %s48, %s49
    %p63 = scmp.eq.s32.totalorder %s15, 1
    %p64 = por %p62, %p63
    %p66 = scmp.ne.s32.totalorder %s49, %s65
    %p67 = scmp.eq.s32.totalorder %s15, 0
    %p68 = por %p66, %p67
    %s69 = ssub.s32 %s9, %s16
    %p70 = scmp.eq.s32.totalorder %s69, 0
    %s72 = sadd.s32 %s71, 1
    %s73 = scalar_select %p70, %s71, %s72
    %p76 = pneg %p70
    %p77 = scmp.eq.s32.totalorder %s9, 1
    %p78 = por %p76, %p77
    %p79 = scmp.ne.s32.totalorder %s71, %s74
    %p80 = scmp.eq.s32.totalorder %s9, 0
    %p81 = por %p79, %p80
    %p82 = scmp.ne.s32.totalorder %s71, %s74
    %p83 = scmp.eq.s32.totalorder %s14, 1
    %p84 = por %p82, %p83
    %p85 = scmp.ne.s32.totalorder %s74, %s75
    %p86 = scmp.eq.s32.totalorder %s14, 0
    %p87 = por %p85, %p86
    %p88 = scmp.ne.s32.totalorder %s74, %s75
    %p89 = scmp.eq.s32.totalorder %s15, 1
    %p90 = por %p88, %p89
    %p92 = scmp.ne.s32.totalorder %s75, %s91
    %p93 = scmp.eq.s32.totalorder %s15, 0
    %p94 = por %p92, %p93
    %s95 = ssub.s32 %s9, %s16
    %p96 = scmp.eq.s32.totalorder %s95, 0
    %s98 = sadd.s32 %s97, 1
    %s99 = scalar_select %p96, %s97, %s98
    %p102 = pneg %p96
    %p103 = scmp.eq.s32.totalorder %s9, 1
    %p104 = por %p102, %p103
    %p105 = scmp.ne.s32.totalorder %s97, %s100
    %p106 = scmp.eq.s32.totalorder %s9, 0
    %p107 = por %p105, %p106
    %p108 = scmp.ne.s32.totalorder %s97, %s100
    %p109 = scmp.eq.s32.totalorder %s14, 1
    %p110 = por %p108, %p109
    %p111 = scmp.ne.s32.totalorder %s100, %s101
    %p112 = scmp.eq.s32.totalorder %s14, 0
    %p113 = por %p111, %p112
    %p114 = scmp.ne.s32.totalorder %s100, %s101
    %p115 = scmp.eq.s32.totalorder %s15, 1
    %p116 = por %p114, %p115
    %p118 = scmp.ne.s32.totalorder %s101, %s117
    %p119 = scmp.eq.s32.totalorder %s15, 0
    %p120 = por %p118, %p119
    %p121 = scmp.le.s32.totalorder 1, %s9
    %p122 = scmp.lt.s32.totalorder %s9, 3
    %p123 = pnand %p121, %p122
    %p124 = pneg %p123
    // Predicated region
    $region9: #{transformer_forward.46} parent=5 // pred_check
      _
    $region10: #{transformer_forward.46} parent=5 // pred_check_branch
      %126 = sbr.rel (%p123) target = $region12
    $region11: #{transformer_forward.46} parent=5 // pred_region
      %s127 = ssub.s32 %s9, 1
    $region12: #{transformer_forward.46} parent=5 // pred_fallthru
      _
    %p128 = scmp.lt.s32.totalorder %s9, 2
    // Predicated region
    $region13: #{transformer_forward.46} parent=5 // pred_check
      %p129 = pneg %p128
    $region14: #{transformer_forward.46} parent=5 // pred_check_branch
      %131 = sbr.rel (%p129) target = $region16
    $region15: #{transformer_forward.46} parent=5 // pred_region
      // Predicated region
      $region17: #{transformer_forward.46} parent=15 // pred_check
        %p132 = pneg %p29
      $region18: #{transformer_forward.46} parent=15 // pred_check_branch
        %134 = sbr.rel (%p132) target = $region20
      $region19: #{transformer_forward.46} parent=15 // pred_region
        %p135 = scmp.lt.s32.totalorder %s9, 1
        %s136 = scalar_select %p135, %s9, 1
        %s137 = smul.addr %s136, 4
        %s138 = smul.addr %s137, 8
        %s139 = scalar_lea.vmem %s0, %s138
      $region20: #{transformer_forward.46} parent=15 // pred_fallthru
        _
      // Predicated region
      $region21: #{transformer_forward.46} parent=15 // pred_check
        %p140 = pneg %p55
      $region22: #{transformer_forward.46} parent=15 // pred_check_branch
        %142 = sbr.rel (%p140) target = $region24
      $region23: #{transformer_forward.46} parent=15 // pred_region
        %p143 = scmp.lt.s32.totalorder %s9, 1
        %s144 = scalar_select %p143, %s9, 1
        %s145 = smul.addr %s144, 4
        %s146 = smul.addr %s145, 8
        %s147 = scalar_lea.vmem %s1, %s146
      $region24: #{transformer_forward.46} parent=15 // pred_fallthru
        _
      // Predicated region
      $region25: #{transformer_forward.46} parent=15 // pred_check
        %p148 = pneg %p81
      $region26: #{transformer_forward.46} parent=15 // pred_check_branch
        %150 = sbr.rel (%p148) target = $region28
      $region27: #{transformer_forward.46} parent=15 // pred_region
        %p151 = scmp.lt.s32.totalorder %s9, 1
        %s152 = scalar_select %p151, %s9, 1
        %s153 = smul.addr %s152, 4
        %s154 = smul.addr %s153, 8
        %s155 = scalar_lea.vmem %s2, %s154
      $region28: #{transformer_forward.46} parent=15 // pred_fallthru
        _
    $region16: #{transformer_forward.46} parent=5 // pred_fallthru
      _
    %p156 = scmp.le.s32.totalorder 1, %s9
    %p157 = scmp.lt.s32.totalorder %s9, 3
    %p158 = pnand %p156, %p157
    %p159 = pneg %p158
    // Predicated region
    $region29: #{transformer_forward.46} parent=5 // pred_check
      _
    $region30: #{transformer_forward.46} parent=5 // pred_check_branch
      %161 = sbr.rel (%p158) target = $region32
    $region31: #{transformer_forward.46} parent=5 // pred_region
      %s162 = ssub.s32 %s9, 1
      %p163 = scmp.lt.s32.totalorder %s14, 1
      %s164 = scalar_select %p163, %s14, 1
      %s165 = smul.addr %s164, 4
      %s166 = smul.addr %s165, 8
      %s167 = scalar_lea.vmem %s0, %s166
      %p168 = pneg %p35
      %p169 = pneg %p32
      %p170 = scmp.lt.s32.totalorder %s14, 1
      %s171 = scalar_select %p170, %s14, 1
      %s172 = smul.addr %s171, 4
      %s173 = smul.addr %s172, 8
      %s174 = scalar_lea.vmem %s1, %s173
      %p175 = pneg %p61
      %p176 = pneg %p58
      %p177 = scmp.lt.s32.totalorder %s14, 1
      %s178 = scalar_select %p177, %s14, 1
      %s179 = smul.addr %s178, 4
      %s180 = smul.addr %s179, 8
      %s181 = scalar_lea.vmem %s2, %s180
      %p182 = pneg %p87
      %p183 = pneg %p84
      %p184 = pneg %p113
      %p185 = pneg %p110
      %p186 = scmp.lt.s32.totalorder %s14, 1
      %s187 = scalar_select %p186, %s14, 1
      %s188 = smul.addr %s187, 4
      %s189 = smul.addr %s188, 8
      %s190 = scalar_lea.vmem %s3, %s189
      %p191 = scmp.lt.s32.totalorder %s14, 1
      %s192 = scalar_select %p191, %s14, 1
      %s193 = smul.addr %s192, 4
      %s194 = smul.addr %s193, 8
      %s195 = scalar_lea.vmem %s0, %s194
      %p196 = scmp.lt.s32.totalorder %s14, 1
      %s197 = scalar_select %p196, %s14, 1
      %s198 = smul.addr %s197, 4
      %s199 = smul.addr %s198, 8
      %s200 = scalar_lea.vmem %s1, %s199
      %p201 = scmp.lt.s32.totalorder %s14, 1
      %s202 = scalar_select %p201, %s14, 1
      %s203 = smul.addr %s202, 4
      %s204 = smul.addr %s203, 8
      %s205 = scalar_lea.vmem %s2, %s204
      %p206 = scmp.lt.s32.totalorder %s14, 1
      %s207 = scalar_select %p206, %s14, 1
      %s208 = smul.addr %s207, 4
      %s209 = smul.addr %s208, 8
      %s210 = scalar_lea.vmem %s3, %s209
      %v212 = vld [vmem:[%s195] sm:$0xff]
      %v213 = vld [vmem:[%s195 + $0x8] sm:$0xff]
      %v214 = vld [vmem:[%s195 + $0x10] sm:$0xff]
      %v215 = vld [vmem:[%s195 + $0x18] sm:$0xff]
      %v216 = vpack.c.bf16 %v212, %v212
      %v217 = vpack.c.bf16 %v213, %v213
      %v218 = vpack.c.bf16 %v214, %v214
      %v219 = vpack.c.bf16 %v215, %v215
      %v220 = vld [vmem:[%s200] sm:$0xff]
      %v221 = vld [vmem:[%s200 + $0x8] sm:$0xff]
      %v222 = vld [vmem:[%s200 + $0x10] sm:$0xff]
      %v223 = vld [vmem:[%s200 + $0x18] sm:$0xff]
      %v224 = vpack.c.bf16 %v220, %v220
      %v225 = vpack.c.bf16 %v221, %v221
      %v226 = vpack.c.bf16 %v222, %v222
      %v227 = vpack.c.bf16 %v223, %v223
      %v228 = vld [vmem:[%s205] sm:$0xff]
      %v229 = vld [vmem:[%s205 + $0x8] sm:$0xff]
      %v230 = vld [vmem:[%s205 + $0x10] sm:$0xff]
      %v231 = vld [vmem:[%s205 + $0x18] sm:$0xff]
      %v232 = vpack.c.bf16 %v228, %v228
      %v233 = vpack.c.bf16 %v229, %v229
      %v234 = vpack.c.bf16 %v230, %v230
      %v235 = vpack.c.bf16 %v231, %v231
      %vm236 = vcmask 64512
      %v238 = vsel %vm236, %v216, 0
      %v241 = vsel %vm236, %v224, 0
      %243 = vmatpush.bf16.xpose.msra.mxu0 0
      %244 = vmatpush.bf16.xpose.msra.mxu0 0
      %245 = vmatpush.bf16.xpose.msra.mxu0 0
      %246 = vmatpush.bf16.xpose.msra.mxu0 0
      %247 = vmatpush.bf16.xpose.msra.mxu0 0
      %248 = vmatpush.bf16.xpose.msra.mxu0 0
      %249 = vmatpush.bf16.xpose.msra.mxu0 0
      %250 = vmatpush.bf16.xpose.msra.mxu0 %v241
      %251 = vmatmul.bf16.gmra.mxu0 %v238
      %v252 = vpop.f32.mrf.mxu0
      %v253 = vadd.f32 0.0, %v252
      %v254 = vpop.f32.mrf.mxu0
      %255 = vdwg.mxu0
      %v257 = vsel %vm236, %v217, 0
      %v260 = vsel %vm236, %v225, 0
      %262 = vmatpush.bf16.xpose.msra.mxu0 0
      %263 = vmatpush.bf16.xpose.msra.mxu0 0
      %264 = vmatpush.bf16.xpose.msra.mxu0 0
      %265 = vmatpush.bf16.xpose.msra.mxu0 0
      %266 = vmatpush.bf16.xpose.msra.mxu0 0
      %267 = vmatpush.bf16.xpose.msra.mxu0 0
      %268 = vmatpush.bf16.xpose.msra.mxu0 0
      %269 = vmatpush.bf16.xpose.msra.mxu0 %v260
      %270 = vmatmul.bf16.gmra.mxu0 %v257
      %v271 = vpop.f32.mrf.mxu0
      %v272 = vadd.f32 0.0, %v271
      %v273 = vpop.f32.mrf.mxu0
      %274 = vdwg.mxu0
      %v276 = vsel %vm236, %v218, 0
      %v279 = vsel %vm236, %v226, 0
      %281 = vmatpush.bf16.xpose.msra.mxu0 0
      %282 = vmatpush.bf16.xpose.msra.mxu0 0
      %283 = vmatpush.bf16.xpose.msra.mxu0 0
      %284 = vmatpush.bf16.xpose.msra.mxu0 0
      %285 = vmatpush.bf16.xpose.msra.mxu0 0
      %286 = vmatpush.bf16.xpose.msra.mxu0 0
      %287 = vmatpush.bf16.xpose.msra.mxu0 0
      %288 = vmatpush.bf16.xpose.msra.mxu0 %v279
      %289 = vmatmul.bf16.gmra.mxu0 %v276
      %v290 = vpop.f32.mrf.mxu0
      %v291 = vadd.f32 0.0, %v290
      %v292 = vpop.f32.mrf.mxu0
      %293 = vdwg.mxu0
      %v295 = vsel %vm236, %v219, 0
      %v298 = vsel %vm236, %v227, 0
      %300 = vmatpush.bf16.xpose.msra.mxu0 0
      %301 = vmatpush.bf16.xpose.msra.mxu0 0
      %302 = vmatpush.bf16.xpose.msra.mxu0 0
      %303 = vmatpush.bf16.xpose.msra.mxu0 0
      %304 = vmatpush.bf16.xpose.msra.mxu0 0
      %305 = vmatpush.bf16.xpose.msra.mxu0 0
      %306 = vmatpush.bf16.xpose.msra.mxu0 0
      %307 = vmatpush.bf16.xpose.msra.mxu0 %v298
      %308 = vmatmul.bf16.gmra.mxu0 %v295
      %v309 = vpop.f32.mrf.mxu0
      %v310 = vadd.f32 0.0, %v309
      %v311 = vpop.f32.mrf.mxu0
      %312 = vdwg.mxu0
      %v313 = vmul.f32 %v253, 0.35355338
      %v314 = vmul.f32 %v272, 0.35355338
      %v315 = vmul.f32 %v291, 0.35355338
      %v316 = vmul.f32 %v310, 0.35355338
      %v317 = vsel %vm236, %v313, -inf
      %318 = vmax.xlane.f32.xlu0 %v317
      %v319 = vpop.xlane.xlu0 %318
      %v320 = vsel %vm236, %v314, -inf
      %321 = vmax.xlane.f32.xlu0 %v320
      %v322 = vpop.xlane.xlu0 %321
      %v323 = vsel %vm236, %v315, -inf
      %324 = vmax.xlane.f32.xlu0 %v323
      %v325 = vpop.xlane.xlu0 %324
      %v326 = vsel %vm236, %v316, -inf
      %327 = vmax.xlane.f32.xlu0 %v326
      %v328 = vpop.xlane.xlu0 %327
      %v329 = vsub.f32 %v313, %v319
      %v330 = vsub.f32 %v314, %v322
      %v331 = vsub.f32 %v315, %v325
      %v332 = vsub.f32 %v316, %v328
      %v333 = vmul.f32 %v329, 1.442695
      %v334 = vpow.pop %v333
      %v335 = vmul.f32 %v330, 1.442695
      %v336 = vpow.pop %v335
      %v337 = vmul.f32 %v331, 1.442695
      %v338 = vpow.pop %v337
      %v339 = vmul.f32 %v332, 1.442695
      %v340 = vpow.pop %v339
      %v341 = vsel %vm236, %v334, 0.0
      %342 = vadd.xlane.f32.xlu0 %v341
      %v343 = vpop.xlane.xlu0 %342
      %v344 = vsel %vm236, %v336, 0.0
      %345 = vadd.xlane.f32.xlu0 %v344
      %v346 = vpop.xlane.xlu0 %345
      %v347 = vsel %vm236, %v338, 0.0
      %348 = vadd.xlane.f32.xlu0 %v347
      %v349 = vpop.xlane.xlu0 %348
      %v350 = vsel %vm236, %v340, 0.0
      %351 = vadd.xlane.f32.xlu0 %v350
      %v352 = vpop.xlane.xlu0 %351
      %v353 = vrcp.pop %v343
      %v354 = vrcp.pop %v346
      %v355 = vrcp.pop %v349
      %v356 = vrcp.pop %v352
      %v357 = vmul.f32 %v334, %v353
      %v358 = vmul.f32 %v336, %v354
      %v359 = vmul.f32 %v338, %v355
      %v360 = vmul.f32 %v340, %v356
      %v361 = vpack.c.bf16 %v357, %v357
      %v362 = vpack.c.bf16 %v358, %v358
      %v363 = vpack.c.bf16 %v359, %v359
      %v364 = vpack.c.bf16 %v360, %v360
      %v366 = vsel %vm236, %v361, 0
      %vm368 = vcmask 1043456
      %v370 = vsel %vm368, %v232, 0
      %372 = vmatpush.bf16.msra.mxu0 0
      %373 = vmatpush.bf16.msra.mxu0 0
      %374 = vmatpush.bf16.msra.mxu0 0
      %375 = vmatpush.bf16.msra.mxu0 0
      %376 = vmatpush.bf16.msra.mxu0 0
      %377 = vmatpush.bf16.msra.mxu0 0
      %378 = vmatpush.bf16.msra.mxu0 0
      %379 = vmatpush.bf16.msra.mxu0 %v370
      %380 = vmatmul.bf16.gmra.mxu0 %v366
      %v381 = vpop.f32.mrf.mxu0
      %v382 = vadd.f32 0.0, %v381
      %v383 = vpop.f32.mrf.mxu0
      %384 = vdwg.mxu0
      %v386 = vsel %vm236, %v362, 0
      %v389 = vsel %vm368, %v233, 0
      %391 = vmatpush.bf16.msra.mxu0 0
      %392 = vmatpush.bf16.msra.mxu0 0
      %393 = vmatpush.bf16.msra.mxu0 0
      %394 = vmatpush.bf16.msra.mxu0 0
      %395 = vmatpush.bf16.msra.mxu0 0
      %396 = vmatpush.bf16.msra.mxu0 0
      %397 = vmatpush.bf16.msra.mxu0 0
      %398 = vmatpush.bf16.msra.mxu0 %v389
      %399 = vmatmul.bf16.gmra.mxu0 %v386
      %v400 = vpop.f32.mrf.mxu0
      %v401 = vadd.f32 0.0, %v400
      %v402 = vpop.f32.mrf.mxu0
      %403 = vdwg.mxu0
      %v405 = vsel %vm236, %v363, 0
      %v408 = vsel %vm368, %v234, 0
      %410 = vmatpush.bf16.msra.mxu0 0
      %411 = vmatpush.bf16.msra.mxu0 0
      %412 = vmatpush.bf16.msra.mxu0 0
      %413 = vmatpush.bf16.msra.mxu0 0
      %414 = vmatpush.bf16.msra.mxu0 0
      %415 = vmatpush.bf16.msra.mxu0 0
      %416 = vmatpush.bf16.msra.mxu0 0
      %417 = vmatpush.bf16.msra.mxu0 %v408
      %418 = vmatmul.bf16.gmra.mxu0 %v405
      %v419 = vpop.f32.mrf.mxu0
      %v420 = vadd.f32 0.0, %v419
      %v421 = vpop.f32.mrf.mxu0
      %422 = vdwg.mxu0
      %v424 = vsel %vm236, %v364, 0
      %v427 = vsel %vm368, %v235, 0
      %429 = vmatpush.bf16.msra.mxu0 0
      %430 = vmatpush.bf16.msra.mxu0 0
      %431 = vmatpush.bf16.msra.mxu0 0
      %432 = vmatpush.bf16.msra.mxu0 0
      %433 = vmatpush.bf16.msra.mxu0 0
      %434 = vmatpush.bf16.msra.mxu0 0
      %435 = vmatpush.bf16.msra.mxu0 0
      %436 = vmatpush.bf16.msra.mxu0 %v427
      %437 = vmatmul.bf16.gmra.mxu0 %v424
      %v438 = vpop.f32.mrf.mxu0
      %v439 = vadd.f32 0.0, %v438
      %v440 = vpop.f32.mrf.mxu0
      %441 = vdwg.mxu0
      %442 = vst.msk [vmem:[%s210] sm:$0xff] %vm236, %v382
      %443 = vst.msk [vmem:[%s210 + $0x8] sm:$0xff] %vm236, %v401
      %444 = vst.msk [vmem:[%s210 + $0x10] sm:$0xff] %vm236, %v420
      %445 = vst.msk [vmem:[%s210 + $0x18] sm:$0xff] %vm236, %v439
      %p446 = scmp.lt.s32.totalorder %s14, 1
      %s447 = scalar_select %p446, %s14, 1
      %s448 = smul.addr %s447, 4
      %s449 = smul.addr %s448, 8
      %s450 = scalar_lea.vmem %s3, %s449
      // Predicated region
      $region33: #{transformer_forward.46} parent=31 // pred_check
        %p451 = pneg %p110
      $region34: #{transformer_forward.46} parent=31 // pred_check_branch
        %453 = sbr.rel (%p451) target = $region36
      $region35: #{transformer_forward.46} parent=31 // pred_region
        _
      $region36: #{transformer_forward.46} parent=31 // pred_fallthru
        _
    $region32: #{transformer_forward.46} parent=5 // pred_fallthru
      _
    %p454 = scmp.le.s32.totalorder 2, %s9
    // Predicated region
    $region37: #{transformer_forward.46} parent=5 // pred_check
      %p455 = pneg %p454
    $region38: #{transformer_forward.46} parent=5 // pred_check_branch
      %457 = sbr.rel (%p455) target = $region40
    $region39: #{transformer_forward.46} parent=5 // pred_region
      %s458 = ssub.s32 %s9, 2
      // Predicated region
      $region41: #{transformer_forward.46} parent=39 // pred_check
        %p459 = pneg %p116
      $region42: #{transformer_forward.46} parent=39 // pred_check_branch
        %461 = sbr.rel (%p459) target = $region44
      $region43: #{transformer_forward.46} parent=39 // pred_region
        %p462 = scmp.lt.s32.totalorder %s15, 1
        %s463 = scalar_select %p462, %s15, 1
        %s464 = smul.addr %s463, 4
        %s465 = smul.addr %s464, 8
        %s466 = scalar_lea.vmem %s3, %s465
      $region44: #{transformer_forward.46} parent=39 // pred_fallthru
        _
    $region40: #{transformer_forward.46} parent=5 // pred_fallthru
      _
  $region6: #{transformer_forward.46} parent=0 // loop_footer
    %s13 = sadd.s32 1, %s9
  $region7: #{transformer_forward.46} parent=0 // loop_footer_branch
    %8 = sbr.rel target = $region3
  $region8: #{transformer_forward.46} parent=0 // loop_exit
    _

</llo_original>
